<compile_context>
chip_gen: v5e
topology: v5e:2x2
jax: 0.10.0
libtpu: 0.0.40
codegen_flags: <defaults>
</compile_context>

<pallas_src>
import functools
import numpy as np

import jax
import jax.numpy as jnp
from jax.experimental import pallas as pl
from jax.experimental.pallas import tpu as pltpu

_SQRT_HALF = 0.7071067811865476
_VMEM_LIMIT = 48 * 1024 * 1024   # explicit scoped-VMEM cap, safe on v5e/v6e/v7x


def _gelu(x):
    # exact (erf) GELU, matching torch defaults
    return 0.5 * x * (1.0 + jax.lax.erf(x * _SQRT_HALF))


def _bn(x, gamma, beta, apply_gelu):
    # BatchNorm1d, training-mode batch statistics over all rows of the block.
    mean = jnp.mean(x, axis=0, keepdims=True)
    xm = x - mean
    var = jnp.mean(xm * xm, axis=0, keepdims=True)
    y = xm * jax.lax.rsqrt(var + 1e-5) * gamma + beta
    if apply_gelu:
        y = _gelu(y)
    return y


def _mm(a, w):
    # MXU matmul; weights are pre-cast to bf16 at init, activations are cast
    # to match, accumulation is always f32.
    return jnp.dot(a.astype(w.dtype), w, preferred_element_type=jnp.float32)


def _vmem_spec():
    return pl.BlockSpec(memory_space=pltpu.MemorySpace.VMEM)


def _batch_tile(b):
    # several batch elements per grid step, but keep >= 2 grid steps so both
    # TensorCores get work on v7x.
    if b == 1:
        return 1
    cap = min(b // 2, 8)
    for t in range(cap, 0, -1):
        if b % t == 0:
            return t
    return 1


# ----------------------------------------------------------------------------- kernels

def _embed_kernel(*refs, n_stages, n_batch):
    # refs = x, (w,b,gamma,beta) * n_stages, pose, out
    x_ref = refs[0]
    pose_ref = refs[1 + 4 * n_stages]
    o_ref = refs[2 + 4 * n_stages]
    h = x_ref[...]
    for i in range(n_stages):
        w_ref, b_ref, g_ref, bt_ref = refs[1 + 4 * i: 5 + 4 * i]
        h = _mm(h, w_ref[...]) + b_ref[...]
        h = _bn(h, g_ref[...], bt_ref[...], apply_gelu=(i < n_stages - 1))
    pose = pose_ref[...]                                  # [N, C], tiled in-kernel
    o_ref[...] = h + jnp.concatenate([pose] * n_batch, axis=0)


def _two_layer_kernel(x_ref, w1_ref, b1_ref, g_ref, bt_ref, w2_ref, b2_ref, o_ref):
    # TwoLayerNN: linear -> BN -> GELU -> linear, + residual(input)
    x = x_ref[...]
    h = _mm(x, w1_ref[...]) + b1_ref[...]
    h = _bn(h, g_ref[...], bt_ref[...], apply_gelu=True)
    o_ref[...] = _mm(h, w2_ref[...]) + b2_ref[...] + x


def _sim_kernel(x_ref, o_ref):
    # sim[b, n, m] = <x[b, n, :], x[b, m, :]>  (kept f32 so top-k selection
    # matches the f32 reference exactly)
    x = x_ref[...]
    o_ref[...] = jnp.einsum('bnc,bmc->bnm', x, x,
                            preferred_element_type=jnp.float32)


def _neighbor_gather_kernel(x_ref, idx_ref, o_ref):
    # agg[b, n, c] = max_{i<k} x[b, idx[b,n,i], c] - x[b, n, c]
    # Per-neighbor row gather is done as a one-hot selection matmul on the MXU
    # (exact in f32), so no [N,N,C] broadcast and no lax.gather lowering risk.
    bt, n, _ = x_ref.shape
    k = idx_ref.shape[2]
    iota = jax.lax.broadcasted_iota(jnp.int32, (n, n), 1)
    for b in range(bt):
        x = x_ref[b]                                      # [N, C] f32
        idx = idx_ref[b]                                  # [N, k] int32
        acc = None
        for i in range(k):
            sel = (idx[:, i:i + 1] == iota).astype(jnp.float32)        # [N, N]
            g = jnp.dot(sel, x, preferred_element_type=jnp.float32)    # [N, C]
            acc = g if acc is None else jnp.maximum(acc, g)
        o_ref[b] = acc - x


def _block_tail_kernel(xf_ref, agg_ref, sc_ref, wfc_ref, bfc_ref,
                       o1w1, o1b1, o1g, o1bt, o1w2, o1b2,
                       i2w1, i2b1, i2g, i2bt, i2w2, i2b2,
                       o2w1, o2b1, o2g, o2bt, o2w2, o2b2,
                       o_ref):
    # grouped fc (one K=2C matmul) -> GELU -> out_layer1 -> + shortcut
    # -> in_layer2 -> GELU -> out_layer2 -> + residual
    xf = xf_ref[...]
    agg = agg_ref[...]
    fc = _mm(jnp.concatenate([xf, agg], axis=1), wfc_ref[...]) + bfc_ref[...]
    y = _gelu(fc)
    # out_layer1 (TwoLayerNN, its own residual)
    h = _mm(y, o1w1[...]) + o1b1[...]
    h = _bn(h, o1g[...], o1bt[...], apply_gelu=True)
    z = _mm(h, o1w2[...]) + o1b2[...] + y
    x_mid = z + sc_ref[...]                               # + block shortcut
    # in_layer2 (TwoLayerNN, its own residual)
    h = _mm(x_mid, i2w1[...]) + i2b1[...]
    h = _bn(h, i2g[...], i2bt[...], apply_gelu=True)
    z2 = _mm(h, i2w2[...]) + i2b2[...] + x_mid
    g2 = _gelu(z2)
    # out_layer2 (TwoLayerNN, its own residual) + branch residual
    h = _mm(g2, o2w1[...]) + o2b1[...]
    h = _bn(h, o2g[...], o2bt[...], apply_gelu=True)
    z3 = _mm(h, o2w2[...]) + o2b2[...] + g2
    o_ref[...] = z3 + x_mid


# ----------------------------------------------------------------------------- pallas wrappers

def _two_layer_args(p):
    return (p['w1'], p['b1'], p['g'], p['bt'], p['w2'], p['b2'])


def pallas_embed(x, stages, pose, n_batch):
    m = x.shape[0]
    c = pose.shape[1]
    args = [x]
    for st in stages:
        args += [st['w'], st['b'], st['g'], st['bt']]
    args.append(pose)
    kern = functools.partial(_embed_kernel, n_stages=len(stages), n_batch=n_batch)
    return pl.pallas_call(
        kern,
        out_shape=jax.ShapeDtypeStruct((m, c), jnp.float32),
        in_specs=[_vmem_spec()] * len(args),
        out_specs=_vmem_spec(),
        compiler_params=pltpu.CompilerParams(vmem_limit_bytes=_VMEM_LIMIT),
    )(*args)


def pallas_two_layer(x, p):
    m, c = x.shape
    args = (x,) + _two_layer_args(p)
    return pl.pallas_call(
        _two_layer_kernel,
        out_shape=jax.ShapeDtypeStruct((m, c), jnp.float32),
        in_specs=[_vmem_spec()] * len(args),
        out_specs=_vmem_spec(),
        compiler_params=pltpu.CompilerParams(vmem_limit_bytes=_VMEM_LIMIT),
    )(*args)


def pallas_sim(x):
    b, n, c = x.shape
    bt = _batch_tile(b)
    return pl.pallas_call(
        _sim_kernel,
        out_shape=jax.ShapeDtypeStruct((b, n, n), jnp.float32),
        grid=(b // bt,),
        in_specs=[pl.BlockSpec((bt, n, c), lambda i: (i, 0, 0))],
        out_specs=pl.BlockSpec((bt, n, n), lambda i: (i, 0, 0)),
        compiler_params=pltpu.CompilerParams(dimension_semantics=("parallel",)),
    )(x)


def pallas_neighbor_gather(x, idx):
    b, n, c = x.shape
    k = idx.shape[-1]
    bt = _batch_tile(b)
    return pl.pallas_call(
        _neighbor_gather_kernel,
        out_shape=jax.ShapeDtypeStruct((b, n, c), jnp.float32),
        grid=(b // bt,),
        in_specs=[pl.BlockSpec((bt, n, c), lambda i: (i, 0, 0)),
                  pl.BlockSpec((bt, n, k), lambda i: (i, 0, 0))],
        out_specs=pl.BlockSpec((bt, n, c), lambda i: (i, 0, 0)),
        compiler_params=pltpu.CompilerParams(dimension_semantics=("parallel",)),
    )(x, idx)


def pallas_block_tail(xf, agg, shortcut, p):
    m, c = xf.shape
    wfc, bfc = p['fc']
    args = (xf, agg, shortcut, wfc, bfc) \
        + _two_layer_args(p['out1']) \
        + _two_layer_args(p['in2']) \
        + _two_layer_args(p['out2'])
    return pl.pallas_call(
        _block_tail_kernel,
        out_shape=jax.ShapeDtypeStruct((m, c), jnp.float32),
        in_specs=[_vmem_spec()] * len(args),
        out_specs=_vmem_spec(),
        compiler_params=pltpu.CompilerParams(vmem_limit_bytes=_VMEM_LIMIT),
    )(xf, agg, shortcut, wfc, bfc, *args[5:])


# ----------------------------------------------------------------------------- params (deterministic init)

def init_linear(key, fan_in, fan_out):
    kw, kb = jax.random.split(key)
    bound = 1.0 / np.sqrt(fan_in)
    w = jax.random.uniform(kw, (fan_in, fan_out), jnp.float32, -bound, bound)
    b = jax.random.uniform(kb, (fan_out,), jnp.float32, -bound, bound)
    return w.astype(jnp.bfloat16), b.reshape(1, -1)     # weights pre-cast bf16


def init_two_layer(key, in_f, hidden=None, out_f=None):
    hidden = hidden or in_f
    out_f = out_f or in_f
    k1, k2 = jax.random.split(key)
    w1, b1 = init_linear(k1, in_f, hidden)
    w2, b2 = init_linear(k2, hidden, out_f)
    return dict(w1=w1, b1=b1,
                g=jnp.ones((1, hidden), jnp.float32),
                bt=jnp.zeros((1, hidden), jnp.float32),
                w2=w2, b2=b2)


def init_grouped_conv1x1(key, in_ch, out_ch, groups):
    # grouped 1x1 Conv1d == block-diagonal dense matmul on the interleaved
    # [x0,a0,x1,a1,...] channel layout. De-interleave its rows once at init and
    # stack them [x-rows ; agg-rows] so the kernel runs ONE K=2C matmul on the
    # lane-concatenated [xf | agg] input.
    ipg = in_ch // groups
    opg = out_ch // groups
    kw, kb = jax.random.split(key)
    bound = 1.0 / np.sqrt(ipg)
    w = jax.random.uniform(kw, (out_ch, ipg), jnp.float32, -bound, bound)
    b = jax.random.uniform(kb, (out_ch,), jnp.float32, -bound, bound)
    wd = np.zeros((in_ch, out_ch), np.float32)
    w_np = np.asarray(w)
    for g in range(groups):
        wd[g * ipg:(g + 1) * ipg, g * opg:(g + 1) * opg] = w_np[g * opg:(g + 1) * opg].T
    w_cat = np.concatenate([wd[0::2], wd[1::2]], axis=0)  # [2C, out_ch]
    return jnp.asarray(w_cat, jnp.bfloat16), jnp.asarray(b).reshape(1, -1)


def init_vig_block(key, c, k, head_num):
    ks = jax.random.split(key, 5)
    return dict(
        k=k,
        in1=init_two_layer(ks[0], c),
        out1=init_two_layer(ks[1], c),
        in2=init_two_layer(ks[2], c, c * 4),
        out2=init_two_layer(ks[3], c, c * 4),
        fc=init_grouped_conv1x1(ks[4], 2 * c, c, head_num),
    )


def init_vgnn(key, in_features, out_feature, num_patches, num_blocks,
              num_edges, head_num, patch_size):
    dims = [in_features, out_feature // 2, out_feature // 4, out_feature // 8,
            out_feature // 4, out_feature // 2, out_feature]
    keys = jax.random.split(key, 7 + num_blocks)
    embed = []
    for i in range(6):
        w, b = init_linear(keys[i], dims[i], dims[i + 1])
        embed.append(dict(w=w, b=b,
                          g=jnp.ones((1, dims[i + 1]), jnp.float32),
                          bt=jnp.zeros((1, dims[i + 1]), jnp.float32)))
    pose = jax.random.uniform(keys[6], (num_patches, out_feature), jnp.float32)
    blocks = [init_vig_block(keys[7 + i], out_feature,
                             min(num_edges + i, 18), head_num)
              for i in range(num_blocks)]
    return dict(embed=embed, pose=pose, blocks=blocks, patch_size=patch_size)


# ----------------------------------------------------------------------------- forward

def patchify(x, p):
    # SimplePatchifier: NCHW -> [B, N, C, p, p]
    b, c, h, w = x.shape
    x = jnp.transpose(x, (0, 2, 3, 1))                   # B, H, W, C
    x = x.reshape(b, h // p, p, w // p, p, c)
    x = jnp.transpose(x, (0, 1, 3, 5, 2, 4))             # B, H/p, W/p, C, p, p
    return x.reshape(b, (h // p) * (w // p), c, p, p)


def vig_block(x, p):
    b, n, c = x.shape
    sim = pallas_sim(x)
    # TODO(synk): top-k neighbor index selection stays in JAX (lax.top_k has no
    # clean in-kernel Pallas equivalent); only the [B,N,k] int32 index table
    # crosses into the gather kernel.
    idx = jax.lax.top_k(sim, p['k'])[1].astype(jnp.int32)               # [B, N, k]

    x2d = x.reshape(b * n, c)
    xf = pallas_two_layer(x2d, p['in1'])                                # in_layer1
    agg = pallas_neighbor_gather(xf.reshape(b, n, c), idx)              # [B, N, C]
    out = pallas_block_tail(xf, agg.reshape(b * n, c), x2d, p)          # fc..out2+res
    return out.reshape(b, n, c)


def vgnn_forward(params, x):
    p = params['patch_size']
    xp = patchify(x, p)
    b, n, c, ph, pw = xp.shape
    h = xp.reshape(b * n, c * ph * pw)
    h = pallas_embed(h, params['embed'], params['pose'], n_batch=b)
    h = h.reshape(b, n, -1)
    for blk in params['blocks']:
        h = vig_block(h, blk)
    return h


# ----------------------------------------------------------------------------- main

if __name__ == "__main__":
    key = jax.random.PRNGKey(0)
    kx, kp = jax.random.split(key)

    B, C, H, W = 2, 3, 32, 32
    patch_size = 16
    num_patches = (H // patch_size) * (W // patch_size)      # 4
    in_features = C * patch_size * patch_size                # 768
    out_feature = 64
    num_ViGBlocks = 2
    num_edges = 2
    head_num = 2

    params = init_vgnn(kp, in_features, out_feature, num_patches,
                       num_ViGBlocks, num_edges, head_num, patch_size)
    x = jax.random.normal(kx, (B, C, H, W), jnp.float32)

    fwd = jax.jit(lambda inp: vgnn_forward(params, inp))
    out = jax.block_until_ready(fwd(x))

    assert out.shape == (B, num_patches, out_feature), out.shape
    assert bool(jnp.all(jnp.isfinite(out)))
    print("KERNEL_OK")
</pallas_src>

<mosaic_0001>
module attributes {stable_mosaic.version = 11 : i64} {
  func.func @_sim_kernel(%arg0: i32, %arg1: memref<1x4x64xf32, #tpu.memory_space<vmem>>, %arg2: memref<1x4x4xf32, #tpu.memory_space<vmem>>) attributes {dimension_semantics = [#tpu.dimension_semantics<parallel>], iteration_bounds = array<i64: 2>, scalar_prefetch = 0 : i64, scratch_operands = 0 : i64, tpu.core_type = #tpu.core_type<tc>, window_params = [{transform_indices = @transform_0, window_bounds = array<i64: 1, 4, 64>}, {transform_indices = @transform_1, window_bounds = array<i64: 1, 4, 4>}]} {
    %c0 = arith.constant 0 : index
    %c0_0 = arith.constant 0 : index
    %c0_1 = arith.constant 0 : index
    %0 = vector.load %arg1[%c0, %c0_0, %c0_1] : memref<1x4x64xf32, #tpu.memory_space<vmem>>, vector<1x4x64xf32>
    "tpu.trace_start"() <{level = 10 : i32, message = "bnc,bmc->bnm"}> : () -> ()
    %cst = arith.constant dense<0.000000e+00> : vector<1x4x4xf32>
    %1 = tpu.matmul %0, %0, %cst {dimension_numbers = #tpu.dot_dimension_numbers<[2], [2], [1], [1], [0, 0, 0, 1, 1, 1], [0], [0]>} : vector<1x4x64xf32>, vector<1x4x64xf32>, vector<1x4x4xf32> -> vector<1x4x4xf32>
    "tpu.trace_stop"() : () -> ()
    %c0_2 = arith.constant 0 : index
    %c0_3 = arith.constant 0 : index
    %c0_4 = arith.constant 0 : index
    %2 = vector.load %arg2[%c0_2, %c0_3, %c0_4] : memref<1x4x4xf32, #tpu.memory_space<vmem>>, vector<1x4x4xf32>
    tpu.vector_store %arg2[%c0_2, %c0_3, %c0_4], %1 {strides = array<i32>} : memref<1x4x4xf32, #tpu.memory_space<vmem>>, vector<1x4x4xf32>,
    return
  }
  func.func @transform_0(%arg0: i32) -> (i32, i32, i32) {
    %c0_i32 = arith.constant 0 : i32
    %c0_i32_0 = arith.constant 0 : i32
    %c0_i32_1 = arith.constant 0 : i32
    return %arg0, %c0_i32, %c0_i32_0 : i32, i32, i32
  }
  func.func @transform_1(%arg0: i32) -> (i32, i32, i32) {
    %c0_i32 = arith.constant 0 : i32
    %c0_i32_0 = arith.constant 0 : i32
    %c0_i32_1 = arith.constant 0 : i32
    return %arg0, %c0_i32, %c0_i32_0 : i32, i32, i32
  }
}

module attributes {stable_mosaic.version = 11 : i64} {
  func.func @_embed_kernel(%arg0: memref<8x768xf32, #tpu.memory_space<vmem>>, %arg1: memref<768x32xbf16, #tpu.memory_space<vmem>>, %arg2: memref<1x32xf32, #tpu.memory_space<vmem>>, %arg3: memref<1x32xf32, #tpu.memory_space<vmem>>, %arg4: memref<1x32xf32, #tpu.memory_space<vmem>>, %arg5: memref<32x16xbf16, #tpu.memory_space<vmem>>, %arg6: memref<1x16xf32, #tpu.memory_space<vmem>>, %arg7: memref<1x16xf32, #tpu.memory_space<vmem>>, %arg8: memref<1x16xf32, #tpu.memory_space<vmem>>, %arg9: memref<16x8xbf16, #tpu.memory_space<vmem>>, %arg10: memref<1x8xf32, #tpu.memory_space<vmem>>, %arg11: memref<1x8xf32, #tpu.memory_space<vmem>>, %arg12: memref<1x8xf32, #tpu.memory_space<vmem>>, %arg13: memref<8x16xbf16, #tpu.memory_space<vmem>>, %arg14: memref<1x16xf32, #tpu.memory_space<vmem>>, %arg15: memref<1x16xf32, #tpu.memory_space<vmem>>, %arg16: memref<1x16xf32, #tpu.memory_space<vmem>>, %arg17: memref<16x32xbf16, #tpu.memory_space<vmem>>, %arg18: memref<1x32xf32, #tpu.memory_space<vmem>>, %arg19: memref<1x32xf32, #tpu.memory_space<vmem>>, %arg20: memref<1x32xf32, #tpu.memory_space<vmem>>, %arg21: memref<32x64xbf16, #tpu.memory_space<vmem>>, %arg22: memref<1x64xf32, #tpu.memory_space<vmem>>, %arg23: memref<1x64xf32, #tpu.memory_space<vmem>>, %arg24: memref<1x64xf32, #tpu.memory_space<vmem>>, %arg25: memref<4x64xf32, #tpu.memory_space<vmem>>, %arg26: memref<8x64xf32, #tpu.memory_space<vmem>>) attributes {dimension_semantics = [], scalar_prefetch = 0 : i64, scratch_operands = 0 : i64, tpu.core_type = #tpu.core_type<tc>} {
    %c0 = arith.constant 0 : index
    %c0_0 = arith.constant 0 : index
    %0 = vector.load %arg0[%c0, %c0_0] : memref<8x768xf32, #tpu.memory_space<vmem>>, vector<8x768xf32>
    %c0_1 = arith.constant 0 : index
    %c0_2 = arith.constant 0 : index
    %1 = vector.load %arg1[%c0_1, %c0_2] : memref<768x32xbf16, #tpu.memory_space<vmem>>, vector<768x32xbf16>
    %2 = arith.truncf %0 : vector<8x768xf32> to vector<8x768xbf16>
    %cst = arith.constant dense<0.000000e+00> : vector<8x32xf32>
    %3 = tpu.matmul %2, %1, %cst {dimension_numbers = #tpu.dot_dimension_numbers<[1], [0], [0], [1], [0, 0, 1, 1], [], []>} : vector<8x768xbf16>, vector<768x32xbf16>, vector<8x32xf32> -> vector<8x32xf32>
    %c0_3 = arith.constant 0 : index
    %c0_4 = arith.constant 0 : index
    %4 = vector.load %arg2[%c0_3, %c0_4] : memref<1x32xf32, #tpu.memory_space<vmem>>, vector<1x32xf32>
    %5 = vector.broadcast %4 : vector<1x32xf32> to vector<8x32xf32>
    %6 = arith.addf %3, %5 : vector<8x32xf32>
    %c0_5 = arith.constant 0 : index
    %c0_6 = arith.constant 0 : index
    %7 = vector.load %arg3[%c0_5, %c0_6] : memref<1x32xf32, #tpu.memory_space<vmem>>, vector<1x32xf32>
    %c0_7 = arith.constant 0 : index
    %c0_8 = arith.constant 0 : index
    %8 = vector.load %arg4[%c0_7, %c0_8] : memref<1x32xf32, #tpu.memory_space<vmem>>, vector<1x32xf32>
    %cst_9 = arith.constant dense<0.000000e+00> : vector<32xf32>
    %9 = vector.multi_reduction <add>, %6, %cst_9 [0] : vector<8x32xf32> to vector<32xf32>
    %10 = vector.shape_cast %9 : vector<32xf32> to vector<1x32xf32>
    %cst_10 = arith.constant 8.000000e+00 : f32
    %11 = vector.broadcast %cst_10 : f32 to vector<1x32xf32>
    %12 = arith.divf %10, %11 : vector<1x32xf32>
    %13 = vector.broadcast %12 : vector<1x32xf32> to vector<8x32xf32>
    %14 = arith.subf %6, %13 : vector<8x32xf32>
    %15 = arith.mulf %14, %14 : vector<8x32xf32>
    %cst_11 = arith.constant dense<0.000000e+00> : vector<32xf32>
    %16 = vector.multi_reduction <add>, %15, %cst_11 [0] : vector<8x32xf32> to vector<32xf32>
    %17 = vector.shape_cast %16 : vector<32xf32> to vector<1x32xf32>
    %cst_12 = arith.constant 8.000000e+00 : f32
    %18 = vector.broadcast %cst_12 : f32 to vector<1x32xf32>
    %19 = arith.divf %17, %18 : vector<1x32xf32>
    %cst_13 = arith.constant 9.99999974E-6 : f32
    %20 = vector.broadcast %cst_13 : f32 to vector<1x32xf32>
    %21 = arith.addf %19, %20 : vector<1x32xf32>
    %22 = math.rsqrt %21 : vector<1x32xf32>
    %23 = vector.broadcast %22 : vector<1x32xf32> to vector<8x32xf32>
    %24 = arith.mulf %14, %23 : vector<8x32xf32>
    %25 = vector.broadcast %7 : vector<1x32xf32> to vector<8x32xf32>
    %26 = arith.mulf %24, %25 : vector<8x32xf32>
    %27 = vector.broadcast %8 : vector<1x32xf32> to vector<8x32xf32>
    %28 = arith.addf %26, %27 : vector<8x32xf32>
    %cst_14 = arith.constant 5.000000e-01 : f32
    %29 = vector.broadcast %cst_14 : f32 to vector<8x32xf32>
    %30 = arith.mulf %29, %28 : vector<8x32xf32>
    %cst_15 = arith.constant 0.707106769 : f32
    %31 = vector.broadcast %cst_15 : f32 to vector<8x32xf32>
    %32 = arith.mulf %28, %31 : vector<8x32xf32>
    %33 = math.erf %32 : vector<8x32xf32>
    %cst_16 = arith.constant 1.000000e+00 : f32
    %34 = vector.broadcast %cst_16 : f32 to vector<8x32xf32>
    %35 = arith.addf %34, %33 : vector<8x32xf32>
    %36 = arith.mulf %30, %35 : vector<8x32xf32>
    %c0_17 = arith.constant 0 : index
    %c0_18 = arith.constant 0 : index
    %37 = vector.load %arg5[%c0_17, %c0_18] : memref<32x16xbf16, #tpu.memory_space<vmem>>, vector<32x16xbf16>
    %38 = arith.truncf %36 : vector<8x32xf32> to vector<8x32xbf16>
    %cst_19 = arith.constant dense<0.000000e+00> : vector<8x16xf32>
    %39 = tpu.matmul %38, %37, %cst_19 {dimension_numbers = #tpu.dot_dimension_numbers<[1], [0], [0], [1], [0, 0, 1, 1], [], []>} : vector<8x32xbf16>, vector<32x16xbf16>, vector<8x16xf32> -> vector<8x16xf32>
    %c0_20 = arith.constant 0 : index
    %c0_21 = arith.constant 0 : index
    %40 = vector.load %arg6[%c0_20, %c0_21] : memref<1x16xf32, #tpu.memory_space<vmem>>, vector<1x16xf32>
    %41 = vector.broadcast %40 : vector<1x16xf32> to vector<8x16xf32>
    %42 = arith.addf %39, %41 : vector<8x16xf32>
    %c0_22 = arith.constant 0 : index
    %c0_23 = arith.constant 0 : index
    %43 = vector.load %arg7[%c0_22, %c0_23] : memref<1x16xf32, #tpu.memory_space<vmem>>, vector<1x16xf32>
    %c0_24 = arith.constant 0 : index
    %c0_25 = arith.constant 0 : index
    %44 = vector.load %arg8[%c0_24, %c0_25] : memref<1x16xf32, #tpu.memory_space<vmem>>, vector<1x16xf32>
    %cst_26 = arith.constant dense<0.000000e+00> : vector<16xf32>
    %45 = vector.multi_reduction <add>, %42, %cst_26 [0] : vector<8x16xf32> to vector<16xf32>
    %46 = vector.shape_cast %45 : vector<16xf32> to vector<1x16xf32>
    %cst_27 = arith.constant 8.000000e+00 : f32
    %47 = vector.broadcast %cst_27 : f32 to vector<1x16xf32>
    %48 = arith.divf %46, %47 : vector<1x16xf32>
    %49 = vector.broadcast %48 : vector<1x16xf32> to vector<8x16xf32>
    %50 = arith.subf %42, %49 : vector<8x16xf32>
    %51 = arith.mulf %50, %50 : vector<8x16xf32>
    %cst_28 = arith.constant dense<0.000000e+00> : vector<16xf32>
    %52 = vector.multi_reduction <add>, %51, %cst_28 [0] : vector<8x16xf32> to vector<16xf32>
    %53 = vector.shape_cast %52 : vector<16xf32> to vector<1x16xf32>
    %cst_29 = arith.constant 8.000000e+00 : f32
    %54 = vector.broadcast %cst_29 : f32 to vector<1x16xf32>
    %55 = arith.divf %53, %54 : vector<1x16xf32>
    %cst_30 = arith.constant 9.99999974E-6 : f32
    %56 = vector.broadcast %cst_30 : f32 to vector<1x16xf32>
    %57 = arith.addf %55, %56 : vector<1x16xf32>
    %58 = math.rsqrt %57 : vector<1x16xf32>
    %59 = vector.broadcast %58 : vector<1x16xf32> to vector<8x16xf32>
    %60 = arith.mulf %50, %59 : vector<8x16xf32>
    %61 = vector.broadcast %43 : vector<1x16xf32> to vector<8x16xf32>
    %62 = arith.mulf %60, %61 : vector<8x16xf32>
    %63 = vector.broadcast %44 : vector<1x16xf32> to vector<8x16xf32>
    %64 = arith.addf %62, %63 : vector<8x16xf32>
    %cst_31 = arith.constant 5.000000e-01 : f32
    %65 = vector.broadcast %cst_31 : f32 to vector<8x16xf32>
    %66 = arith.mulf %65, %64 : vector<8x16xf32>
    %cst_32 = arith.constant 0.707106769 : f32
    %67 = vector.broadcast %cst_32 : f32 to vector<8x16xf32>
    %68 = arith.mulf %64, %67 : vector<8x16xf32>
    %69 = math.erf %68 : vector<8x16xf32>
    %cst_33 = arith.constant 1.000000e+00 : f32
    %70 = vector.broadcast %cst_33 : f32 to vector<8x16xf32>
    %71 = arith.addf %70, %69 : vector<8x16xf32>
    %72 = arith.mulf %66, %71 : vector<8x16xf32>
    %c0_34 = arith.constant 0 : index
    %c0_35 = arith.constant 0 : index
    %73 = vector.load %arg9[%c0_34, %c0_35] : memref<16x8xbf16, #tpu.memory_space<vmem>>, vector<16x8xbf16>
    %74 = arith.truncf %72 : vector<8x16xf32> to vector<8x16xbf16>
    %cst_36 = arith.constant dense<0.000000e+00> : vector<8x8xf32>
    %75 = tpu.matmul %74, %73, %cst_36 {dimension_numbers = #tpu.dot_dimension_numbers<[1], [0], [0], [1], [0, 0, 1, 1], [], []>} : vector<8x16xbf16>, vector<16x8xbf16>, vector<8x8xf32> -> vector<8x8xf32>
    %c0_37 = arith.constant 0 : index
    %c0_38 = arith.constant 0 : index
    %76 = vector.load %arg10[%c0_37, %c0_38] : memref<1x8xf32, #tpu.memory_space<vmem>>, vector<1x8xf32>
    %77 = vector.broadcast %76 : vector<1x8xf32> to vector<8x8xf32>
    %78 = arith.addf %75, %77 : vector<8x8xf32>
    %c0_39 = arith.constant 0 : index
    %c0_40 = arith.constant 0 : index
    %79 = vector.load %arg11[%c0_39, %c0_40] : memref<1x8xf32, #tpu.memory_space<vmem>>, vector<1x8xf32>
    %c0_41 = arith.constant 0 : index
    %c0_42 = arith.constant 0 : index
    %80 = vector.load %arg12[%c0_41, %c0_42] : memref<1x8xf32, #tpu.memory_space<vmem>>, vector<1x8xf32>
    %cst_43 = arith.constant dense<0.000000e+00> : vector<8xf32>
    %81 = vector.multi_reduction <add>, %78, %cst_43 [0] : vector<8x8xf32> to vector<8xf32>
    %82 = vector.shape_cast %81 : vector<8xf32> to vector<1x8xf32>
    %cst_44 = arith.constant 8.000000e+00 : f32
    %83 = vector.broadcast %cst_44 : f32 to vector<1x8xf32>
    %84 = arith.divf %82, %83 : vector<1x8xf32>
    %85 = vector.broadcast %84 : vector<1x8xf32> to vector<8x8xf32>
    %86 = arith.subf %78, %85 : vector<8x8xf32>
    %87 = arith.mulf %86, %86 : vector<8x8xf32>
    %cst_45 = arith.constant dense<0.000000e+00> : vector<8xf32>
    %88 = vector.multi_reduction <add>, %87, %cst_45 [0] : vector<8x8xf32> to vector<8xf32>
    %89 = vector.shape_cast %88 : vector<8xf32> to vector<1x8xf32>
    %cst_46 = arith.constant 8.000000e+00 : f32
    %90 = vector.broadcast %cst_46 : f32 to vector<1x8xf32>
    %91 = arith.divf %89, %90 : vector<1x8xf32>
    %cst_47 = arith.constant 9.99999974E-6 : f32
    %92 = vector.broadcast %cst_47 : f32 to vector<1x8xf32>
    %93 = arith.addf %91, %92 : vector<1x8xf32>
    %94 = math.rsqrt %93 : vector<1x8xf32>
    %95 = vector.broadcast %94 : vector<1x8xf32> to vector<8x8xf32>
    %96 = arith.mulf %86, %95 : vector<8x8xf32>
    %97 = vector.broadcast %79 : vector<1x8xf32> to vector<8x8xf32>
    %98 = arith.mulf %96, %97 : vector<8x8xf32>
    %99 = vector.broadcast %80 : vector<1x8xf32> to vector<8x8xf32>
    %100 = arith.addf %98, %99 : vector<8x8xf32>
    %cst_48 = arith.constant 5.000000e-01 : f32
    %101 = vector.broadcast %cst_48 : f32 to vector<8x8xf32>
    %102 = arith.mulf %101, %100 : vector<8x8xf32>
    %cst_49 = arith.constant 0.707106769 : f32
    %103 = vector.broadcast %cst_49 : f32 to vector<8x8xf32>
    %104 = arith.mulf %100, %103 : vector<8x8xf32>
    %105 = math.erf %104 : vector<8x8xf32>
    %cst_50 = arith.constant 1.000000e+00 : f32
    %106 = vector.broadcast %cst_50 : f32 to vector<8x8xf32>
    %107 = arith.addf %106, %105 : vector<8x8xf32>
    %108 = arith.mulf %102, %107 : vector<8x8xf32>
    %c0_51 = arith.constant 0 : index
    %c0_52 = arith.constant 0 : index
    %109 = vector.load %arg13[%c0_51, %c0_52] : memref<8x16xbf16, #tpu.memory_space<vmem>>, vector<8x16xbf16>
    %110 = arith.truncf %108 : vector<8x8xf32> to vector<8x8xbf16>
    %cst_53 = arith.constant dense<0.000000e+00> : vector<8x16xf32>
    %111 = tpu.matmul %110, %109, %cst_53 {dimension_numbers = #tpu.dot_dimension_numbers<[1], [0], [0], [1], [0, 0, 1, 1], [], []>} : vector<8x8xbf16>, vector<8x16xbf16>, vector<8x16xf32> -> vector<8x16xf32>
    %c0_54 = arith.constant 0 : index
    %c0_55 = arith.constant 0 : index
    %112 = vector.load %arg14[%c0_54, %c0_55] : memref<1x16xf32, #tpu.memory_space<vmem>>, vector<1x16xf32>
    %113 = vector.broadcast %112 : vector<1x16xf32> to vector<8x16xf32>
    %114 = arith.addf %111, %113 : vector<8x16xf32>
    %c0_56 = arith.constant 0 : index
    %c0_57 = arith.constant 0 : index
    %115 = vector.load %arg15[%c0_56, %c0_57] : memref<1x16xf32, #tpu.memory_space<vmem>>, vector<1x16xf32>
    %c0_58 = arith.constant 0 : index
    %c0_59 = arith.constant 0 : index
    %116 = vector.load %arg16[%c0_58, %c0_59] : memref<1x16xf32, #tpu.memory_space<vmem>>, vector<1x16xf32>
    %cst_60 = arith.constant dense<0.000000e+00> : vector<16xf32>
    %117 = vector.multi_reduction <add>, %114, %cst_60 [0] : vector<8x16xf32> to vector<16xf32>
    %118 = vector.shape_cast %117 : vector<16xf32> to vector<1x16xf32>
    %cst_61 = arith.constant 8.000000e+00 : f32
    %119 = vector.broadcast %cst_61 : f32 to vector<1x16xf32>
    %120 = arith.divf %118, %119 : vector<1x16xf32>
    %121 = vector.broadcast %120 : vector<1x16xf32> to vector<8x16xf32>
    %122 = arith.subf %114, %121 : vector<8x16xf32>
    %123 = arith.mulf %122, %122 : vector<8x16xf32>
    %cst_62 = arith.constant dense<0.000000e+00> : vector<16xf32>
    %124 = vector.multi_reduction <add>, %123, %cst_62 [0] : vector<8x16xf32> to vector<16xf32>
    %125 = vector.shape_cast %124 : vector<16xf32> to vector<1x16xf32>
    %cst_63 = arith.constant 8.000000e+00 : f32
    %126 = vector.broadcast %cst_63 : f32 to vector<1x16xf32>
    %127 = arith.divf %125, %126 : vector<1x16xf32>
    %cst_64 = arith.constant 9.99999974E-6 : f32
    %128 = vector.broadcast %cst_64 : f32 to vector<1x16xf32>
    %129 = arith.addf %127, %128 : vector<1x16xf32>
    %130 = math.rsqrt %129 : vector<1x16xf32>
    %131 = vector.broadcast %130 : vector<1x16xf32> to vector<8x16xf32>
    %132 = arith.mulf %122, %131 : vector<8x16xf32>
    %133 = vector.broadcast %115 : vector<1x16xf32> to vector<8x16xf32>
    %134 = arith.mulf %132, %133 : vector<8x16xf32>
    %135 = vector.broadcast %116 : vector<1x16xf32> to vector<8x16xf32>
    %136 = arith.addf %134, %135 : vector<8x16xf32>
    %cst_65 = arith.constant 5.000000e-01 : f32
    %137 = vector.broadcast %cst_65 : f32 to vector<8x16xf32>
    %138 = arith.mulf %137, %136 : vector<8x16xf32>
    %cst_66 = arith.constant 0.707106769 : f32
    %139 = vector.broadcast %cst_66 : f32 to vector<8x16xf32>
    %140 = arith.mulf %136, %139 : vector<8x16xf32>
    %141 = math.erf %140 : vector<8x16xf32>
    %cst_67 = arith.constant 1.000000e+00 : f32
    %142 = vector.broadcast %cst_67 : f32 to vector<8x16xf32>
    %143 = arith.addf %142, %141 : vector<8x16xf32>
    %144 = arith.mulf %138, %143 : vector<8x16xf32>
    %c0_68 = arith.constant 0 : index
    %c0_69 = arith.constant 0 : index
    %145 = vector.load %arg17[%c0_68, %c0_69] : memref<16x32xbf16, #tpu.memory_space<vmem>>, vector<16x32xbf16>
    %146 = arith.truncf %144 : vector<8x16xf32> to vector<8x16xbf16>
    %cst_70 = arith.constant dense<0.000000e+00> : vector<8x32xf32>
    %147 = tpu.matmul %146, %145, %cst_70 {dimension_numbers = #tpu.dot_dimension_numbers<[1], [0], [0], [1], [0, 0, 1, 1], [], []>} : vector<8x16xbf16>, vector<16x32xbf16>, vector<8x32xf32> -> vector<8x32xf32>
    %c0_71 = arith.constant 0 : index
    %c0_72 = arith.constant 0 : index
    %148 = vector.load %arg18[%c0_71, %c0_72] : memref<1x32xf32, #tpu.memory_space<vmem>>, vector<1x32xf32>
    %149 = vector.broadcast %148 : vector<1x32xf32> to vector<8x32xf32>
    %150 = arith.addf %147, %149 : vector<8x32xf32>
    %c0_73 = arith.constant 0 : index
    %c0_74 = arith.constant 0 : index
    %151 = vector.load %arg19[%c0_73, %c0_74] : memref<1x32xf32, #tpu.memory_space<vmem>>, vector<1x32xf32>
    %c0_75 = arith.constant 0 : index
    %c0_76 = arith.constant 0 : index
    %152 = vector.load %arg20[%c0_75, %c0_76] : memref<1x32xf32, #tpu.memory_space<vmem>>, vector<1x32xf32>
    %cst_77 = arith.constant dense<0.000000e+00> : vector<32xf32>
    %153 = vector.multi_reduction <add>, %150, %cst_77 [0] : vector<8x32xf32> to vector<32xf32>
    %154 = vector.shape_cast %153 : vector<32xf32> to vector<1x32xf32>
    %cst_78 = arith.constant 8.000000e+00 : f32
    %155 = vector.broadcast %cst_78 : f32 to vector<1x32xf32>
    %156 = arith.divf %154, %155 : vector<1x32xf32>
    %157 = vector.broadcast %156 : vector<1x32xf32> to vector<8x32xf32>
    %158 = arith.subf %150, %157 : vector<8x32xf32>
    %159 = arith.mulf %158, %158 : vector<8x32xf32>
    %cst_79 = arith.constant dense<0.000000e+00> : vector<32xf32>
    %160 = vector.multi_reduction <add>, %159, %cst_79 [0] : vector<8x32xf32> to vector<32xf32>
    %161 = vector.shape_cast %160 : vector<32xf32> to vector<1x32xf32>
    %cst_80 = arith.constant 8.000000e+00 : f32
    %162 = vector.broadcast %cst_80 : f32 to vector<1x32xf32>
    %163 = arith.divf %161, %162 : vector<1x32xf32>
    %cst_81 = arith.constant 9.99999974E-6 : f32
    %164 = vector.broadcast %cst_81 : f32 to vector<1x32xf32>
    %165 = arith.addf %163, %164 : vector<1x32xf32>
    %166 = math.rsqrt %165 : vector<1x32xf32>
    %167 = vector.broadcast %166 : vector<1x32xf32> to vector<8x32xf32>
    %168 = arith.mulf %158, %167 : vector<8x32xf32>
    %169 = vector.broadcast %151 : vector<1x32xf32> to vector<8x32xf32>
    %170 = arith.mulf %168, %169 : vector<8x32xf32>
    %171 = vector.broadcast %152 : vector<1x32xf32> to vector<8x32xf32>
    %172 = arith.addf %170, %171 : vector<8x32xf32>
    %cst_82 = arith.constant 5.000000e-01 : f32
    %173 = vector.broadcast %cst_82 : f32 to vector<8x32xf32>
    %174 = arith.mulf %173, %172 : vector<8x32xf32>
    %cst_83 = arith.constant 0.707106769 : f32
    %175 = vector.broadcast %cst_83 : f32 to vector<8x32xf32>
    %176 = arith.mulf %172, %175 : vector<8x32xf32>
    %177 = math.erf %176 : vector<8x32xf32>
    %cst_84 = arith.constant 1.000000e+00 : f32
    %178 = vector.broadcast %cst_84 : f32 to vector<8x32xf32>
    %179 = arith.addf %178, %177 : vector<8x32xf32>
    %180 = arith.mulf %174, %179 : vector<8x32xf32>
    %c0_85 = arith.constant 0 : index
    %c0_86 = arith.constant 0 : index
    %181 = vector.load %arg21[%c0_85, %c0_86] : memref<32x64xbf16, #tpu.memory_space<vmem>>, vector<32x64xbf16>
    %182 = arith.truncf %180 : vector<8x32xf32> to vector<8x32xbf16>
    %cst_87 = arith.constant dense<0.000000e+00> : vector<8x64xf32>
    %183 = tpu.matmul %182, %181, %cst_87 {dimension_numbers = #tpu.dot_dimension_numbers<[1], [0], [0], [1], [0, 0, 1, 1], [], []>} : vector<8x32xbf16>, vector<32x64xbf16>, vector<8x64xf32> -> vector<8x64xf32>
    %c0_88 = arith.constant 0 : index
    %c0_89 = arith.constant 0 : index
    %184 = vector.load %arg22[%c0_88, %c0_89] : memref<1x64xf32, #tpu.memory_space<vmem>>, vector<1x64xf32>
    %185 = vector.broadcast %184 : vector<1x64xf32> to vector<8x64xf32>
    %186 = arith.addf %183, %185 : vector<8x64xf32>
    %c0_90 = arith.constant 0 : index
    %c0_91 = arith.constant 0 : index
    %187 = vector.load %arg23[%c0_90, %c0_91] : memref<1x64xf32, #tpu.memory_space<vmem>>, vector<1x64xf32>
    %c0_92 = arith.constant 0 : index
    %c0_93 = arith.constant 0 : index
    %188 = vector.load %arg24[%c0_92, %c0_93] : memref<1x64xf32, #tpu.memory_space<vmem>>, vector<1x64xf32>
    %cst_94 = arith.constant dense<0.000000e+00> : vector<64xf32>
    %189 = vector.multi_reduction <add>, %186, %cst_94 [0] : vector<8x64xf32> to vector<64xf32>
    %190 = vector.shape_cast %189 : vector<64xf32> to vector<1x64xf32>
    %cst_95 = arith.constant 8.000000e+00 : f32
    %191 = vector.broadcast %cst_95 : f32 to vector<1x64xf32>
    %192 = arith.divf %190, %191 : vector<1x64xf32>
    %193 = vector.broadcast %192 : vector<1x64xf32> to vector<8x64xf32>
    %194 = arith.subf %186, %193 : vector<8x64xf32>
    %195 = arith.mulf %194, %194 : vector<8x64xf32>
    %cst_96 = arith.constant dense<0.000000e+00> : vector<64xf32>
    %196 = vector.multi_reduction <add>, %195, %cst_96 [0] : vector<8x64xf32> to vector<64xf32>
    %197 = vector.shape_cast %196 : vector<64xf32> to vector<1x64xf32>
    %cst_97 = arith.constant 8.000000e+00 : f32
    %198 = vector.broadcast %cst_97 : f32 to vector<1x64xf32>
    %199 = arith.divf %197, %198 : vector<1x64xf32>
    %cst_98 = arith.constant 9.99999974E-6 : f32
    %200 = vector.broadcast %cst_98 : f32 to vector<1x64xf32>
    %201 = arith.addf %199, %200 : vector<1x64xf32>
    %202 = math.rsqrt %201 : vector<1x64xf32>
    %203 = vector.broadcast %202 : vector<1x64xf32> to vector<8x64xf32>
    %204 = arith.mulf %194, %203 : vector<8x64xf32>
    %205 = vector.broadcast %187 : vector<1x64xf32> to vector<8x64xf32>
    %206 = arith.mulf %204, %205 : vector<8x64xf32>
    %207 = vector.broadcast %188 : vector<1x64xf32> to vector<8x64xf32>
    %208 = arith.addf %206, %207 : vector<8x64xf32>
    %c0_99 = arith.constant 0 : index
    %c0_100 = arith.constant 0 : index
    %209 = vector.load %arg25[%c0_99, %c0_100] : memref<4x64xf32, #tpu.memory_space<vmem>>, vector<4x64xf32>
    %210 = tpu.concatenate %209, %209 in 0 : vector<4x64xf32>, vector<4x64xf32> -> vector<8x64xf32>
    %211 = arith.addf %208, %210 : vector<8x64xf32>
    %c0_101 = arith.constant 0 : index
    %c0_102 = arith.constant 0 : index
    %212 = vector.load %arg26[%c0_101, %c0_102] : memref<8x64xf32, #tpu.memory_space<vmem>>, vector<8x64xf32>
    tpu.vector_store %arg26[%c0_101, %c0_102], %211 {strides = array<i32>} : memref<8x64xf32, #tpu.memory_space<vmem>>, vector<8x64xf32>,
    return
  }
}

module attributes {stable_mosaic.version = 11 : i64} {
  func.func @_two_layer_kernel(%arg0: memref<8x64xf32, #tpu.memory_space<vmem>>, %arg1: memref<64x64xbf16, #tpu.memory_space<vmem>>, %arg2: memref<1x64xf32, #tpu.memory_space<vmem>>, %arg3: memref<1x64xf32, #tpu.memory_space<vmem>>, %arg4: memref<1x64xf32, #tpu.memory_space<vmem>>, %arg5: memref<64x64xbf16, #tpu.memory_space<vmem>>, %arg6: memref<1x64xf32, #tpu.memory_space<vmem>>, %arg7: memref<8x64xf32, #tpu.memory_space<vmem>>) attributes {dimension_semantics = [], scalar_prefetch = 0 : i64, scratch_operands = 0 : i64, tpu.core_type = #tpu.core_type<tc>} {
    %c0 = arith.constant 0 : index
    %c0_0 = arith.constant 0 : index
    %0 = vector.load %arg0[%c0, %c0_0] : memref<8x64xf32, #tpu.memory_space<vmem>>, vector<8x64xf32>
    %c0_1 = arith.constant 0 : index
    %c0_2 = arith.constant 0 : index
    %1 = vector.load %arg1[%c0_1, %c0_2] : memref<64x64xbf16, #tpu.memory_space<vmem>>, vector<64x64xbf16>
    %2 = arith.truncf %0 : vector<8x64xf32> to vector<8x64xbf16>
    %cst = arith.constant dense<0.000000e+00> : vector<8x64xf32>
    %3 = tpu.matmul %2, %1, %cst {dimension_numbers = #tpu.dot_dimension_numbers<[1], [0], [0], [1], [0, 0, 1, 1], [], []>} : vector<8x64xbf16>, vector<64x64xbf16>, vector<8x64xf32> -> vector<8x64xf32>
    %c0_3 = arith.constant 0 : index
    %c0_4 = arith.constant 0 : index
    %4 = vector.load %arg2[%c0_3, %c0_4] : memref<1x64xf32, #tpu.memory_space<vmem>>, vector<1x64xf32>
    %5 = vector.broadcast %4 : vector<1x64xf32> to vector<8x64xf32>
    %6 = arith.addf %3, %5 : vector<8x64xf32>
    %c0_5 = arith.constant 0 : index
    %c0_6 = arith.constant 0 : index
    %7 = vector.load %arg3[%c0_5, %c0_6] : memref<1x64xf32, #tpu.memory_space<vmem>>, vector<1x64xf32>
    %c0_7 = arith.constant 0 : index
    %c0_8 = arith.constant 0 : index
    %8 = vector.load %arg4[%c0_7, %c0_8] : memref<1x64xf32, #tpu.memory_space<vmem>>, vector<1x64xf32>
    %cst_9 = arith.constant dense<0.000000e+00> : vector<64xf32>
    %9 = vector.multi_reduction <add>, %6, %cst_9 [0] : vector<8x64xf32> to vector<64xf32>
    %10 = vector.shape_cast %9 : vector<64xf32> to vector<1x64xf32>
    %cst_10 = arith.constant 8.000000e+00 : f32
    %11 = vector.broadcast %cst_10 : f32 to vector<1x64xf32>
    %12 = arith.divf %10, %11 : vector<1x64xf32>
    %13 = vector.broadcast %12 : vector<1x64xf32> to vector<8x64xf32>
    %14 = arith.subf %6, %13 : vector<8x64xf32>
    %15 = arith.mulf %14, %14 : vector<8x64xf32>
    %cst_11 = arith.constant dense<0.000000e+00> : vector<64xf32>
    %16 = vector.multi_reduction <add>, %15, %cst_11 [0] : vector<8x64xf32> to vector<64xf32>
    %17 = vector.shape_cast %16 : vector<64xf32> to vector<1x64xf32>
    %cst_12 = arith.constant 8.000000e+00 : f32
    %18 = vector.broadcast %cst_12 : f32 to vector<1x64xf32>
    %19 = arith.divf %17, %18 : vector<1x64xf32>
    %cst_13 = arith.constant 9.99999974E-6 : f32
    %20 = vector.broadcast %cst_13 : f32 to vector<1x64xf32>
    %21 = arith.addf %19, %20 : vector<1x64xf32>
    %22 = math.rsqrt %21 : vector<1x64xf32>
    %23 = vector.broadcast %22 : vector<1x64xf32> to vector<8x64xf32>
    %24 = arith.mulf %14, %23 : vector<8x64xf32>
    %25 = vector.broadcast %7 : vector<1x64xf32> to vector<8x64xf32>
    %26 = arith.mulf %24, %25 : vector<8x64xf32>
    %27 = vector.broadcast %8 : vector<1x64xf32> to vector<8x64xf32>
    %28 = arith.addf %26, %27 : vector<8x64xf32>
    %cst_14 = arith.constant 5.000000e-01 : f32
    %29 = vector.broadcast %cst_14 : f32 to vector<8x64xf32>
    %30 = arith.mulf %29, %28 : vector<8x64xf32>
    %cst_15 = arith.constant 0.707106769 : f32
    %31 = vector.broadcast %cst_15 : f32 to vector<8x64xf32>
    %32 = arith.mulf %28, %31 : vector<8x64xf32>
    %33 = math.erf %32 : vector<8x64xf32>
    %cst_16 = arith.constant 1.000000e+00 : f32
    %34 = vector.broadcast %cst_16 : f32 to vector<8x64xf32>
    %35 = arith.addf %34, %33 : vector<8x64xf32>
    %36 = arith.mulf %30, %35 : vector<8x64xf32>
    %c0_17 = arith.constant 0 : index
    %c0_18 = arith.constant 0 : index
    %37 = vector.load %arg5[%c0_17, %c0_18] : memref<64x64xbf16, #tpu.memory_space<vmem>>, vector<64x64xbf16>
    %38 = arith.truncf %36 : vector<8x64xf32> to vector<8x64xbf16>
    %cst_19 = arith.constant dense<0.000000e+00> : vector<8x64xf32>
    %39 = tpu.matmul %38, %37, %cst_19 {dimension_numbers = #tpu.dot_dimension_numbers<[1], [0], [0], [1], [0, 0, 1, 1], [], []>} : vector<8x64xbf16>, vector<64x64xbf16>, vector<8x64xf32> -> vector<8x64xf32>
    %c0_20 = arith.constant 0 : index
    %c0_21 = arith.constant 0 : index
    %40 = vector.load %arg6[%c0_20, %c0_21] : memref<1x64xf32, #tpu.memory_space<vmem>>, vector<1x64xf32>
    %41 = vector.broadcast %40 : vector<1x64xf32> to vector<8x64xf32>
    %42 = arith.addf %39, %41 : vector<8x64xf32>
    %43 = arith.addf %42, %0 : vector<8x64xf32>
    %c0_22 = arith.constant 0 : index
    %c0_23 = arith.constant 0 : index
    %44 = vector.load %arg7[%c0_22, %c0_23] : memref<8x64xf32, #tpu.memory_space<vmem>>, vector<8x64xf32>
    tpu.vector_store %arg7[%c0_22, %c0_23], %43 {strides = array<i32>} : memref<8x64xf32, #tpu.memory_space<vmem>>, vector<8x64xf32>,
    return
  }
}

module attributes {stable_mosaic.version = 11 : i64} {
  func.func @_neighbor_gather_kernel(%arg0: i32, %arg1: memref<1x4x64xf32, #tpu.memory_space<vmem>>, %arg2: memref<1x4x2xi32, #tpu.memory_space<vmem>>, %arg3: memref<1x4x64xf32, #tpu.memory_space<vmem>>) attributes {dimension_semantics = [#tpu.dimension_semantics<parallel>], iteration_bounds = array<i64: 2>, scalar_prefetch = 0 : i64, scratch_operands = 0 : i64, tpu.core_type = #tpu.core_type<tc>, window_params = [{transform_indices = @transform_0, window_bounds = array<i64: 1, 4, 64>}, {transform_indices = @transform_1, window_bounds = array<i64: 1, 4, 2>}, {transform_indices = @transform_2, window_bounds = array<i64: 1, 4, 64>}]} {
    %0 = tpu.iota {dimensions = array<i32: 1>} : vector<4x4xi32>
    %c0 = arith.constant 0 : index
    %c0_0 = arith.constant 0 : index
    %c0_1 = arith.constant 0 : index
    %1 = vector.load %arg1[%c0, %c0_0, %c0_1] : memref<1x4x64xf32, #tpu.memory_space<vmem>>, vector<1x4x64xf32>
    %2 = vector.shape_cast %1 : vector<1x4x64xf32> to vector<4x64xf32>
    %c0_2 = arith.constant 0 : index
    %c0_3 = arith.constant 0 : index
    %c0_4 = arith.constant 0 : index
    %3 = vector.load %arg2[%c0_2, %c0_3, %c0_4] : memref<1x4x2xi32, #tpu.memory_space<vmem>>, vector<1x4x2xi32>
    %4 = vector.shape_cast %3 : vector<1x4x2xi32> to vector<4x2xi32>
    %5 = vector.extract_strided_slice %4 {offsets = [0, 0], sizes = [4, 1], strides = [1, 1]} : vector<4x2xi32> to vector<4x1xi32>
    %6 = vector.broadcast %5 : vector<4x1xi32> to vector<4x4xi32>
    %7 = arith.cmpi eq, %6, %0 : vector<4x4xi32>
    %8 = arith.extui %7 : vector<4x4xi1> to vector<4x4xi32>
    %9 = arith.sitofp %8 : vector<4x4xi32> to vector<4x4xf32>
    %cst = arith.constant dense<0.000000e+00> : vector<4x64xf32>
    %10 = tpu.matmul %9, %2, %cst {dimension_numbers = #tpu.dot_dimension_numbers<[1], [0], [0], [1], [0, 0, 1, 1], [], []>} : vector<4x4xf32>, vector<4x64xf32>, vector<4x64xf32> -> vector<4x64xf32>
    %11 = vector.extract_strided_slice %4 {offsets = [0, 1], sizes = [4, 1], strides = [1, 1]} : vector<4x2xi32> to vector<4x1xi32>
    %12 = vector.broadcast %11 : vector<4x1xi32> to vector<4x4xi32>
    %13 = arith.cmpi eq, %12, %0 : vector<4x4xi32>
    %14 = arith.extui %13 : vector<4x4xi1> to vector<4x4xi32>
    %15 = arith.sitofp %14 : vector<4x4xi32> to vector<4x4xf32>
    %cst_5 = arith.constant dense<0.000000e+00> : vector<4x64xf32>
    %16 = tpu.matmul %15, %2, %cst_5 {dimension_numbers = #tpu.dot_dimension_numbers<[1], [0], [0], [1], [0, 0, 1, 1], [], []>} : vector<4x4xf32>, vector<4x64xf32>, vector<4x64xf32> -> vector<4x64xf32>
    %17 = arith.maximumf %10, %16 : vector<4x64xf32>
    %18 = arith.subf %17, %2 : vector<4x64xf32>
    %c0_6 = arith.constant 0 : index
    %c0_7 = arith.constant 0 : index
    %c0_8 = arith.constant 0 : index
    %19 = vector.load %arg3[%c0_6, %c0_7, %c0_8] : memref<1x4x64xf32, #tpu.memory_space<vmem>>, vector<1x4x64xf32>
    %20 = vector.shape_cast %19 : vector<1x4x64xf32> to vector<4x64xf32>
    %21 = vector.shape_cast %18 : vector<4x64xf32> to vector<1x4x64xf32>
    tpu.vector_store %arg3[%c0_6, %c0_7, %c0_8], %21 {strides = array<i32>} : memref<1x4x64xf32, #tpu.memory_space<vmem>>, vector<1x4x64xf32>,
    return
  }
  func.func @transform_0(%arg0: i32) -> (i32, i32, i32) {
    %c0_i32 = arith.constant 0 : i32
    %c0_i32_0 = arith.constant 0 : i32
    %c0_i32_1 = arith.constant 0 : i32
    return %arg0, %c0_i32, %c0_i32_0 : i32, i32, i32
  }
  func.func @transform_1(%arg0: i32) -> (i32, i32, i32) {
    %c0_i32 = arith.constant 0 : i32
    %c0_i32_0 = arith.constant 0 : i32
    %c0_i32_1 = arith.constant 0 : i32
    return %arg0, %c0_i32, %c0_i32_0 : i32, i32, i32
  }
  func.func @transform_2(%arg0: i32) -> (i32, i32, i32) {
    %c0_i32 = arith.constant 0 : i32
    %c0_i32_0 = arith.constant 0 : i32
    %c0_i32_1 = arith.constant 0 : i32
    return %arg0, %c0_i32, %c0_i32_0 : i32, i32, i32
  }
}

module attributes {stable_mosaic.version = 11 : i64} {
  func.func @_neighbor_gather_kernel(%arg0: i32, %arg1: memref<1x4x64xf32, #tpu.memory_space<vmem>>, %arg2: memref<1x4x3xi32, #tpu.memory_space<vmem>>, %arg3: memref<1x4x64xf32, #tpu.memory_space<vmem>>) attributes {dimension_semantics = [#tpu.dimension_semantics<parallel>], iteration_bounds = array<i64: 2>, scalar_prefetch = 0 : i64, scratch_operands = 0 : i64, tpu.core_type = #tpu.core_type<tc>, window_params = [{transform_indices = @transform_0, window_bounds = array<i64: 1, 4, 64>}, {transform_indices = @transform_1, window_bounds = array<i64: 1, 4, 3>}, {transform_indices = @transform_2, window_bounds = array<i64: 1, 4, 64>}]} {
    %0 = tpu.iota {dimensions = array<i32: 1>} : vector<4x4xi32>
    %c0 = arith.constant 0 : index
    %c0_0 = arith.constant 0 : index
    %c0_1 = arith.constant 0 : index
    %1 = vector.load %arg1[%c0, %c0_0, %c0_1] : memref<1x4x64xf32, #tpu.memory_space<vmem>>, vector<1x4x64xf32>
    %2 = vector.shape_cast %1 : vector<1x4x64xf32> to vector<4x64xf32>
    %c0_2 = arith.constant 0 : index
    %c0_3 = arith.constant 0 : index
    %c0_4 = arith.constant 0 : index
    %3 = vector.load %arg2[%c0_2, %c0_3, %c0_4] : memref<1x4x3xi32, #tpu.memory_space<vmem>>, vector<1x4x3xi32>
    %4 = vector.shape_cast %3 : vector<1x4x3xi32> to vector<4x3xi32>
    %5 = vector.extract_strided_slice %4 {offsets = [0, 0], sizes = [4, 1], strides = [1, 1]} : vector<4x3xi32> to vector<4x1xi32>
    %6 = vector.broadcast %5 : vector<4x1xi32> to vector<4x4xi32>
    %7 = arith.cmpi eq, %6, %0 : vector<4x4xi32>
    %8 = arith.extui %7 : vector<4x4xi1> to vector<4x4xi32>
    %9 = arith.sitofp %8 : vector<4x4xi32> to vector<4x4xf32>
    %cst = arith.constant dense<0.000000e+00> : vector<4x64xf32>
    %10 = tpu.matmul %9, %2, %cst {dimension_numbers = #tpu.dot_dimension_numbers<[1], [0], [0], [1], [0, 0, 1, 1], [], []>} : vector<4x4xf32>, vector<4x64xf32>, vector<4x64xf32> -> vector<4x64xf32>
    %11 = vector.extract_strided_slice %4 {offsets = [0, 1], sizes = [4, 1], strides = [1, 1]} : vector<4x3xi32> to vector<4x1xi32>
    %12 = vector.broadcast %11 : vector<4x1xi32> to vector<4x4xi32>
    %13 = arith.cmpi eq, %12, %0 : vector<4x4xi32>
    %14 = arith.extui %13 : vector<4x4xi1> to vector<4x4xi32>
    %15 = arith.sitofp %14 : vector<4x4xi32> to vector<4x4xf32>
    %cst_5 = arith.constant dense<0.000000e+00> : vector<4x64xf32>
    %16 = tpu.matmul %15, %2, %cst_5 {dimension_numbers = #tpu.dot_dimension_numbers<[1], [0], [0], [1], [0, 0, 1, 1], [], []>} : vector<4x4xf32>, vector<4x64xf32>, vector<4x64xf32> -> vector<4x64xf32>
    %17 = arith.maximumf %10, %16 : vector<4x64xf32>
    %18 = vector.extract_strided_slice %4 {offsets = [0, 2], sizes = [4, 1], strides = [1, 1]} : vector<4x3xi32> to vector<4x1xi32>
    %19 = vector.broadcast %18 : vector<4x1xi32> to vector<4x4xi32>
    %20 = arith.cmpi eq, %19, %0 : vector<4x4xi32>
    %21 = arith.extui %20 : vector<4x4xi1> to vector<4x4xi32>
    %22 = arith.sitofp %21 : vector<4x4xi32> to vector<4x4xf32>
    %cst_6 = arith.constant dense<0.000000e+00> : vector<4x64xf32>
    %23 = tpu.matmul %22, %2, %cst_6 {dimension_numbers = #tpu.dot_dimension_numbers<[1], [0], [0], [1], [0, 0, 1, 1], [], []>} : vector<4x4xf32>, vector<4x64xf32>, vector<4x64xf32> -> vector<4x64xf32>
    %24 = arith.maximumf %17, %23 : vector<4x64xf32>
    %25 = arith.subf %24, %2 : vector<4x64xf32>
    %c0_7 = arith.constant 0 : index
    %c0_8 = arith.constant 0 : index
    %c0_9 = arith.constant 0 : index
    %26 = vector.load %arg3[%c0_7, %c0_8, %c0_9] : memref<1x4x64xf32, #tpu.memory_space<vmem>>, vector<1x4x64xf32>
    %27 = vector.shape_cast %26 : vector<1x4x64xf32> to vector<4x64xf32>
    %28 = vector.shape_cast %25 : vector<4x64xf32> to vector<1x4x64xf32>
    tpu.vector_store %arg3[%c0_7, %c0_8, %c0_9], %28 {strides = array<i32>} : memref<1x4x64xf32, #tpu.memory_space<vmem>>, vector<1x4x64xf32>,
    return
  }
  func.func @transform_0(%arg0: i32) -> (i32, i32, i32) {
    %c0_i32 = arith.constant 0 : i32
    %c0_i32_0 = arith.constant 0 : i32
    %c0_i32_1 = arith.constant 0 : i32
    return %arg0, %c0_i32, %c0_i32_0 : i32, i32, i32
  }
  func.func @transform_1(%arg0: i32) -> (i32, i32, i32) {
    %c0_i32 = arith.constant 0 : i32
    %c0_i32_0 = arith.constant 0 : i32
    %c0_i32_1 = arith.constant 0 : i32
    return %arg0, %c0_i32, %c0_i32_0 : i32, i32, i32
  }
  func.func @transform_2(%arg0: i32) -> (i32, i32, i32) {
    %c0_i32 = arith.constant 0 : i32
    %c0_i32_0 = arith.constant 0 : i32
    %c0_i32_1 = arith.constant 0 : i32
    return %arg0, %c0_i32, %c0_i32_0 : i32, i32, i32
  }
}

module attributes {stable_mosaic.version = 11 : i64} {
  func.func @_block_tail_kernel(%arg0: memref<8x64xf32, #tpu.memory_space<vmem>>, %arg1: memref<8x64xf32, #tpu.memory_space<vmem>>, %arg2: memref<8x64xf32, #tpu.memory_space<vmem>>, %arg3: memref<128x64xbf16, #tpu.memory_space<vmem>>, %arg4: memref<1x64xf32, #tpu.memory_space<vmem>>, %arg5: memref<64x64xbf16, #tpu.memory_space<vmem>>, %arg6: memref<1x64xf32, #tpu.memory_space<vmem>>, %arg7: memref<1x64xf32, #tpu.memory_space<vmem>>, %arg8: memref<1x64xf32, #tpu.memory_space<vmem>>, %arg9: memref<64x64xbf16, #tpu.memory_space<vmem>>, %arg10: memref<1x64xf32, #tpu.memory_space<vmem>>, %arg11: memref<64x256xbf16, #tpu.memory_space<vmem>>, %arg12: memref<1x256xf32, #tpu.memory_space<vmem>>, %arg13: memref<1x256xf32, #tpu.memory_space<vmem>>, %arg14: memref<1x256xf32, #tpu.memory_space<vmem>>, %arg15: memref<256x64xbf16, #tpu.memory_space<vmem>>, %arg16: memref<1x64xf32, #tpu.memory_space<vmem>>, %arg17: memref<64x256xbf16, #tpu.memory_space<vmem>>, %arg18: memref<1x256xf32, #tpu.memory_space<vmem>>, %arg19: memref<1x256xf32, #tpu.memory_space<vmem>>, %arg20: memref<1x256xf32, #tpu.memory_space<vmem>>, %arg21: memref<256x64xbf16, #tpu.memory_space<vmem>>, %arg22: memref<1x64xf32, #tpu.memory_space<vmem>>, %arg23: memref<8x64xf32, #tpu.memory_space<vmem>>) attributes {dimension_semantics = [], scalar_prefetch = 0 : i64, scratch_operands = 0 : i64, tpu.core_type = #tpu.core_type<tc>} {
    %c0 = arith.constant 0 : index
    %c0_0 = arith.constant 0 : index
    %0 = vector.load %arg0[%c0, %c0_0] : memref<8x64xf32, #tpu.memory_space<vmem>>, vector<8x64xf32>
    %c0_1 = arith.constant 0 : index
    %c0_2 = arith.constant 0 : index
    %1 = vector.load %arg1[%c0_1, %c0_2] : memref<8x64xf32, #tpu.memory_space<vmem>>, vector<8x64xf32>
    %2 = tpu.concatenate %0, %1 in 1 : vector<8x64xf32>, vector<8x64xf32> -> vector<8x128xf32>
    %c0_3 = arith.constant 0 : index
    %c0_4 = arith.constant 0 : index
    %3 = vector.load %arg3[%c0_3, %c0_4] : memref<128x64xbf16, #tpu.memory_space<vmem>>, vector<128x64xbf16>
    %4 = arith.truncf %2 : vector<8x128xf32> to vector<8x128xbf16>
    %cst = arith.constant dense<0.000000e+00> : vector<8x64xf32>
    %5 = tpu.matmul %4, %3, %cst {dimension_numbers = #tpu.dot_dimension_numbers<[1], [0], [0], [1], [0, 0, 1, 1], [], []>} : vector<8x128xbf16>, vector<128x64xbf16>, vector<8x64xf32> -> vector<8x64xf32>
    %c0_5 = arith.constant 0 : index
    %c0_6 = arith.constant 0 : index
    %6 = vector.load %arg4[%c0_5, %c0_6] : memref<1x64xf32, #tpu.memory_space<vmem>>, vector<1x64xf32>
    %7 = vector.broadcast %6 : vector<1x64xf32> to vector<8x64xf32>
    %8 = arith.addf %5, %7 : vector<8x64xf32>
    %cst_7 = arith.constant 5.000000e-01 : f32
    %9 = vector.broadcast %cst_7 : f32 to vector<8x64xf32>
    %10 = arith.mulf %9, %8 : vector<8x64xf32>
    %cst_8 = arith.constant 0.707106769 : f32
    %11 = vector.broadcast %cst_8 : f32 to vector<8x64xf32>
    %12 = arith.mulf %8, %11 : vector<8x64xf32>
    %13 = math.erf %12 : vector<8x64xf32>
    %cst_9 = arith.constant 1.000000e+00 : f32
    %14 = vector.broadcast %cst_9 : f32 to vector<8x64xf32>
    %15 = arith.addf %14, %13 : vector<8x64xf32>
    %16 = arith.mulf %10, %15 : vector<8x64xf32>
    %c0_10 = arith.constant 0 : index
    %c0_11 = arith.constant 0 : index
    %17 = vector.load %arg5[%c0_10, %c0_11] : memref<64x64xbf16, #tpu.memory_space<vmem>>, vector<64x64xbf16>
    %18 = arith.truncf %16 : vector<8x64xf32> to vector<8x64xbf16>
    %cst_12 = arith.constant dense<0.000000e+00> : vector<8x64xf32>
    %19 = tpu.matmul %18, %17, %cst_12 {dimension_numbers = #tpu.dot_dimension_numbers<[1], [0], [0], [1], [0, 0, 1, 1], [], []>} : vector<8x64xbf16>, vector<64x64xbf16>, vector<8x64xf32> -> vector<8x64xf32>
    %c0_13 = arith.constant 0 : index
    %c0_14 = arith.constant 0 : index
    %20 = vector.load %arg6[%c0_13, %c0_14] : memref<1x64xf32, #tpu.memory_space<vmem>>, vector<1x64xf32>
    %21 = vector.broadcast %20 : vector<1x64xf32> to vector<8x64xf32>
    %22 = arith.addf %19, %21 : vector<8x64xf32>
    %c0_15 = arith.constant 0 : index
    %c0_16 = arith.constant 0 : index
    %23 = vector.load %arg7[%c0_15, %c0_16] : memref<1x64xf32, #tpu.memory_space<vmem>>, vector<1x64xf32>
    %c0_17 = arith.constant 0 : index
    %c0_18 = arith.constant 0 : index
    %24 = vector.load %arg8[%c0_17, %c0_18] : memref<1x64xf32, #tpu.memory_space<vmem>>, vector<1x64xf32>
    %cst_19 = arith.constant dense<0.000000e+00> : vector<64xf32>
    %25 = vector.multi_reduction <add>, %22, %cst_19 [0] : vector<8x64xf32> to vector<64xf32>
    %26 = vector.shape_cast %25 : vector<64xf32> to vector<1x64xf32>
    %cst_20 = arith.constant 8.000000e+00 : f32
    %27 = vector.broadcast %cst_20 : f32 to vector<1x64xf32>
    %28 = arith.divf %26, %27 : vector<1x64xf32>
    %29 = vector.broadcast %28 : vector<1x64xf32> to vector<8x64xf32>
    %30 = arith.subf %22, %29 : vector<8x64xf32>
    %31 = arith.mulf %30, %30 : vector<8x64xf32>
    %cst_21 = arith.constant dense<0.000000e+00> : vector<64xf32>
    %32 = vector.multi_reduction <add>, %31, %cst_21 [0] : vector<8x64xf32> to vector<64xf32>
    %33 = vector.shape_cast %32 : vector<64xf32> to vector<1x64xf32>
    %cst_22 = arith.constant 8.000000e+00 : f32
    %34 = vector.broadcast %cst_22 : f32 to vector<1x64xf32>
    %35 = arith.divf %33, %34 : vector<1x64xf32>
    %cst_23 = arith.constant 9.99999974E-6 : f32
    %36 = vector.broadcast %cst_23 : f32 to vector<1x64xf32>
    %37 = arith.addf %35, %36 : vector<1x64xf32>
    %38 = math.rsqrt %37 : vector<1x64xf32>
    %39 = vector.broadcast %38 : vector<1x64xf32> to vector<8x64xf32>
    %40 = arith.mulf %30, %39 : vector<8x64xf32>
    %41 = vector.broadcast %23 : vector<1x64xf32> to vector<8x64xf32>
    %42 = arith.mulf %40, %41 : vector<8x64xf32>
    %43 = vector.broadcast %24 : vector<1x64xf32> to vector<8x64xf32>
    %44 = arith.addf %42, %43 : vector<8x64xf32>
    %cst_24 = arith.constant 5.000000e-01 : f32
    %45 = vector.broadcast %cst_24 : f32 to vector<8x64xf32>
    %46 = arith.mulf %45, %44 : vector<8x64xf32>
    %cst_25 = arith.constant 0.707106769 : f32
    %47 = vector.broadcast %cst_25 : f32 to vector<8x64xf32>
    %48 = arith.mulf %44, %47 : vector<8x64xf32>
    %49 = math.erf %48 : vector<8x64xf32>
    %cst_26 = arith.constant 1.000000e+00 : f32
    %50 = vector.broadcast %cst_26 : f32 to vector<8x64xf32>
    %51 = arith.addf %50, %49 : vector<8x64xf32>
    %52 = arith.mulf %46, %51 : vector<8x64xf32>
    %c0_27 = arith.constant 0 : index
    %c0_28 = arith.constant 0 : index
    %53 = vector.load %arg9[%c0_27, %c0_28] : memref<64x64xbf16, #tpu.memory_space<vmem>>, vector<64x64xbf16>
    %54 = arith.truncf %52 : vector<8x64xf32> to vector<8x64xbf16>
    %cst_29 = arith.constant dense<0.000000e+00> : vector<8x64xf32>
    %55 = tpu.matmul %54, %53, %cst_29 {dimension_numbers = #tpu.dot_dimension_numbers<[1], [0], [0], [1], [0, 0, 1, 1], [], []>} : vector<8x64xbf16>, vector<64x64xbf16>, vector<8x64xf32> -> vector<8x64xf32>
    %c0_30 = arith.constant 0 : index
    %c0_31 = arith.constant 0 : index
    %56 = vector.load %arg10[%c0_30, %c0_31] : memref<1x64xf32, #tpu.memory_space<vmem>>, vector<1x64xf32>
    %57 = vector.broadcast %56 : vector<1x64xf32> to vector<8x64xf32>
    %58 = arith.addf %55, %57 : vector<8x64xf32>
    %59 = arith.addf %58, %16 : vector<8x64xf32>
    %c0_32 = arith.constant 0 : index
    %c0_33 = arith.constant 0 : index
    %60 = vector.load %arg2[%c0_32, %c0_33] : memref<8x64xf32, #tpu.memory_space<vmem>>, vector<8x64xf32>
    %61 = arith.addf %59, %60 : vector<8x64xf32>
    %c0_34 = arith.constant 0 : index
    %c0_35 = arith.constant 0 : index
    %62 = vector.load %arg11[%c0_34, %c0_35] : memref<64x256xbf16, #tpu.memory_space<vmem>>, vector<64x256xbf16>
    %63 = arith.truncf %61 : vector<8x64xf32> to vector<8x64xbf16>
    %cst_36 = arith.constant dense<0.000000e+00> : vector<8x256xf32>
    %64 = tpu.matmul %63, %62, %cst_36 {dimension_numbers = #tpu.dot_dimension_numbers<[1], [0], [0], [1], [0, 0, 1, 1], [], []>} : vector<8x64xbf16>, vector<64x256xbf16>, vector<8x256xf32> -> vector<8x256xf32>
    %c0_37 = arith.constant 0 : index
    %c0_38 = arith.constant 0 : index
    %65 = vector.load %arg12[%c0_37, %c0_38] : memref<1x256xf32, #tpu.memory_space<vmem>>, vector<1x256xf32>
    %66 = vector.broadcast %65 : vector<1x256xf32> to vector<8x256xf32>
    %67 = arith.addf %64, %66 : vector<8x256xf32>
    %c0_39 = arith.constant 0 : index
    %c0_40 = arith.constant 0 : index
    %68 = vector.load %arg13[%c0_39, %c0_40] : memref<1x256xf32, #tpu.memory_space<vmem>>, vector<1x256xf32>
    %c0_41 = arith.constant 0 : index
    %c0_42 = arith.constant 0 : index
    %69 = vector.load %arg14[%c0_41, %c0_42] : memref<1x256xf32, #tpu.memory_space<vmem>>, vector<1x256xf32>
    %cst_43 = arith.constant dense<0.000000e+00> : vector<256xf32>
    %70 = vector.multi_reduction <add>, %67, %cst_43 [0] : vector<8x256xf32> to vector<256xf32>
    %71 = vector.shape_cast %70 : vector<256xf32> to vector<1x256xf32>
    %cst_44 = arith.constant 8.000000e+00 : f32
    %72 = vector.broadcast %cst_44 : f32 to vector<1x256xf32>
    %73 = arith.divf %71, %72 : vector<1x256xf32>
    %74 = vector.broadcast %73 : vector<1x256xf32> to vector<8x256xf32>
    %75 = arith.subf %67, %74 : vector<8x256xf32>
    %76 = arith.mulf %75, %75 : vector<8x256xf32>
    %cst_45 = arith.constant dense<0.000000e+00> : vector<256xf32>
    %77 = vector.multi_reduction <add>, %76, %cst_45 [0] : vector<8x256xf32> to vector<256xf32>
    %78 = vector.shape_cast %77 : vector<256xf32> to vector<1x256xf32>
    %cst_46 = arith.constant 8.000000e+00 : f32
    %79 = vector.broadcast %cst_46 : f32 to vector<1x256xf32>
    %80 = arith.divf %78, %79 : vector<1x256xf32>
    %cst_47 = arith.constant 9.99999974E-6 : f32
    %81 = vector.broadcast %cst_47 : f32 to vector<1x256xf32>
    %82 = arith.addf %80, %81 : vector<1x256xf32>
    %83 = math.rsqrt %82 : vector<1x256xf32>
    %84 = vector.broadcast %83 : vector<1x256xf32> to vector<8x256xf32>
    %85 = arith.mulf %75, %84 : vector<8x256xf32>
    %86 = vector.broadcast %68 : vector<1x256xf32> to vector<8x256xf32>
    %87 = arith.mulf %85, %86 : vector<8x256xf32>
    %88 = vector.broadcast %69 : vector<1x256xf32> to vector<8x256xf32>
    %89 = arith.addf %87, %88 : vector<8x256xf32>
    %cst_48 = arith.constant 5.000000e-01 : f32
    %90 = vector.broadcast %cst_48 : f32 to vector<8x256xf32>
    %91 = arith.mulf %90, %89 : vector<8x256xf32>
    %cst_49 = arith.constant 0.707106769 : f32
    %92 = vector.broadcast %cst_49 : f32 to vector<8x256xf32>
    %93 = arith.mulf %89, %92 : vector<8x256xf32>
    %94 = math.erf %93 : vector<8x256xf32>
    %cst_50 = arith.constant 1.000000e+00 : f32
    %95 = vector.broadcast %cst_50 : f32 to vector<8x256xf32>
    %96 = arith.addf %95, %94 : vector<8x256xf32>
    %97 = arith.mulf %91, %96 : vector<8x256xf32>
    %c0_51 = arith.constant 0 : index
    %c0_52 = arith.constant 0 : index
    %98 = vector.load %arg15[%c0_51, %c0_52] : memref<256x64xbf16, #tpu.memory_space<vmem>>, vector<256x64xbf16>
    %99 = arith.truncf %97 : vector<8x256xf32> to vector<8x256xbf16>
    %cst_53 = arith.constant dense<0.000000e+00> : vector<8x64xf32>
    %100 = tpu.matmul %99, %98, %cst_53 {dimension_numbers = #tpu.dot_dimension_numbers<[1], [0], [0], [1], [0, 0, 1, 1], [], []>} : vector<8x256xbf16>, vector<256x64xbf16>, vector<8x64xf32> -> vector<8x64xf32>
    %c0_54 = arith.constant 0 : index
    %c0_55 = arith.constant 0 : index
    %101 = vector.load %arg16[%c0_54, %c0_55] : memref<1x64xf32, #tpu.memory_space<vmem>>, vector<1x64xf32>
    %102 = vector.broadcast %101 : vector<1x64xf32> to vector<8x64xf32>
    %103 = arith.addf %100, %102 : vector<8x64xf32>
    %104 = arith.addf %103, %61 : vector<8x64xf32>
    %cst_56 = arith.constant 5.000000e-01 : f32
    %105 = vector.broadcast %cst_56 : f32 to vector<8x64xf32>
    %106 = arith.mulf %105, %104 : vector<8x64xf32>
    %cst_57 = arith.constant 0.707106769 : f32
    %107 = vector.broadcast %cst_57 : f32 to vector<8x64xf32>
    %108 = arith.mulf %104, %107 : vector<8x64xf32>
    %109 = math.erf %108 : vector<8x64xf32>
    %cst_58 = arith.constant 1.000000e+00 : f32
    %110 = vector.broadcast %cst_58 : f32 to vector<8x64xf32>
    %111 = arith.addf %110, %109 : vector<8x64xf32>
    %112 = arith.mulf %106, %111 : vector<8x64xf32>
    %c0_59 = arith.constant 0 : index
    %c0_60 = arith.constant 0 : index
    %113 = vector.load %arg17[%c0_59, %c0_60] : memref<64x256xbf16, #tpu.memory_space<vmem>>, vector<64x256xbf16>
    %114 = arith.truncf %112 : vector<8x64xf32> to vector<8x64xbf16>
    %cst_61 = arith.constant dense<0.000000e+00> : vector<8x256xf32>
    %115 = tpu.matmul %114, %113, %cst_61 {dimension_numbers = #tpu.dot_dimension_numbers<[1], [0], [0], [1], [0, 0, 1, 1], [], []>} : vector<8x64xbf16>, vector<64x256xbf16>, vector<8x256xf32> -> vector<8x256xf32>
    %c0_62 = arith.constant 0 : index
    %c0_63 = arith.constant 0 : index
    %116 = vector.load %arg18[%c0_62, %c0_63] : memref<1x256xf32, #tpu.memory_space<vmem>>, vector<1x256xf32>
    %117 = vector.broadcast %116 : vector<1x256xf32> to vector<8x256xf32>
    %118 = arith.addf %115, %117 : vector<8x256xf32>
    %c0_64 = arith.constant 0 : index
    %c0_65 = arith.constant 0 : index
    %119 = vector.load %arg19[%c0_64, %c0_65] : memref<1x256xf32, #tpu.memory_space<vmem>>, vector<1x256xf32>
    %c0_66 = arith.constant 0 : index
    %c0_67 = arith.constant 0 : index
    %120 = vector.load %arg20[%c0_66, %c0_67] : memref<1x256xf32, #tpu.memory_space<vmem>>, vector<1x256xf32>
    %cst_68 = arith.constant dense<0.000000e+00> : vector<256xf32>
    %121 = vector.multi_reduction <add>, %118, %cst_68 [0] : vector<8x256xf32> to vector<256xf32>
    %122 = vector.shape_cast %121 : vector<256xf32> to vector<1x256xf32>
    %cst_69 = arith.constant 8.000000e+00 : f32
    %123 = vector.broadcast %cst_69 : f32 to vector<1x256xf32>
    %124 = arith.divf %122, %123 : vector<1x256xf32>
    %125 = vector.broadcast %124 : vector<1x256xf32> to vector<8x256xf32>
    %126 = arith.subf %118, %125 : vector<8x256xf32>
    %127 = arith.mulf %126, %126 : vector<8x256xf32>
    %cst_70 = arith.constant dense<0.000000e+00> : vector<256xf32>
    %128 = vector.multi_reduction <add>, %127, %cst_70 [0] : vector<8x256xf32> to vector<256xf32>
    %129 = vector.shape_cast %128 : vector<256xf32> to vector<1x256xf32>
    %cst_71 = arith.constant 8.000000e+00 : f32
    %130 = vector.broadcast %cst_71 : f32 to vector<1x256xf32>
    %131 = arith.divf %129, %130 : vector<1x256xf32>
    %cst_72 = arith.constant 9.99999974E-6 : f32
    %132 = vector.broadcast %cst_72 : f32 to vector<1x256xf32>
    %133 = arith.addf %131, %132 : vector<1x256xf32>
    %134 = math.rsqrt %133 : vector<1x256xf32>
    %135 = vector.broadcast %134 : vector<1x256xf32> to vector<8x256xf32>
    %136 = arith.mulf %126, %135 : vector<8x256xf32>
    %137 = vector.broadcast %119 : vector<1x256xf32> to vector<8x256xf32>
    %138 = arith.mulf %136, %137 : vector<8x256xf32>
    %139 = vector.broadcast %120 : vector<1x256xf32> to vector<8x256xf32>
    %140 = arith.addf %138, %139 : vector<8x256xf32>
    %cst_73 = arith.constant 5.000000e-01 : f32
    %141 = vector.broadcast %cst_73 : f32 to vector<8x256xf32>
    %142 = arith.mulf %141, %140 : vector<8x256xf32>
    %cst_74 = arith.constant 0.707106769 : f32
    %143 = vector.broadcast %cst_74 : f32 to vector<8x256xf32>
    %144 = arith.mulf %140, %143 : vector<8x256xf32>
    %145 = math.erf %144 : vector<8x256xf32>
    %cst_75 = arith.constant 1.000000e+00 : f32
    %146 = vector.broadcast %cst_75 : f32 to vector<8x256xf32>
    %147 = arith.addf %146, %145 : vector<8x256xf32>
    %148 = arith.mulf %142, %147 : vector<8x256xf32>
    %c0_76 = arith.constant 0 : index
    %c0_77 = arith.constant 0 : index
    %149 = vector.load %arg21[%c0_76, %c0_77] : memref<256x64xbf16, #tpu.memory_space<vmem>>, vector<256x64xbf16>
    %150 = arith.truncf %148 : vector<8x256xf32> to vector<8x256xbf16>
    %cst_78 = arith.constant dense<0.000000e+00> : vector<8x64xf32>
    %151 = tpu.matmul %150, %149, %cst_78 {dimension_numbers = #tpu.dot_dimension_numbers<[1], [0], [0], [1], [0, 0, 1, 1], [], []>} : vector<8x256xbf16>, vector<256x64xbf16>, vector<8x64xf32> -> vector<8x64xf32>
    %c0_79 = arith.constant 0 : index
    %c0_80 = arith.constant 0 : index
    %152 = vector.load %arg22[%c0_79, %c0_80] : memref<1x64xf32, #tpu.memory_space<vmem>>, vector<1x64xf32>
    %153 = vector.broadcast %152 : vector<1x64xf32> to vector<8x64xf32>
    %154 = arith.addf %151, %153 : vector<8x64xf32>
    %155 = arith.addf %154, %112 : vector<8x64xf32>
    %156 = arith.addf %155, %61 : vector<8x64xf32>
    %c0_81 = arith.constant 0 : index
    %c0_82 = arith.constant 0 : index
    %157 = vector.load %arg23[%c0_81, %c0_82] : memref<8x64xf32, #tpu.memory_space<vmem>>, vector<8x64xf32>
    tpu.vector_store %arg23[%c0_81, %c0_82], %156 {strides = array<i32>} : memref<8x64xf32, #tpu.memory_space<vmem>>, vector<8x64xf32>,
    return
  }
}

module attributes {stable_mosaic.version = 11 : i64} {
  func.func @_block_tail_kernel(%arg0: memref<8x64xf32, #tpu.memory_space<vmem>>, %arg1: memref<8x64xf32, #tpu.memory_space<vmem>>, %arg2: memref<8x64xf32, #tpu.memory_space<vmem>>, %arg3: memref<128x64xbf16, #tpu.memory_space<vmem>>, %arg4: memref<1x64xf32, #tpu.memory_space<vmem>>, %arg5: memref<64x64xbf16, #tpu.memory_space<vmem>>, %arg6: memref<1x64xf32, #tpu.memory_space<vmem>>, %arg7: memref<1x64xf32, #tpu.memory_space<vmem>>, %arg8: memref<1x64xf32, #tpu.memory_space<vmem>>, %arg9: memref<64x64xbf16, #tpu.memory_space<vmem>>, %arg10: memref<1x64xf32, #tpu.memory_space<vmem>>, %arg11: memref<64x256xbf16, #tpu.memory_space<vmem>>, %arg12: memref<1x256xf32, #tpu.memory_space<vmem>>, %arg13: memref<1x256xf32, #tpu.memory_space<vmem>>, %arg14: memref<1x256xf32, #tpu.memory_space<vmem>>, %arg15: memref<256x64xbf16, #tpu.memory_space<vmem>>, %arg16: memref<1x64xf32, #tpu.memory_space<vmem>>, %arg17: memref<64x256xbf16, #tpu.memory_space<vmem>>, %arg18: memref<1x256xf32, #tpu.memory_space<vmem>>, %arg19: memref<1x256xf32, #tpu.memory_space<vmem>>, %arg20: memref<1x256xf32, #tpu.memory_space<vmem>>, %arg21: memref<256x64xbf16, #tpu.memory_space<vmem>>, %arg22: memref<1x64xf32, #tpu.memory_space<vmem>>, %arg23: memref<8x64xf32, #tpu.memory_space<vmem>>) attributes {dimension_semantics = [], scalar_prefetch = 0 : i64, scratch_operands = 0 : i64, tpu.core_type = #tpu.core_type<tc>} {
    %c0 = arith.constant 0 : index
    %c0_0 = arith.constant 0 : index
    %0 = vector.load %arg0[%c0, %c0_0] : memref<8x64xf32, #tpu.memory_space<vmem>>, vector<8x64xf32>
    %c0_1 = arith.constant 0 : index
    %c0_2 = arith.constant 0 : index
    %1 = vector.load %arg1[%c0_1, %c0_2] : memref<8x64xf32, #tpu.memory_space<vmem>>, vector<8x64xf32>
    %2 = tpu.concatenate %0, %1 in 1 : vector<8x64xf32>, vector<8x64xf32> -> vector<8x128xf32>
    %c0_3 = arith.constant 0 : index
    %c0_4 = arith.constant 0 : index
    %3 = vector.load %arg3[%c0_3, %c0_4] : memref<128x64xbf16, #tpu.memory_space<vmem>>, vector<128x64xbf16>
    %4 = arith.truncf %2 : vector<8x128xf32> to vector<8x128xbf16>
    %cst = arith.constant dense<0.000000e+00> : vector<8x64xf32>
    %5 = tpu.matmul %4, %3, %cst {dimension_numbers = #tpu.dot_dimension_numbers<[1], [0], [0], [1], [0, 0, 1, 1], [], []>} : vector<8x128xbf16>, vector<128x64xbf16>, vector<8x64xf32> -> vector<8x64xf32>
    %c0_5 = arith.constant 0 : index
    %c0_6 = arith.constant 0 : index
    %6 = vector.load %arg4[%c0_5, %c0_6] : memref<1x64xf32, #tpu.memory_space<vmem>>, vector<1x64xf32>
    %7 = vector.broadcast %6 : vector<1x64xf32> to vector<8x64xf32>
    %8 = arith.addf %5, %7 : vector<8x64xf32>
    %cst_7 = arith.constant 5.000000e-01 : f32
    %9 = vector.broadcast %cst_7 : f32 to vector<8x64xf32>
    %10 = arith.mulf %9, %8 : vector<8x64xf32>
    %cst_8 = arith.constant 0.707106769 : f32
    %11 = vector.broadcast %cst_8 : f32 to vector<8x64xf32>
    %12 = arith.mulf %8, %11 : vector<8x64xf32>
    %13 = math.erf %12 : vector<8x64xf32>
    %cst_9 = arith.constant 1.000000e+00 : f32
    %14 = vector.broadcast %cst_9 : f32 to vector<8x64xf32>
    %15 = arith.addf %14, %13 : vector<8x64xf32>
    %16 = arith.mulf %10, %15 : vector<8x64xf32>
    %c0_10 = arith.constant 0 : index
    %c0_11 = arith.constant 0 : index
    %17 = vector.load %arg5[%c0_10, %c0_11] : memref<64x64xbf16, #tpu.memory_space<vmem>>, vector<64x64xbf16>
    %18 = arith.truncf %16 : vector<8x64xf32> to vector<8x64xbf16>
    %cst_12 = arith.constant dense<0.000000e+00> : vector<8x64xf32>
    %19 = tpu.matmul %18, %17, %cst_12 {dimension_numbers = #tpu.dot_dimension_numbers<[1], [0], [0], [1], [0, 0, 1, 1], [], []>} : vector<8x64xbf16>, vector<64x64xbf16>, vector<8x64xf32> -> vector<8x64xf32>
    %c0_13 = arith.constant 0 : index
    %c0_14 = arith.constant 0 : index
    %20 = vector.load %arg6[%c0_13, %c0_14] : memref<1x64xf32, #tpu.memory_space<vmem>>, vector<1x64xf32>
    %21 = vector.broadcast %20 : vector<1x64xf32> to vector<8x64xf32>
    %22 = arith.addf %19, %21 : vector<8x64xf32>
    %c0_15 = arith.constant 0 : index
    %c0_16 = arith.constant 0 : index
    %23 = vector.load %arg7[%c0_15, %c0_16] : memref<1x64xf32, #tpu.memory_space<vmem>>, vector<1x64xf32>
    %c0_17 = arith.constant 0 : index
    %c0_18 = arith.constant 0 : index
    %24 = vector.load %arg8[%c0_17, %c0_18] : memref<1x64xf32, #tpu.memory_space<vmem>>, vector<1x64xf32>
    %cst_19 = arith.constant dense<0.000000e+00> : vector<64xf32>
    %25 = vector.multi_reduction <add>, %22, %cst_19 [0] : vector<8x64xf32> to vector<64xf32>
    %26 = vector.shape_cast %25 : vector<64xf32> to vector<1x64xf32>
    %cst_20 = arith.constant 8.000000e+00 : f32
    %27 = vector.broadcast %cst_20 : f32 to vector<1x64xf32>
    %28 = arith.divf %26, %27 : vector<1x64xf32>
    %29 = vector.broadcast %28 : vector<1x64xf32> to vector<8x64xf32>
    %30 = arith.subf %22, %29 : vector<8x64xf32>
    %31 = arith.mulf %30, %30 : vector<8x64xf32>
    %cst_21 = arith.constant dense<0.000000e+00> : vector<64xf32>
    %32 = vector.multi_reduction <add>, %31, %cst_21 [0] : vector<8x64xf32> to vector<64xf32>
    %33 = vector.shape_cast %32 : vector<64xf32> to vector<1x64xf32>
    %cst_22 = arith.constant 8.000000e+00 : f32
    %34 = vector.broadcast %cst_22 : f32 to vector<1x64xf32>
    %35 = arith.divf %33, %34 : vector<1x64xf32>
    %cst_23 = arith.constant 9.99999974E-6 : f32
    %36 = vector.broadcast %cst_23 : f32 to vector<1x64xf32>
    %37 = arith.addf %35, %36 : vector<1x64xf32>
    %38 = math.rsqrt %37 : vector<1x64xf32>
    %39 = vector.broadcast %38 : vector<1x64xf32> to vector<8x64xf32>
    %40 = arith.mulf %30, %39 : vector<8x64xf32>
    %41 = vector.broadcast %23 : vector<1x64xf32> to vector<8x64xf32>
    %42 = arith.mulf %40, %41 : vector<8x64xf32>
    %43 = vector.broadcast %24 : vector<1x64xf32> to vector<8x64xf32>
    %44 = arith.addf %42, %43 : vector<8x64xf32>
    %cst_24 = arith.constant 5.000000e-01 : f32
    %45 = vector.broadcast %cst_24 : f32 to vector<8x64xf32>
    %46 = arith.mulf %45, %44 : vector<8x64xf32>
    %cst_25 = arith.constant 0.707106769 : f32
    %47 = vector.broadcast %cst_25 : f32 to vector<8x64xf32>
    %48 = arith.mulf %44, %47 : vector<8x64xf32>
    %49 = math.erf %48 : vector<8x64xf32>
    %cst_26 = arith.constant 1.000000e+00 : f32
    %50 = vector.broadcast %cst_26 : f32 to vector<8x64xf32>
    %51 = arith.addf %50, %49 : vector<8x64xf32>
    %52 = arith.mulf %46, %51 : vector<8x64xf32>
    %c0_27 = arith.constant 0 : index
    %c0_28 = arith.constant 0 : index
    %53 = vector.load %arg9[%c0_27, %c0_28] : memref<64x64xbf16, #tpu.memory_space<vmem>>, vector<64x64xbf16>
    %54 = arith.truncf %52 : vector<8x64xf32> to vector<8x64xbf16>
    %cst_29 = arith.constant dense<0.000000e+00> : vector<8x64xf32>
    %55 = tpu.matmul %54, %53, %cst_29 {dimension_numbers = #tpu.dot_dimension_numbers<[1], [0], [0], [1], [0, 0, 1, 1], [], []>} : vector<8x64xbf16>, vector<64x64xbf16>, vector<8x64xf32> -> vector<8x64xf32>
    %c0_30 = arith.constant 0 : index
    %c0_31 = arith.constant 0 : index
    %56 = vector.load %arg10[%c0_30, %c0_31] : memref<1x64xf32, #tpu.memory_space<vmem>>, vector<1x64xf32>
    %57 = vector.broadcast %56 : vector<1x64xf32> to vector<8x64xf32>
    %58 = arith.addf %55, %57 : vector<8x64xf32>
    %59 = arith.addf %58, %16 : vector<8x64xf32>
    %c0_32 = arith.constant 0 : index
    %c0_33 = arith.constant 0 : index
    %60 = vector.load %arg2[%c0_32, %c0_33] : memref<8x64xf32, #tpu.memory_space<vmem>>, vector<8x64xf32>
    %61 = arith.addf %59, %60 : vector<8x64xf32>
    %c0_34 = arith.constant 0 : index
    %c0_35 = arith.constant 0 : index
    %62 = vector.load %arg11[%c0_34, %c0_35] : memref<64x256xbf16, #tpu.memory_space<vmem>>, vector<64x256xbf16>
    %63 = arith.truncf %61 : vector<8x64xf32> to vector<8x64xbf16>
    %cst_36 = arith.constant dense<0.000000e+00> : vector<8x256xf32>
    %64 = tpu.matmul %63, %62, %cst_36 {dimension_numbers = #tpu.dot_dimension_numbers<[1], [0], [0], [1], [0, 0, 1, 1], [], []>} : vector<8x64xbf16>, vector<64x256xbf16>, vector<8x256xf32> -> vector<8x256xf32>
    %c0_37 = arith.constant 0 : index
    %c0_38 = arith.constant 0 : index
    %65 = vector.load %arg12[%c0_37, %c0_38] : memref<1x256xf32, #tpu.memory_space<vmem>>, vector<1x256xf32>
    %66 = vector.broadcast %65 : vector<1x256xf32> to vector<8x256xf32>
    %67 = arith.addf %64, %66 : vector<8x256xf32>
    %c0_39 = arith.constant 0 : index
    %c0_40 = arith.constant 0 : index
    %68 = vector.load %arg13[%c0_39, %c0_40] : memref<1x256xf32, #tpu.memory_space<vmem>>, vector<1x256xf32>
    %c0_41 = arith.constant 0 : index
    %c0_42 = arith.constant 0 : index
    %69 = vector.load %arg14[%c0_41, %c0_42] : memref<1x256xf32, #tpu.memory_space<vmem>>, vector<1x256xf32>
    %cst_43 = arith.constant dense<0.000000e+00> : vector<256xf32>
    %70 = vector.multi_reduction <add>, %67, %cst_43 [0] : vector<8x256xf32> to vector<256xf32>
    %71 = vector.shape_cast %70 : vector<256xf32> to vector<1x256xf32>
    %cst_44 = arith.constant 8.000000e+00 : f32
    %72 = vector.broadcast %cst_44 : f32 to vector<1x256xf32>
    %73 = arith.divf %71, %72 : vector<1x256xf32>
    %74 = vector.broadcast %73 : vector<1x256xf32> to vector<8x256xf32>
    %75 = arith.subf %67, %74 : vector<8x256xf32>
    %76 = arith.mulf %75, %75 : vector<8x256xf32>
    %cst_45 = arith.constant dense<0.000000e+00> : vector<256xf32>
    %77 = vector.multi_reduction <add>, %76, %cst_45 [0] : vector<8x256xf32> to vector<256xf32>
    %78 = vector.shape_cast %77 : vector<256xf32> to vector<1x256xf32>
    %cst_46 = arith.constant 8.000000e+00 : f32
    %79 = vector.broadcast %cst_46 : f32 to vector<1x256xf32>
    %80 = arith.divf %78, %79 : vector<1x256xf32>
    %cst_47 = arith.constant 9.99999974E-6 : f32
    %81 = vector.broadcast %cst_47 : f32 to vector<1x256xf32>
    %82 = arith.addf %80, %81 : vector<1x256xf32>
    %83 = math.rsqrt %82 : vector<1x256xf32>
    %84 = vector.broadcast %83 : vector<1x256xf32> to vector<8x256xf32>
    %85 = arith.mulf %75, %84 : vector<8x256xf32>
    %86 = vector.broadcast %68 : vector<1x256xf32> to vector<8x256xf32>
    %87 = arith.mulf %85, %86 : vector<8x256xf32>
    %88 = vector.broadcast %69 : vector<1x256xf32> to vector<8x256xf32>
    %89 = arith.addf %87, %88 : vector<8x256xf32>
    %cst_48 = arith.constant 5.000000e-01 : f32
    %90 = vector.broadcast %cst_48 : f32 to vector<8x256xf32>
    %91 = arith.mulf %90, %89 : vector<8x256xf32>
    %cst_49 = arith.constant 0.707106769 : f32
    %92 = vector.broadcast %cst_49 : f32 to vector<8x256xf32>
    %93 = arith.mulf %89, %92 : vector<8x256xf32>
    %94 = math.erf %93 : vector<8x256xf32>
    %cst_50 = arith.constant 1.000000e+00 : f32
    %95 = vector.broadcast %cst_50 : f32 to vector<8x256xf32>
    %96 = arith.addf %95, %94 : vector<8x256xf32>
    %97 = arith.mulf %91, %96 : vector<8x256xf32>
    %c0_51 = arith.constant 0 : index
    %c0_52 = arith.constant 0 : index
    %98 = vector.load %arg15[%c0_51, %c0_52] : memref<256x64xbf16, #tpu.memory_space<vmem>>, vector<256x64xbf16>
    %99 = arith.truncf %97 : vector<8x256xf32> to vector<8x256xbf16>
    %cst_53 = arith.constant dense<0.000000e+00> : vector<8x64xf32>
    %100 = tpu.matmul %99, %98, %cst_53 {dimension_numbers = #tpu.dot_dimension_numbers<[1], [0], [0], [1], [0, 0, 1, 1], [], []>} : vector<8x256xbf16>, vector<256x64xbf16>, vector<8x64xf32> -> vector<8x64xf32>
    %c0_54 = arith.constant 0 : index
    %c0_55 = arith.constant 0 : index
    %101 = vector.load %arg16[%c0_54, %c0_55] : memref<1x64xf32, #tpu.memory_space<vmem>>, vector<1x64xf32>
    %102 = vector.broadcast %101 : vector<1x64xf32> to vector<8x64xf32>
    %103 = arith.addf %100, %102 : vector<8x64xf32>
    %104 = arith.addf %103, %61 : vector<8x64xf32>
    %cst_56 = arith.constant 5.000000e-01 : f32
    %105 = vector.broadcast %cst_56 : f32 to vector<8x64xf32>
    %106 = arith.mulf %105, %104 : vector<8x64xf32>
    %cst_57 = arith.constant 0.707106769 : f32
    %107 = vector.broadcast %cst_57 : f32 to vector<8x64xf32>
    %108 = arith.mulf %104, %107 : vector<8x64xf32>
    %109 = math.erf %108 : vector<8x64xf32>
    %cst_58 = arith.constant 1.000000e+00 : f32
    %110 = vector.broadcast %cst_58 : f32 to vector<8x64xf32>
    %111 = arith.addf %110, %109 : vector<8x64xf32>
    %112 = arith.mulf %106, %111 : vector<8x64xf32>
    %c0_59 = arith.constant 0 : index
    %c0_60 = arith.constant 0 : index
    %113 = vector.load %arg17[%c0_59, %c0_60] : memref<64x256xbf16, #tpu.memory_space<vmem>>, vector<64x256xbf16>
    %114 = arith.truncf %112 : vector<8x64xf32> to vector<8x64xbf16>
    %cst_61 = arith.constant dense<0.000000e+00> : vector<8x256xf32>
    %115 = tpu.matmul %114, %113, %cst_61 {dimension_numbers = #tpu.dot_dimension_numbers<[1], [0], [0], [1], [0, 0, 1, 1], [], []>} : vector<8x64xbf16>, vector<64x256xbf16>, vector<8x256xf32> -> vector<8x256xf32>
    %c0_62 = arith.constant 0 : index
    %c0_63 = arith.constant 0 : index
    %116 = vector.load %arg18[%c0_62, %c0_63] : memref<1x256xf32, #tpu.memory_space<vmem>>, vector<1x256xf32>
    %117 = vector.broadcast %116 : vector<1x256xf32> to vector<8x256xf32>
    %118 = arith.addf %115, %117 : vector<8x256xf32>
    %c0_64 = arith.constant 0 : index
    %c0_65 = arith.constant 0 : index
    %119 = vector.load %arg19[%c0_64, %c0_65] : memref<1x256xf32, #tpu.memory_space<vmem>>, vector<1x256xf32>
    %c0_66 = arith.constant 0 : index
    %c0_67 = arith.constant 0 : index
    %120 = vector.load %arg20[%c0_66, %c0_67] : memref<1x256xf32, #tpu.memory_space<vmem>>, vector<1x256xf32>
    %cst_68 = arith.constant dense<0.000000e+00> : vector<256xf32>
    %121 = vector.multi_reduction <add>, %118, %cst_68 [0] : vector<8x256xf32> to vector<256xf32>
    %122 = vector.shape_cast %121 : vector<256xf32> to vector<1x256xf32>
    %cst_69 = arith.constant 8.000000e+00 : f32
    %123 = vector.broadcast %cst_69 : f32 to vector<1x256xf32>
    %124 = arith.divf %122, %123 : vector<1x256xf32>
    %125 = vector.broadcast %124 : vector<1x256xf32> to vector<8x256xf32>
    %126 = arith.subf %118, %125 : vector<8x256xf32>
    %127 = arith.mulf %126, %126 : vector<8x256xf32>
    %cst_70 = arith.constant dense<0.000000e+00> : vector<256xf32>
    %128 = vector.multi_reduction <add>, %127, %cst_70 [0] : vector<8x256xf32> to vector<256xf32>
    %129 = vector.shape_cast %128 : vector<256xf32> to vector<1x256xf32>
    %cst_71 = arith.constant 8.000000e+00 : f32
    %130 = vector.broadcast %cst_71 : f32 to vector<1x256xf32>
    %131 = arith.divf %129, %130 : vector<1x256xf32>
    %cst_72 = arith.constant 9.99999974E-6 : f32
    %132 = vector.broadcast %cst_72 : f32 to vector<1x256xf32>
    %133 = arith.addf %131, %132 : vector<1x256xf32>
    %134 = math.rsqrt %133 : vector<1x256xf32>
    %135 = vector.broadcast %134 : vector<1x256xf32> to vector<8x256xf32>
    %136 = arith.mulf %126, %135 : vector<8x256xf32>
    %137 = vector.broadcast %119 : vector<1x256xf32> to vector<8x256xf32>
    %138 = arith.mulf %136, %137 : vector<8x256xf32>
    %139 = vector.broadcast %120 : vector<1x256xf32> to vector<8x256xf32>
    %140 = arith.addf %138, %139 : vector<8x256xf32>
    %cst_73 = arith.constant 5.000000e-01 : f32
    %141 = vector.broadcast %cst_73 : f32 to vector<8x256xf32>
    %142 = arith.mulf %141, %140 : vector<8x256xf32>
    %cst_74 = arith.constant 0.707106769 : f32
    %143 = vector.broadcast %cst_74 : f32 to vector<8x256xf32>
    %144 = arith.mulf %140, %143 : vector<8x256xf32>
    %145 = math.erf %144 : vector<8x256xf32>
    %cst_75 = arith.constant 1.000000e+00 : f32
    %146 = vector.broadcast %cst_75 : f32 to vector<8x256xf32>
    %147 = arith.addf %146, %145 : vector<8x256xf32>
    %148 = arith.mulf %142, %147 : vector<8x256xf32>
    %c0_76 = arith.constant 0 : index
    %c0_77 = arith.constant 0 : index
    %149 = vector.load %arg21[%c0_76, %c0_77] : memref<256x64xbf16, #tpu.memory_space<vmem>>, vector<256x64xbf16>
    %150 = arith.truncf %148 : vector<8x256xf32> to vector<8x256xbf16>
    %cst_78 = arith.constant dense<0.000000e+00> : vector<8x64xf32>
    %151 = tpu.matmul %150, %149, %cst_78 {dimension_numbers = #tpu.dot_dimension_numbers<[1], [0], [0], [1], [0, 0, 1, 1], [], []>} : vector<8x256xbf16>, vector<256x64xbf16>, vector<8x64xf32> -> vector<8x64xf32>
    %c0_79 = arith.constant 0 : index
    %c0_80 = arith.constant 0 : index
    %152 = vector.load %arg22[%c0_79, %c0_80] : memref<1x64xf32, #tpu.memory_space<vmem>>, vector<1x64xf32>
    %153 = vector.broadcast %152 : vector<1x64xf32> to vector<8x64xf32>
    %154 = arith.addf %151, %153 : vector<8x64xf32>
    %155 = arith.addf %154, %112 : vector<8x64xf32>
    %156 = arith.addf %155, %61 : vector<8x64xf32>
    %c0_81 = arith.constant 0 : index
    %c0_82 = arith.constant 0 : index
    %157 = vector.load %arg23[%c0_81, %c0_82] : memref<8x64xf32, #tpu.memory_space<vmem>>, vector<8x64xf32>
    tpu.vector_store %arg23[%c0_81, %c0_82], %156 {strides = array<i32>} : memref<8x64xf32, #tpu.memory_space<vmem>>, vector<8x64xf32>,
    return
  }
}

</mosaic_0001>

<llo_original>
// kernel: _lambda_.10
$region0: #{_lambda_.10}
  #allocation0 [shape = 'u32[]', space=smem, size = 0x4, offset = 0x4, fixed_abs, tag = 'smem constant byte address 0x4 - core index']
  #allocation1 [shape = 'u32[72,128]{1,0:T(1,128)}', space=vmem, size = 0x9000, scoped, tag = 'internal scratch']
  %s0 = inlined_call_operand.vmem [shape: f32[2,4,64], index: 0, kind: input, shape index: {}]
  %s1 = inlined_call_operand.vmem [shape: f32[2,4,4], index: 1, kind: output, shape index: {}]
  %s2 = sld [smem:[#allocation0]]
  $region37: #{_lambda_.10} parent=0
    _
  %s4 = ssub.s32 1, %s2
  %s5 = scalar_select 0, %s4, %s2
  loop: start=0, step=1, limit=4
  $region2: #{_lambda_.10} parent=0 // loop_pre_header
    _
  $region3: #{_lambda_.10} parent=0 // loop_header
    %s7 = sphi 0, %s11
    %p8 = scmp.ge.s32.totalorder %s7, 4
    %s17 = sphi 0, %s19
    %s20 = sphi 0, %s17
    %s21 = sphi 0, %s20
    %s37 = sphi 0, %s21
    %s43 = sphi 0, %s45
    %s46 = sphi 0, %s43
    %s47 = sphi 0, %s46
    %s63 = sphi 0, %s47
  $region4: #{_lambda_.10} parent=0 // loop_header_branch
    %10 = sbr.rel (%p8) target = $region8
  $region5: #{_lambda_.10} parent=0 // loop_body
    %s12 = ssub.s32 %s7, 1
    %s13 = ssub.s32 %s7, 2
    %s14 = sadd.s32 %s7, 1
    %s15 = ssub.s32 %s7, %s14
    %p16 = scmp.eq.s32.totalorder %s15, 0
    %s18 = sadd.s32 %s17, 1
    %s19 = scalar_select %p16, %s17, %s18
    %p22 = pneg %p16
    %p23 = scmp.eq.s32.totalorder %s7, 1
    %p24 = por %p22, %p23
    %p25 = scmp.ne.s32.totalorder %s17, %s20
    %p26 = scmp.eq.s32.totalorder %s7, 0
    %p27 = por %p25, %p26
    %p28 = scmp.ne.s32.totalorder %s17, %s20
    %p29 = scmp.eq.s32.totalorder %s12, 1
    %p30 = por %p28, %p29
    %p31 = scmp.ne.s32.totalorder %s20, %s21
    %p32 = scmp.eq.s32.totalorder %s12, 0
    %p33 = por %p31, %p32
    %p34 = scmp.ne.s32.totalorder %s20, %s21
    %p35 = scmp.eq.s32.totalorder %s13, 1
    %p36 = por %p34, %p35
    %p38 = scmp.ne.s32.totalorder %s21, %s37
    %p39 = scmp.eq.s32.totalorder %s13, 0
    %p40 = por %p38, %p39
    %s41 = ssub.s32 %s7, %s14
    %p42 = scmp.eq.s32.totalorder %s41, 0
    %s44 = sadd.s32 %s43, 1
    %s45 = scalar_select %p42, %s43, %s44
    %p48 = pneg %p42
    %p49 = scmp.eq.s32.totalorder %s7, 1
    %p50 = por %p48, %p49
    %p51 = scmp.ne.s32.totalorder %s43, %s46
    %p52 = scmp.eq.s32.totalorder %s7, 0
    %p53 = por %p51, %p52
    %p54 = scmp.ne.s32.totalorder %s43, %s46
    %p55 = scmp.eq.s32.totalorder %s12, 1
    %p56 = por %p54, %p55
    %p57 = scmp.ne.s32.totalorder %s46, %s47
    %p58 = scmp.eq.s32.totalorder %s12, 0
    %p59 = por %p57, %p58
    %p60 = scmp.ne.s32.totalorder %s46, %s47
    %p61 = scmp.eq.s32.totalorder %s13, 1
    %p62 = por %p60, %p61
    %p64 = scmp.ne.s32.totalorder %s47, %s63
    %p65 = scmp.eq.s32.totalorder %s13, 0
    %p66 = por %p64, %p65
    %p67 = scmp.le.s32.totalorder 1, %s7
    %p68 = scmp.lt.s32.totalorder %s7, 3
    %p69 = pnand %p67, %p68
    %p70 = pneg %p69
    // Predicated region
    $region9: #{_lambda_.10} parent=5 // pred_check
      _
    $region10: #{_lambda_.10} parent=5 // pred_check_branch
      %72 = sbr.rel (%p69) target = $region12
    $region11: #{_lambda_.10} parent=5 // pred_region
      %s73 = ssub.s32 %s7, 1
    $region12: #{_lambda_.10} parent=5 // pred_fallthru
      _
    %p74 = scmp.lt.s32.totalorder %s7, 2
    // Predicated region
    $region13: #{_lambda_.10} parent=5 // pred_check
      %p75 = pneg %p74
    $region14: #{_lambda_.10} parent=5 // pred_check_branch
      %77 = sbr.rel (%p75) target = $region16
    $region15: #{_lambda_.10} parent=5 // pred_region
      // Predicated region
      $region17: #{_lambda_.10} parent=15 // pred_check
        %p78 = pneg %p27
      $region18: #{_lambda_.10} parent=15 // pred_check_branch
        %80 = sbr.rel (%p78) target = $region20
      $region19: #{_lambda_.10} parent=15 // pred_region
        %p81 = scmp.lt.s32.totalorder %s7, 1
        %s82 = scalar_select %p81, %s7, 1
        %s83 = smul.addr %s82, 4
        %s84 = scalar_lea.vmem %s0, %s83
      $region20: #{_lambda_.10} parent=15 // pred_fallthru
        _
    $region16: #{_lambda_.10} parent=5 // pred_fallthru
      _
    %p85 = scmp.le.s32.totalorder 1, %s7
    %p86 = scmp.lt.s32.totalorder %s7, 3
    %p87 = pnand %p85, %p86
    %p88 = pneg %p87
    // Predicated region
    $region21: #{_lambda_.10} parent=5 // pred_check
      _
    $region22: #{_lambda_.10} parent=5 // pred_check_branch
      %90 = sbr.rel (%p87) target = $region24
    $region23: #{_lambda_.10} parent=5 // pred_region
      %s91 = ssub.s32 %s7, 1
      %p92 = scmp.lt.s32.totalorder %s12, 1
      %s93 = scalar_select %p92, %s12, 1
      %s94 = smul.addr %s93, 4
      %s95 = scalar_lea.vmem %s0, %s94
      %p96 = pneg %p33
      %p97 = pneg %p30
      %p98 = pneg %p59
      %p99 = pneg %p56
      %p100 = scmp.lt.s32.totalorder %s12, 1
      %s101 = scalar_select %p100, %s12, 1
      %s102 = smul.addr %s101, 4
      %s103 = scalar_lea.vmem %s1, %s102
      %p104 = scmp.lt.s32.totalorder %s12, 1
      %s105 = scalar_select %p104, %s12, 1
      %s106 = smul.addr %s105, 4
      %s107 = scalar_lea.vmem %s0, %s106
      %p108 = scmp.lt.s32.totalorder %s12, 1
      %s109 = scalar_select %p108, %s12, 1
      %s110 = smul.addr %s109, 4
      %s111 = scalar_lea.vmem %s1, %s110
      %v112 = vld [vmem:[%s107] sm:$0xf]
      %vm113 = vcmask 523264
      %v115 = vsel %vm113, %v112, 0
      %117 = vmatpush.xpose.msra.mxu0 0.0
      %118 = vmatpush.xpose.msra.mxu0 0.0
      %119 = vmatpush.xpose.msra.mxu0 0.0
      %120 = vmatpush.xpose.msra.mxu0 0.0
      %121 = vmatpush.xpose.msra.mxu0 0.0
      %122 = vmatpush.xpose.msra.mxu0 0.0
      %123 = vmatpush.xpose.msra.mxu0 0.0
      %124 = vmatpush.xpose.msra.mxu0 0.0
      %125 = vmatpush.xpose.msra.mxu0 0.0
      %126 = vmatpush.xpose.msra.mxu0 0.0
      %127 = vmatpush.xpose.msra.mxu0 0.0
      %128 = vmatpush.xpose.msra.mxu0 0.0
      %129 = vmatpush.xpose.msra.mxu0 0.0
      %130 = vmatpush.xpose.msra.mxu0 0.0
      %131 = vmatpush.xpose.msra.mxu0 0.0
      %132 = vmatpush.xpose.msra.mxu0 %v115
      %133 = vmatmul.f32.gmra.mxu0 %v115
      %v134 = vpop.f32.mrf.mxu0
      %v135 = vadd.f32 0.0, %v134
      %136 = vdwg.mxu0
      %vm137 = vcmask 27648
      %138 = vst.msk [vmem:[%s111] sm:$0xf] %vm137, %v135
      %p139 = scmp.lt.s32.totalorder %s12, 1
      %s140 = scalar_select %p139, %s12, 1
      %s141 = smul.addr %s140, 4
      %s142 = scalar_lea.vmem %s1, %s141
      // Predicated region
      $region25: #{_lambda_.10} parent=23 // pred_check
        %p143 = pneg %p56
      $region26: #{_lambda_.10} parent=23 // pred_check_branch
        %145 = sbr.rel (%p143) target = $region28
      $region27: #{_lambda_.10} parent=23 // pred_region
        _
      $region28: #{_lambda_.10} parent=23 // pred_fallthru
        _
    $region24: #{_lambda_.10} parent=5 // pred_fallthru
      _
    %p146 = scmp.le.s32.totalorder 2, %s7
    // Predicated region
    $region29: #{_lambda_.10} parent=5 // pred_check
      %p147 = pneg %p146
    $region30: #{_lambda_.10} parent=5 // pred_check_branch
      %149 = sbr.rel (%p147) target = $region32
    $region31: #{_lambda_.10} parent=5 // pred_region
      %s150 = ssub.s32 %s7, 2
      // Predicated region
      $region33: #{_lambda_.10} parent=31 // pred_check
        %p151 = pneg %p62
      $region34: #{_lambda_.10} parent=31 // pred_check_branch
        %153 = sbr.rel (%p151) target = $region36
      $region35: #{_lambda_.10} parent=31 // pred_region
        %p154 = scmp.lt.s32.totalorder %s13, 1
        %s155 = scalar_select %p154, %s13, 1
        %s156 = smul.addr %s155, 4
        %s157 = scalar_lea.vmem %s1, %s156
      $region36: #{_lambda_.10} parent=31 // pred_fallthru
        _
    $region32: #{_lambda_.10} parent=5 // pred_fallthru
      _
  $region6: #{_lambda_.10} parent=0 // loop_footer
    %s11 = sadd.s32 1, %s7
  $region7: #{_lambda_.10} parent=0 // loop_footer_branch
    %6 = sbr.rel target = $region3
  $region8: #{_lambda_.10} parent=0 // loop_exit
    _

// kernel: _lambda_.11
$region0: #{_lambda_.11}
  #allocation0 [shape = 'u32[]', space=smem, size = 0x4, offset = 0x4, fixed_abs, tag = 'smem constant byte address 0x4 - core index']
  #allocation1 [shape = 'u32[72,128]{1,0:T(1,128)}', space=vmem, size = 0x9000, scoped, tag = 'internal scratch']
  %s0 = inlined_call_operand.vmem [shape: f32[8,64], index: 0, kind: input, shape index: {}]
  %s1 = inlined_call_operand.vmem [shape: bf16[64,64], index: 1, kind: input, shape index: {}]
  %s2 = inlined_call_operand.vmem [shape: f32[1,64], index: 2, kind: input, shape index: {}]
  %s3 = inlined_call_operand.vmem [shape: f32[1,64], index: 3, kind: input, shape index: {}]
  %s4 = inlined_call_operand.vmem [shape: f32[1,64], index: 4, kind: input, shape index: {}]
  %s5 = inlined_call_operand.vmem [shape: bf16[64,64], index: 5, kind: input, shape index: {}]
  %s6 = inlined_call_operand.vmem [shape: f32[1,64], index: 6, kind: input, shape index: {}]
  %s7 = inlined_call_operand.vmem [shape: f32[8,64], index: 7, kind: output, shape index: {}]
  %s8 = sld [smem:[#allocation0]]
  $region38: #{_lambda_.11} parent=0
    _
  %s10 = ssub.s32 1, %s8
  %s11 = scalar_select 0, %s10, %s8
  // Predicated region
  $region2: #{_lambda_.11} parent=0 // pred_check
    _
  $region3: #{_lambda_.11} parent=0 // pred_check_branch
    %13 = sbr.rel (0) target = $region5
  $region4: #{_lambda_.11} parent=0 // pred_region
    _
  $region5: #{_lambda_.11} parent=0 // pred_fallthru
    _
  // Predicated region
  $region6: #{_lambda_.11} parent=0 // pred_check
    _
  $region7: #{_lambda_.11} parent=0 // pred_check_branch
    %15 = sbr.rel (0) target = $region9
  $region8: #{_lambda_.11} parent=0 // pred_region
    _
  $region9: #{_lambda_.11} parent=0 // pred_fallthru
    _
  // Predicated region
  $region10: #{_lambda_.11} parent=0 // pred_check
    _
  $region11: #{_lambda_.11} parent=0 // pred_check_branch
    %17 = sbr.rel (0) target = $region13
  $region12: #{_lambda_.11} parent=0 // pred_region
    _
  $region13: #{_lambda_.11} parent=0 // pred_fallthru
    _
  // Predicated region
  $region14: #{_lambda_.11} parent=0 // pred_check
    _
  $region15: #{_lambda_.11} parent=0 // pred_check_branch
    %19 = sbr.rel (0) target = $region17
  $region16: #{_lambda_.11} parent=0 // pred_region
    _
  $region17: #{_lambda_.11} parent=0 // pred_fallthru
    _
  // Predicated region
  $region18: #{_lambda_.11} parent=0 // pred_check
    _
  $region19: #{_lambda_.11} parent=0 // pred_check_branch
    %21 = sbr.rel (0) target = $region21
  $region20: #{_lambda_.11} parent=0 // pred_region
    _
  $region21: #{_lambda_.11} parent=0 // pred_fallthru
    _
  // Predicated region
  $region22: #{_lambda_.11} parent=0 // pred_check
    _
  $region23: #{_lambda_.11} parent=0 // pred_check_branch
    %23 = sbr.rel (0) target = $region25
  $region24: #{_lambda_.11} parent=0 // pred_region
    _
  $region25: #{_lambda_.11} parent=0 // pred_fallthru
    _
  // Predicated region
  $region26: #{_lambda_.11} parent=0 // pred_check
    _
  $region27: #{_lambda_.11} parent=0 // pred_check_branch
    %25 = sbr.rel (0) target = $region29
  $region28: #{_lambda_.11} parent=0 // pred_region
    _
  $region29: #{_lambda_.11} parent=0 // pred_fallthru
    _
  %v27 = vld [vmem:[%s0] sm:$0xff]
  %v28 = vld [vmem:[%s1] sm:$0xf]
  %v29 = vld [vmem:[%s1 + $0x4] sm:$0xf]
  %v30 = vld [vmem:[%s1 + $0x8] sm:$0xf]
  %v31 = vld [vmem:[%s1 + $0xc] sm:$0xf]
  %v32 = vld [vmem:[%s1 + $0x10] sm:$0xf]
  %v33 = vld [vmem:[%s1 + $0x14] sm:$0xf]
  %v34 = vld [vmem:[%s1 + $0x18] sm:$0xf]
  %v35 = vld [vmem:[%s1 + $0x1c] sm:$0xf]
  %v36 = vpack.c.bf16 %v27, %v27
  %v37 = vld [vmem:[%s2] sm:$0x1]
  %v39 = vperm.slane %v37, 0
  %v49 = vunpack.c.l.b16 %v28
  %v50 = vunpack.c.l.b16 %v29
  %v51 = vunpack.c.l.b16 %v30
  %v52 = vunpack.c.l.b16 %v31
  %v53 = vunpack.c.l.b16 %v32
  %v54 = vunpack.c.l.b16 %v33
  %v55 = vunpack.c.l.b16 %v34
  %v56 = vunpack.c.l.b16 %v35
  %v57 = vpack.c.b16 %v50, %v49
  %v58 = vpack.c.b16 %v52, %v51
  %v59 = vpack.c.b16 %v54, %v53
  %v60 = vpack.c.b16 %v56, %v55
  %vm65 = vcmask 523264
  %v67 = vsel %vm65, %v36, 0
  %69 = vmatpush.bf16.msra.mxu0 0
  %70 = vmatpush.bf16.msra.mxu0 0
  %71 = vmatpush.bf16.msra.mxu0 0
  %72 = vmatpush.bf16.msra.mxu0 0
  %73 = vmatpush.bf16.msra.mxu0 %v60
  %74 = vmatpush.bf16.msra.mxu0 %v59
  %75 = vmatpush.bf16.msra.mxu0 %v58
  %76 = vmatpush.bf16.msra.mxu0 %v57
  %77 = vmatmul.bf16.gmra.mxu0 %v67
  %v78 = vpop.f32.mrf.mxu0
  %v79 = vadd.f32 %v39, %v78
  %v80 = vpop.f32.mrf.mxu0
  %81 = vdwg.mxu0
  %v82 = vld [vmem:[%s3] sm:$0x1]
  %v83 = vld [vmem:[%s4] sm:$0x1]
  %v84 = vsel %vm65, %v79, 0.0
  %v85 = vrot.slane %v84, 4
  %v86 = vadd.f32 %v84, %v85
  %v87 = vrot.slane %v86, 2
  %v88 = vadd.f32 %v86, %v87
  %v89 = vrot.slane %v88, 1
  %v90 = vadd.f32 %v88, %v89
  %v91 = vrcp.pop 8.0
  %v92 = vmul.f32 8.0, %v91
  %v93 = vsub.f32 1.0, %v92
  %v94 = vmul.f32 %v91, %v93
  %v95 = vadd.f32 %v91, %v94
  %vm96 = vweird.f32 %v91
  %v97 = vsel %vm96, %v91, %v95
  %v98 = vmul.f32 %v90, %v97
  %v99 = vsub.f32 %v79, %v98
  %v100 = vmul.f32 %v99, %v99
  %v101 = vsel %vm65, %v100, 0.0
  %v102 = vrot.slane %v101, 4
  %v103 = vadd.f32 %v101, %v102
  %v104 = vrot.slane %v103, 2
  %v105 = vadd.f32 %v103, %v104
  %v106 = vrot.slane %v105, 1
  %v107 = vadd.f32 %v105, %v106
  %v108 = vmul.f32 %v107, %v97
  %v109 = vadd.f32 %v108, 1e-05
  %v110 = vrsqrt.pop %v109
  %v111 = vmul.f32 %v110, %v109
  %v112 = vmul.f32 %v111, %v110
  %v113 = vmul.f32 0.5, %v112
  %v114 = vsub.f32 1.5, %v113
  %v115 = vmul.f32 %v110, %v114
  %vm116 = vweird.f32 %v109
  %vm117 = vweird.f32 %v110
  %vm118 = vmor %vm116, %vm117
  %v119 = vsel %vm118, %v110, %v115
  %v120 = vmul.f32 %v99, %v119
  %v122 = vperm.slane %v82, 0
  %v124 = vmul.f32 %v120, %v122
  %v126 = vperm.slane %v83, 0
  %v128 = vadd.f32 %v124, %v126
  %v129 = vmul.f32 %v128, 0.5
  %v130 = vmul.f32 %v128, 0.70710677
  %v131 = vmul.f32 %v130, %v130
  %v132 = vmin.f32 16.0, %v131
  %v133 = vmul.f32 %v132, 2.1237322e-06
  %v134 = vadd.f32 %v133, 0.00028619796
  %v135 = vmul.f32 %v132, %v134
  %v136 = vadd.f32 %v135, 0.0036580483
  %v137 = vmul.f32 %v132, %v136
  %v138 = vadd.f32 %v137, 0.05243302
  %v139 = vmul.f32 %v132, %v138
  %v140 = vadd.f32 %v139, 0.18741608
  %v141 = vmul.f32 %v132, %v140
  %v142 = vadd.f32 %v141, 1.1283791
  %v143 = vmul.f32 %v130, %v142
  %v144 = vmul.f32 %v132, 3.8918573e-05
  %v145 = vadd.f32 %v144, 0.001143296
  %v146 = vmul.f32 %v132, %v145
  %v147 = vadd.f32 %v146, 0.014752088
  %v148 = vmul.f32 %v132, %v147
  %v149 = vadd.f32 %v148, 0.112945676
  %v150 = vmul.f32 %v132, %v149
  %v151 = vadd.f32 %v150, 0.4994258
  %v152 = vmul.f32 %v132, %v151
  %v153 = vadd.f32 %v152, 1.0
  %v154 = vrcp.pop %v153
  %v155 = vmul.f32 %v153, %v154
  %v156 = vsub.f32 1.0, %v155
  %v157 = vmul.f32 %v154, %v156
  %v158 = vadd.f32 %v154, %v157
  %vm159 = vweird.f32 %v153
  %vm160 = vweird.f32 %v154
  %vm161 = vmor %vm159, %vm160
  %v162 = vsel %vm161, %v154, %v158
  %v163 = vand.u32 2147483647, %v153
  %vm164 = vcmp.eq.f32.partialorder %v163, 8.507059e+37
  %v165 = vand.u32 %v153, 2147483648
  %v166 = vor.u32 1.1754944e-38, %v165
  %v167 = vsel %vm164, %v166, %v162
  %v168 = vmul.f32 %v143, %v167
  %v169 = vmin.f32 %v168, 1.0
  %v170 = vmax.f32 %v169, -1.0
  %v171 = vadd.f32 %v170, 1.0
  %v172 = vmul.f32 %v129, %v171
  %v173 = vld [vmem:[%s5] sm:$0xf]
  %v174 = vld [vmem:[%s5 + $0x4] sm:$0xf]
  %v175 = vld [vmem:[%s5 + $0x8] sm:$0xf]
  %v176 = vld [vmem:[%s5 + $0xc] sm:$0xf]
  %v177 = vld [vmem:[%s5 + $0x10] sm:$0xf]
  %v178 = vld [vmem:[%s5 + $0x14] sm:$0xf]
  %v179 = vld [vmem:[%s5 + $0x18] sm:$0xf]
  %v180 = vld [vmem:[%s5 + $0x1c] sm:$0xf]
  %v181 = vpack.c.bf16 %v172, %v172
  %v182 = vld [vmem:[%s6] sm:$0x1]
  %v184 = vperm.slane %v182, 0
  %v194 = vunpack.c.l.b16 %v173
  %v195 = vunpack.c.l.b16 %v174
  %v196 = vunpack.c.l.b16 %v175
  %v197 = vunpack.c.l.b16 %v176
  %v198 = vunpack.c.l.b16 %v177
  %v199 = vunpack.c.l.b16 %v178
  %v200 = vunpack.c.l.b16 %v179
  %v201 = vunpack.c.l.b16 %v180
  %v202 = vpack.c.b16 %v195, %v194
  %v203 = vpack.c.b16 %v197, %v196
  %v204 = vpack.c.b16 %v199, %v198
  %v205 = vpack.c.b16 %v201, %v200
  %v211 = vsel %vm65, %v181, 0
  %213 = vmatpush.bf16.msra.mxu0 0
  %214 = vmatpush.bf16.msra.mxu0 0
  %215 = vmatpush.bf16.msra.mxu0 0
  %216 = vmatpush.bf16.msra.mxu0 0
  %217 = vmatpush.bf16.msra.mxu0 %v205
  %218 = vmatpush.bf16.msra.mxu0 %v204
  %219 = vmatpush.bf16.msra.mxu0 %v203
  %220 = vmatpush.bf16.msra.mxu0 %v202
  %221 = vmatmul.bf16.gmra.mxu0 %v211
  %v222 = vpop.f32.mrf.mxu0
  %v223 = vadd.f32 %v184, %v222
  %v224 = vpop.f32.mrf.mxu0
  %225 = vdwg.mxu0
  %v226 = vadd.f32 %v223, %v27
  %227 = vst.msk [vmem:[%s7] sm:$0xff] %vm65, %v226
  // Predicated region
  $region30: #{_lambda_.11} parent=0 // pred_check
    _
  $region31: #{_lambda_.11} parent=0 // pred_check_branch
    %229 = sbr.rel (0) target = $region33
  $region32: #{_lambda_.11} parent=0 // pred_region
    _
  $region33: #{_lambda_.11} parent=0 // pred_fallthru
    _
  // Predicated region
  $region34: #{_lambda_.11} parent=0 // pred_check
    _
  $region35: #{_lambda_.11} parent=0 // pred_check_branch
    %231 = sbr.rel (0) target = $region37
  $region36: #{_lambda_.11} parent=0 // pred_region
    _
  $region37: #{_lambda_.11} parent=0 // pred_fallthru
    _

// kernel: _lambda_.12
$region0: #{_lambda_.12}
  #allocation0 [shape = 'u32[]', space=smem, size = 0x4, offset = 0x4, fixed_abs, tag = 'smem constant byte address 0x4 - core index']
  #allocation1 [shape = 'u32[72,128]{1,0:T(1,128)}', space=vmem, size = 0x9000, scoped, tag = 'internal scratch']
  %s0 = inlined_call_operand.vmem [shape: f32[2,4,64], index: 0, kind: input, shape index: {}]
  %s1 = inlined_call_operand.vmem [shape: s32[2,4,2], index: 1, kind: input, shape index: {}]
  %s2 = inlined_call_operand.vmem [shape: f32[2,4,64], index: 2, kind: output, shape index: {}]
  %s3 = sld [smem:[#allocation0]]
  $region41: #{_lambda_.12} parent=0
    _
  %s5 = ssub.s32 1, %s3
  %s6 = scalar_select 0, %s5, %s3
  loop: start=0, step=1, limit=4
  $region2: #{_lambda_.12} parent=0 // loop_pre_header
    _
  $region3: #{_lambda_.12} parent=0 // loop_header
    %s8 = sphi 0, %s12
    %p9 = scmp.ge.s32.totalorder %s8, 4
    %s18 = sphi 0, %s20
    %s21 = sphi 0, %s18
    %s22 = sphi 0, %s21
    %s38 = sphi 0, %s22
    %s44 = sphi 0, %s46
    %s47 = sphi 0, %s44
    %s48 = sphi 0, %s47
    %s64 = sphi 0, %s48
    %s70 = sphi 0, %s72
    %s73 = sphi 0, %s70
    %s74 = sphi 0, %s73
    %s90 = sphi 0, %s74
  $region4: #{_lambda_.12} parent=0 // loop_header_branch
    %11 = sbr.rel (%p9) target = $region8
  $region5: #{_lambda_.12} parent=0 // loop_body
    %s13 = ssub.s32 %s8, 1
    %s14 = ssub.s32 %s8, 2
    %s15 = sadd.s32 %s8, 1
    %s16 = ssub.s32 %s8, %s15
    %p17 = scmp.eq.s32.totalorder %s16, 0
    %s19 = sadd.s32 %s18, 1
    %s20 = scalar_select %p17, %s18, %s19
    %p23 = pneg %p17
    %p24 = scmp.eq.s32.totalorder %s8, 1
    %p25 = por %p23, %p24
    %p26 = scmp.ne.s32.totalorder %s18, %s21
    %p27 = scmp.eq.s32.totalorder %s8, 0
    %p28 = por %p26, %p27
    %p29 = scmp.ne.s32.totalorder %s18, %s21
    %p30 = scmp.eq.s32.totalorder %s13, 1
    %p31 = por %p29, %p30
    %p32 = scmp.ne.s32.totalorder %s21, %s22
    %p33 = scmp.eq.s32.totalorder %s13, 0
    %p34 = por %p32, %p33
    %p35 = scmp.ne.s32.totalorder %s21, %s22
    %p36 = scmp.eq.s32.totalorder %s14, 1
    %p37 = por %p35, %p36
    %p39 = scmp.ne.s32.totalorder %s22, %s38
    %p40 = scmp.eq.s32.totalorder %s14, 0
    %p41 = por %p39, %p40
    %s42 = ssub.s32 %s8, %s15
    %p43 = scmp.eq.s32.totalorder %s42, 0
    %s45 = sadd.s32 %s44, 1
    %s46 = scalar_select %p43, %s44, %s45
    %p49 = pneg %p43
    %p50 = scmp.eq.s32.totalorder %s8, 1
    %p51 = por %p49, %p50
    %p52 = scmp.ne.s32.totalorder %s44, %s47
    %p53 = scmp.eq.s32.totalorder %s8, 0
    %p54 = por %p52, %p53
    %p55 = scmp.ne.s32.totalorder %s44, %s47
    %p56 = scmp.eq.s32.totalorder %s13, 1
    %p57 = por %p55, %p56
    %p58 = scmp.ne.s32.totalorder %s47, %s48
    %p59 = scmp.eq.s32.totalorder %s13, 0
    %p60 = por %p58, %p59
    %p61 = scmp.ne.s32.totalorder %s47, %s48
    %p62 = scmp.eq.s32.totalorder %s14, 1
    %p63 = por %p61, %p62
    %p65 = scmp.ne.s32.totalorder %s48, %s64
    %p66 = scmp.eq.s32.totalorder %s14, 0
    %p67 = por %p65, %p66
    %s68 = ssub.s32 %s8, %s15
    %p69 = scmp.eq.s32.totalorder %s68, 0
    %s71 = sadd.s32 %s70, 1
    %s72 = scalar_select %p69, %s70, %s71
    %p75 = pneg %p69
    %p76 = scmp.eq.s32.totalorder %s8, 1
    %p77 = por %p75, %p76
    %p78 = scmp.ne.s32.totalorder %s70, %s73
    %p79 = scmp.eq.s32.totalorder %s8, 0
    %p80 = por %p78, %p79
    %p81 = scmp.ne.s32.totalorder %s70, %s73
    %p82 = scmp.eq.s32.totalorder %s13, 1
    %p83 = por %p81, %p82
    %p84 = scmp.ne.s32.totalorder %s73, %s74
    %p85 = scmp.eq.s32.totalorder %s13, 0
    %p86 = por %p84, %p85
    %p87 = scmp.ne.s32.totalorder %s73, %s74
    %p88 = scmp.eq.s32.totalorder %s14, 1
    %p89 = por %p87, %p88
    %p91 = scmp.ne.s32.totalorder %s74, %s90
    %p92 = scmp.eq.s32.totalorder %s14, 0
    %p93 = por %p91, %p92
    %p94 = scmp.le.s32.totalorder 1, %s8
    %p95 = scmp.lt.s32.totalorder %s8, 3
    %p96 = pnand %p94, %p95
    %p97 = pneg %p96
    // Predicated region
    $region9: #{_lambda_.12} parent=5 // pred_check
      _
    $region10: #{_lambda_.12} parent=5 // pred_check_branch
      %99 = sbr.rel (%p96) target = $region12
    $region11: #{_lambda_.12} parent=5 // pred_region
      %s100 = ssub.s32 %s8, 1
    $region12: #{_lambda_.12} parent=5 // pred_fallthru
      _
    %p101 = scmp.lt.s32.totalorder %s8, 2
    // Predicated region
    $region13: #{_lambda_.12} parent=5 // pred_check
      %p102 = pneg %p101
    $region14: #{_lambda_.12} parent=5 // pred_check_branch
      %104 = sbr.rel (%p102) target = $region16
    $region15: #{_lambda_.12} parent=5 // pred_region
      // Predicated region
      $region17: #{_lambda_.12} parent=15 // pred_check
        %p105 = pneg %p28
      $region18: #{_lambda_.12} parent=15 // pred_check_branch
        %107 = sbr.rel (%p105) target = $region20
      $region19: #{_lambda_.12} parent=15 // pred_region
        %p108 = scmp.lt.s32.totalorder %s8, 1
        %s109 = scalar_select %p108, %s8, 1
        %s110 = smul.addr %s109, 4
        %s111 = scalar_lea.vmem %s0, %s110
      $region20: #{_lambda_.12} parent=15 // pred_fallthru
        _
      // Predicated region
      $region21: #{_lambda_.12} parent=15 // pred_check
        %p112 = pneg %p54
      $region22: #{_lambda_.12} parent=15 // pred_check_branch
        %114 = sbr.rel (%p112) target = $region24
      $region23: #{_lambda_.12} parent=15 // pred_region
        %p115 = scmp.lt.s32.totalorder %s8, 1
        %s116 = scalar_select %p115, %s8, 1
        %s117 = smul.addr %s116, 4
        %s118 = scalar_lea.vmem %s1, %s117
      $region24: #{_lambda_.12} parent=15 // pred_fallthru
        _
    $region16: #{_lambda_.12} parent=5 // pred_fallthru
      _
    %p119 = scmp.le.s32.totalorder 1, %s8
    %p120 = scmp.lt.s32.totalorder %s8, 3
    %p121 = pnand %p119, %p120
    %p122 = pneg %p121
    // Predicated region
    $region25: #{_lambda_.12} parent=5 // pred_check
      _
    $region26: #{_lambda_.12} parent=5 // pred_check_branch
      %124 = sbr.rel (%p121) target = $region28
    $region27: #{_lambda_.12} parent=5 // pred_region
      %s125 = ssub.s32 %s8, 1
      %p126 = scmp.lt.s32.totalorder %s13, 1
      %s127 = scalar_select %p126, %s13, 1
      %s128 = smul.addr %s127, 4
      %s129 = scalar_lea.vmem %s0, %s128
      %p130 = pneg %p34
      %p131 = pneg %p31
      %p132 = scmp.lt.s32.totalorder %s13, 1
      %s133 = scalar_select %p132, %s13, 1
      %s134 = smul.addr %s133, 4
      %s135 = scalar_lea.vmem %s1, %s134
      %p136 = pneg %p60
      %p137 = pneg %p57
      %p138 = pneg %p86
      %p139 = pneg %p83
      %p140 = scmp.lt.s32.totalorder %s13, 1
      %s141 = scalar_select %p140, %s13, 1
      %s142 = smul.addr %s141, 4
      %s143 = scalar_lea.vmem %s2, %s142
      %p144 = scmp.lt.s32.totalorder %s13, 1
      %s145 = scalar_select %p144, %s13, 1
      %s146 = smul.addr %s145, 4
      %s147 = scalar_lea.vmem %s0, %s146
      %p148 = scmp.lt.s32.totalorder %s13, 1
      %s149 = scalar_select %p148, %s13, 1
      %s150 = smul.addr %s149, 4
      %s151 = scalar_lea.vmem %s1, %s150
      %p152 = scmp.lt.s32.totalorder %s13, 1
      %s153 = scalar_select %p152, %s13, 1
      %s154 = smul.addr %s153, 4
      %s155 = scalar_lea.vmem %s2, %s154
      %v156 = vlaneseq
      %v157 = vand.u32 %v156, 127
      %v158 = vld [vmem:[%s147] sm:$0xf]
      %v159 = vld [vmem:[%s151] sm:$0xf]
      %160 = vset.pattern.permute.xlu0 0
      %161 = vperm.xlu0 %160, %v159
      %v162 = vpop.permute.xlu0 %161
      %vm163 = vcmp.eq.s32.totalorder %v162, %v157
      %v164 = vsel %vm163, 1, 0
      %v165 = vcvt.s32.f32 %v164
      %vm166 = vcmask 31744
      %v168 = vsel %vm166, %v165, 0
      %vm170 = vcmask 1043456
      %v172 = vsel %vm170, %v158, 0
      %174 = vmatpush.msra.mxu0 0.0
      %175 = vmatpush.msra.mxu0 0.0
      %176 = vmatpush.msra.mxu0 0.0
      %177 = vmatpush.msra.mxu0 0.0
      %178 = vmatpush.msra.mxu0 0.0
      %179 = vmatpush.msra.mxu0 0.0
      %180 = vmatpush.msra.mxu0 0.0
      %181 = vmatpush.msra.mxu0 0.0
      %182 = vmatpush.msra.mxu0 0.0
      %183 = vmatpush.msra.mxu0 0.0
      %184 = vmatpush.msra.mxu0 0.0
      %185 = vmatpush.msra.mxu0 0.0
      %186 = vmatpush.msra.mxu0 0.0
      %187 = vmatpush.msra.mxu0 0.0
      %188 = vmatpush.msra.mxu0 0.0
      %189 = vmatpush.msra.mxu0 %v172
      %190 = vmatmul.f32.gmra.mxu0 %v168
      %v191 = vpop.f32.mrf.mxu0
      %v192 = vadd.f32 0.0, %v191
      %193 = vdwg.mxu0
      %194 = vset.pattern.permute.xlu0 1
      %195 = vperm.xlu0 %194, %v159
      %v196 = vpop.permute.xlu0 %195
      %vm197 = vcmp.eq.s32.totalorder %v196, %v157
      %v198 = vsel %vm197, 1, 0
      %v199 = vcvt.s32.f32 %v198
      %v201 = vsel %vm166, %v199, 0
      %203 = vmatpush.msra.mxu0 0.0
      %204 = vmatpush.msra.mxu0 0.0
      %205 = vmatpush.msra.mxu0 0.0
      %206 = vmatpush.msra.mxu0 0.0
      %207 = vmatpush.msra.mxu0 0.0
      %208 = vmatpush.msra.mxu0 0.0
      %209 = vmatpush.msra.mxu0 0.0
      %210 = vmatpush.msra.mxu0 0.0
      %211 = vmatpush.msra.mxu0 0.0
      %212 = vmatpush.msra.mxu0 0.0
      %213 = vmatpush.msra.mxu0 0.0
      %214 = vmatpush.msra.mxu0 0.0
      %215 = vmatpush.msra.mxu0 0.0
      %216 = vmatpush.msra.mxu0 0.0
      %217 = vmatpush.msra.mxu0 0.0
      %218 = vmatpush.msra.mxu0 %v172
      %219 = vmatmul.f32.gmra.mxu0 %v201
      %v220 = vpop.f32.mrf.mxu0
      %v221 = vadd.f32 0.0, %v220
      %222 = vdwg.mxu0
      %v223 = vmax.f32 %v192, %v221
      %v224 = vsub.f32 %v223, %v158
      %vm225 = vcmask 519168
      %226 = vst.msk [vmem:[%s155] sm:$0xf] %vm225, %v224
      %p227 = scmp.lt.s32.totalorder %s13, 1
      %s228 = scalar_select %p227, %s13, 1
      %s229 = smul.addr %s228, 4
      %s230 = scalar_lea.vmem %s2, %s229
      // Predicated region
      $region29: #{_lambda_.12} parent=27 // pred_check
        %p231 = pneg %p83
      $region30: #{_lambda_.12} parent=27 // pred_check_branch
        %233 = sbr.rel (%p231) target = $region32
      $region31: #{_lambda_.12} parent=27 // pred_region
        _
      $region32: #{_lambda_.12} parent=27 // pred_fallthru
        _
    $region28: #{_lambda_.12} parent=5 // pred_fallthru
      _
    %p234 = scmp.le.s32.totalorder 2, %s8
    // Predicated region
    $region33: #{_lambda_.12} parent=5 // pred_check
      %p235 = pneg %p234
    $region34: #{_lambda_.12} parent=5 // pred_check_branch
      %237 = sbr.rel (%p235) target = $region36
    $region35: #{_lambda_.12} parent=5 // pred_region
      %s238 = ssub.s32 %s8, 2
      // Predicated region
      $region37: #{_lambda_.12} parent=35 // pred_check
        %p239 = pneg %p89
      $region38: #{_lambda_.12} parent=35 // pred_check_branch
        %241 = sbr.rel (%p239) target = $region40
      $region39: #{_lambda_.12} parent=35 // pred_region
        %p242 = scmp.lt.s32.totalorder %s14, 1
        %s243 = scalar_select %p242, %s14, 1
        %s244 = smul.addr %s243, 4
        %s245 = scalar_lea.vmem %s2, %s244
      $region40: #{_lambda_.12} parent=35 // pred_fallthru
        _
    $region36: #{_lambda_.12} parent=5 // pred_fallthru
      _
  $region6: #{_lambda_.12} parent=0 // loop_footer
    %s12 = sadd.s32 1, %s8
  $region7: #{_lambda_.12} parent=0 // loop_footer_branch
    %7 = sbr.rel target = $region3
  $region8: #{_lambda_.12} parent=0 // loop_exit
    _

// kernel: _lambda_.9
$region0: #{_lambda_.9}
  #allocation0 [shape = 'u32[]', space=smem, size = 0x4, offset = 0x4, fixed_abs, tag = 'smem constant byte address 0x4 - core index']
  #allocation1 [shape = 'u32[72,128]{1,0:T(1,128)}', space=vmem, size = 0x9000, scoped, tag = 'internal scratch']
  %s0 = inlined_call_operand.vmem [shape: f32[8,768], index: 0, kind: input, shape index: {}]
  %s1 = inlined_call_operand.vmem [shape: bf16[768,32], index: 1, kind: input, shape index: {}]
  %s2 = inlined_call_operand.hbm [shape: f32[1,32], index: 2, kind: input, shape index: {}]
  %s3 = inlined_call_operand.vmem [shape: f32[1,32], index: 3, kind: input, shape index: {}, may-alias: {3,19}]
  %s4 = inlined_call_operand.vmem [shape: f32[1,32], index: 4, kind: input, shape index: {}, may-alias: {4,20}]
  %s5 = inlined_call_operand.vmem [shape: bf16[32,16], index: 5, kind: input, shape index: {}]
  %s6 = inlined_call_operand.hbm [shape: f32[1,16], index: 6, kind: input, shape index: {}]
  %s7 = inlined_call_operand.vmem [shape: f32[1,16], index: 7, kind: input, shape index: {}, may-alias: {7,15}]
  %s8 = inlined_call_operand.vmem [shape: f32[1,16], index: 8, kind: input, shape index: {}, may-alias: {8,16}]
  %s9 = inlined_call_operand.vmem [shape: bf16[16,8], index: 9, kind: input, shape index: {}]
  %s10 = inlined_call_operand.hbm [shape: f32[1,8], index: 10, kind: input, shape index: {}]
  %s11 = inlined_call_operand.vmem [shape: f32[1,8], index: 11, kind: input, shape index: {}]
  %s12 = inlined_call_operand.vmem [shape: f32[1,8], index: 12, kind: input, shape index: {}]
  %s13 = inlined_call_operand.vmem [shape: bf16[8,16], index: 13, kind: input, shape index: {}]
  %s14 = inlined_call_operand.hbm [shape: f32[1,16], index: 14, kind: input, shape index: {}]
  %s15 = inlined_call_operand.vmem [shape: f32[1,16], index: 15, kind: input, shape index: {}, may-alias: {7,15}]
  %s16 = inlined_call_operand.vmem [shape: f32[1,16], index: 16, kind: input, shape index: {}, may-alias: {8,16}]
  %s17 = inlined_call_operand.vmem [shape: bf16[16,32], index: 17, kind: input, shape index: {}]
  %s18 = inlined_call_operand.hbm [shape: f32[1,32], index: 18, kind: input, shape index: {}]
  %s19 = inlined_call_operand.vmem [shape: f32[1,32], index: 19, kind: input, shape index: {}, may-alias: {3,19}]
  %s20 = inlined_call_operand.vmem [shape: f32[1,32], index: 20, kind: input, shape index: {}, may-alias: {4,20}]
  %s21 = inlined_call_operand.vmem [shape: bf16[32,64], index: 21, kind: input, shape index: {}]
  %s22 = inlined_call_operand.hbm [shape: f32[1,64], index: 22, kind: input, shape index: {}]
  %s23 = inlined_call_operand.vmem [shape: f32[1,64], index: 23, kind: input, shape index: {}]
  %s24 = inlined_call_operand.vmem [shape: f32[1,64], index: 24, kind: input, shape index: {}]
  %s25 = inlined_call_operand.vmem [shape: f32[4,64], index: 25, kind: input, shape index: {}]
  %s26 = inlined_call_operand.vmem [shape: f32[8,64], index: 26, kind: output, shape index: {}]
  %s27 = sld [smem:[#allocation0]]
  $region138: #{_lambda_.9} parent=0
    _
  %s29 = ssub.s32 1, %s27
  %s30 = scalar_select 0, %s29, %s27
  $region1: #{_lambda_.9} parent=0
    #allocation2 [shape = 'u8[512]{0}', space=vmem, size = 0x400, scoped, tag = 'input window, operand 2, single buffered']
    #allocation3 [shape = 's32[1]{0}', space=sflag, size = 0x4, scoped, tag = 'scoped memory for _lambda_.9']
    #allocation4 [shape = 'u8[512]{0}', space=vmem, size = 0x400, scoped, tag = 'input window, operand 6, single buffered']
    #allocation5 [shape = 's32[1]{0}', space=sflag, size = 0x4, scoped, tag = 'scoped memory for _lambda_.9']
    #allocation6 [shape = 'u8[512]{0}', space=vmem, size = 0x400, scoped, tag = 'input window, operand 10, single buffered']
    #allocation7 [shape = 'u8[512]{0}', space=vmem, size = 0x400, scoped, tag = 'input window, operand 14, single buffered']
    #allocation8 [shape = 's32[1]{0}', space=sflag, size = 0x4, scoped, tag = 'scoped memory for _lambda_.9']
    #allocation9 [shape = 'u8[512]{0}', space=vmem, size = 0x400, scoped, tag = 'input window, operand 18, single buffered']
    #allocation10 [shape = 'u8[512]{0}', space=vmem, size = 0x400, scoped, tag = 'input window, operand 22, single buffered']
    #allocation11 [shape = 's32[1]{0}', space=sflag, size = 0x4, scoped, tag = 'scoped memory for _lambda_.9']
    %31 = vsyncpa [#allocation3], 0
    %32 = vsyncpa [#allocation5], 0
    %33 = vsyncpa [#allocation8], 0
    %34 = vsyncpa [#allocation11], 0
    // Predicated region
    $region2: #{_lambda_.9} parent=1 // pred_check
      _
    $region3: #{_lambda_.9} parent=1 // pred_check_branch
      %36 = sbr.rel (0) target = $region5
    $region4: #{_lambda_.9} parent=1 // pred_region
      _
    $region5: #{_lambda_.9} parent=1 // pred_fallthru
      _
    // Predicated region
    $region6: #{_lambda_.9} parent=1 // pred_check
      _
    $region7: #{_lambda_.9} parent=1 // pred_check_branch
      %38 = sbr.rel (0) target = $region9
    $region8: #{_lambda_.9} parent=1 // pred_region
      _
    $region9: #{_lambda_.9} parent=1 // pred_fallthru
      _
    // Predicated region
    $region10: #{_lambda_.9} parent=1 // pred_check
      _
    $region11: #{_lambda_.9} parent=1 // pred_check_branch
      %40 = sbr.rel (0) target = $region13
    $region12: #{_lambda_.9} parent=1 // pred_region
      %42 = vsyncadd [#allocation3], 0
      %s44 = sshll.u32 %s2, 4
      %s45 = int_to_ptr.hbm [resolvable:$true] %s44
      %s46 = sshll.u32 [#allocation2], 4
      %s47 = int_to_ptr.vmem [resolvable:$true] %s46
      %49 = dma.hbm_to_vmem [thread:$0]  %s45, 16, %s47, [#allocation3]
    $region13: #{_lambda_.9} parent=1 // pred_fallthru
      _
    // Predicated region
    $region14: #{_lambda_.9} parent=1 // pred_check
      _
    $region15: #{_lambda_.9} parent=1 // pred_check_branch
      %51 = sbr.rel (0) target = $region17
    $region16: #{_lambda_.9} parent=1 // pred_region
      _
    $region17: #{_lambda_.9} parent=1 // pred_fallthru
      _
    // Predicated region
    $region18: #{_lambda_.9} parent=1 // pred_check
      _
    $region19: #{_lambda_.9} parent=1 // pred_check_branch
      %53 = sbr.rel (0) target = $region21
    $region20: #{_lambda_.9} parent=1 // pred_region
      _
    $region21: #{_lambda_.9} parent=1 // pred_fallthru
      _
    // Predicated region
    $region22: #{_lambda_.9} parent=1 // pred_check
      _
    $region23: #{_lambda_.9} parent=1 // pred_check_branch
      %55 = sbr.rel (0) target = $region25
    $region24: #{_lambda_.9} parent=1 // pred_region
      _
    $region25: #{_lambda_.9} parent=1 // pred_fallthru
      _
    // Predicated region
    $region26: #{_lambda_.9} parent=1 // pred_check
      _
    $region27: #{_lambda_.9} parent=1 // pred_check_branch
      %57 = sbr.rel (0) target = $region29
    $region28: #{_lambda_.9} parent=1 // pred_region
      %59 = vsyncadd [#allocation5], 0
      %s61 = sshll.u32 %s6, 4
      %s62 = int_to_ptr.hbm [resolvable:$true] %s61
      %s63 = sshll.u32 [#allocation4], 4
      %s64 = int_to_ptr.vmem [resolvable:$true] %s63
      %66 = dma.hbm_to_vmem [thread:$0]  %s62, 16, %s64, [#allocation5]
    $region29: #{_lambda_.9} parent=1 // pred_fallthru
      _
    // Predicated region
    $region30: #{_lambda_.9} parent=1 // pred_check
      _
    $region31: #{_lambda_.9} parent=1 // pred_check_branch
      %68 = sbr.rel (0) target = $region33
    $region32: #{_lambda_.9} parent=1 // pred_region
      _
    $region33: #{_lambda_.9} parent=1 // pred_fallthru
      _
    // Predicated region
    $region34: #{_lambda_.9} parent=1 // pred_check
      _
    $region35: #{_lambda_.9} parent=1 // pred_check_branch
      %70 = sbr.rel (0) target = $region37
    $region36: #{_lambda_.9} parent=1 // pred_region
      _
    $region37: #{_lambda_.9} parent=1 // pred_fallthru
      _
    // Predicated region
    $region38: #{_lambda_.9} parent=1 // pred_check
      _
    $region39: #{_lambda_.9} parent=1 // pred_check_branch
      %72 = sbr.rel (0) target = $region41
    $region40: #{_lambda_.9} parent=1 // pred_region
      _
    $region41: #{_lambda_.9} parent=1 // pred_fallthru
      _
    // Predicated region
    $region42: #{_lambda_.9} parent=1 // pred_check
      _
    $region43: #{_lambda_.9} parent=1 // pred_check_branch
      %74 = sbr.rel (0) target = $region45
    $region44: #{_lambda_.9} parent=1 // pred_region
      %76 = vsyncadd [#allocation5], 0
      %s78 = sshll.u32 %s10, 4
      %s79 = int_to_ptr.hbm [resolvable:$true] %s78
      %s80 = sshll.u32 [#allocation6], 4
      %s81 = int_to_ptr.vmem [resolvable:$true] %s80
      %83 = dma.hbm_to_vmem [thread:$0]  %s79, 16, %s81, [#allocation5]
    $region45: #{_lambda_.9} parent=1 // pred_fallthru
      _
    // Predicated region
    $region46: #{_lambda_.9} parent=1 // pred_check
      _
    $region47: #{_lambda_.9} parent=1 // pred_check_branch
      %85 = sbr.rel (0) target = $region49
    $region48: #{_lambda_.9} parent=1 // pred_region
      _
    $region49: #{_lambda_.9} parent=1 // pred_fallthru
      _
    // Predicated region
    $region50: #{_lambda_.9} parent=1 // pred_check
      _
    $region51: #{_lambda_.9} parent=1 // pred_check_branch
      %87 = sbr.rel (0) target = $region53
    $region52: #{_lambda_.9} parent=1 // pred_region
      _
    $region53: #{_lambda_.9} parent=1 // pred_fallthru
      _
    // Predicated region
    $region54: #{_lambda_.9} parent=1 // pred_check
      _
    $region55: #{_lambda_.9} parent=1 // pred_check_branch
      %89 = sbr.rel (0) target = $region57
    $region56: #{_lambda_.9} parent=1 // pred_region
      _
    $region57: #{_lambda_.9} parent=1 // pred_fallthru
      _
    // Predicated region
    $region58: #{_lambda_.9} parent=1 // pred_check
      _
    $region59: #{_lambda_.9} parent=1 // pred_check_branch
      %91 = sbr.rel (0) target = $region61
    $region60: #{_lambda_.9} parent=1 // pred_region
      %93 = vsyncadd [#allocation8], 0
      %s95 = sshll.u32 %s14, 4
      %s96 = int_to_ptr.hbm [resolvable:$true] %s95
      %s97 = sshll.u32 [#allocation7], 4
      %s98 = int_to_ptr.vmem [resolvable:$true] %s97
      %100 = dma.hbm_to_vmem [thread:$0]  %s96, 16, %s98, [#allocation8]
    $region61: #{_lambda_.9} parent=1 // pred_fallthru
      _
    // Predicated region
    $region62: #{_lambda_.9} parent=1 // pred_check
      _
    $region63: #{_lambda_.9} parent=1 // pred_check_branch
      %102 = sbr.rel (0) target = $region65
    $region64: #{_lambda_.9} parent=1 // pred_region
      _
    $region65: #{_lambda_.9} parent=1 // pred_fallthru
      _
    // Predicated region
    $region66: #{_lambda_.9} parent=1 // pred_check
      _
    $region67: #{_lambda_.9} parent=1 // pred_check_branch
      %104 = sbr.rel (0) target = $region69
    $region68: #{_lambda_.9} parent=1 // pred_region
      _
    $region69: #{_lambda_.9} parent=1 // pred_fallthru
      _
    // Predicated region
    $region70: #{_lambda_.9} parent=1 // pred_check
      _
    $region71: #{_lambda_.9} parent=1 // pred_check_branch
      %106 = sbr.rel (0) target = $region73
    $region72: #{_lambda_.9} parent=1 // pred_region
      _
    $region73: #{_lambda_.9} parent=1 // pred_fallthru
      _
    // Predicated region
    $region74: #{_lambda_.9} parent=1 // pred_check
      _
    $region75: #{_lambda_.9} parent=1 // pred_check_branch
      %108 = sbr.rel (0) target = $region77
    $region76: #{_lambda_.9} parent=1 // pred_region
      %110 = vsyncadd [#allocation8], 0
      %s112 = sshll.u32 %s18, 4
      %s113 = int_to_ptr.hbm [resolvable:$true] %s112
      %s114 = sshll.u32 [#allocation9], 4
      %s115 = int_to_ptr.vmem [resolvable:$true] %s114
      %117 = dma.hbm_to_vmem [thread:$0]  %s113, 16, %s115, [#allocation8]
    $region77: #{_lambda_.9} parent=1 // pred_fallthru
      _
    // Predicated region
    $region78: #{_lambda_.9} parent=1 // pred_check
      _
    $region79: #{_lambda_.9} parent=1 // pred_check_branch
      %119 = sbr.rel (0) target = $region81
    $region80: #{_lambda_.9} parent=1 // pred_region
      _
    $region81: #{_lambda_.9} parent=1 // pred_fallthru
      _
    // Predicated region
    $region82: #{_lambda_.9} parent=1 // pred_check
      _
    $region83: #{_lambda_.9} parent=1 // pred_check_branch
      %121 = sbr.rel (0) target = $region85
    $region84: #{_lambda_.9} parent=1 // pred_region
      _
    $region85: #{_lambda_.9} parent=1 // pred_fallthru
      _
    // Predicated region
    $region86: #{_lambda_.9} parent=1 // pred_check
      _
    $region87: #{_lambda_.9} parent=1 // pred_check_branch
      %123 = sbr.rel (0) target = $region89
    $region88: #{_lambda_.9} parent=1 // pred_region
      _
    $region89: #{_lambda_.9} parent=1 // pred_fallthru
      _
    // Predicated region
    $region90: #{_lambda_.9} parent=1 // pred_check
      _
    $region91: #{_lambda_.9} parent=1 // pred_check_branch
      %125 = sbr.rel (0) target = $region93
    $region92: #{_lambda_.9} parent=1 // pred_region
      %127 = vsyncadd [#allocation11], 0
      %s129 = sshll.u32 %s22, 4
      %s130 = int_to_ptr.hbm [resolvable:$true] %s129
      %s131 = sshll.u32 [#allocation10], 4
      %s132 = int_to_ptr.vmem [resolvable:$true] %s131
      %134 = dma.hbm_to_vmem [thread:$0]  %s130, 16, %s132, [#allocation11]
    $region93: #{_lambda_.9} parent=1 // pred_fallthru
      _
    // Predicated region
    $region94: #{_lambda_.9} parent=1 // pred_check
      _
    $region95: #{_lambda_.9} parent=1 // pred_check_branch
      %136 = sbr.rel (0) target = $region97
    $region96: #{_lambda_.9} parent=1 // pred_region
      _
    $region97: #{_lambda_.9} parent=1 // pred_fallthru
      _
    // Predicated region
    $region98: #{_lambda_.9} parent=1 // pred_check
      _
    $region99: #{_lambda_.9} parent=1 // pred_check_branch
      %138 = sbr.rel (0) target = $region101
    $region100: #{_lambda_.9} parent=1 // pred_region
      _
    $region101: #{_lambda_.9} parent=1 // pred_fallthru
      _
    // Predicated region
    $region102: #{_lambda_.9} parent=1 // pred_check
      _
    $region103: #{_lambda_.9} parent=1 // pred_check_branch
      %140 = sbr.rel (0) target = $region105
    $region104: #{_lambda_.9} parent=1 // pred_region
      _
    $region105: #{_lambda_.9} parent=1 // pred_fallthru
      _
    // Predicated region
    $region106: #{_lambda_.9} parent=1 // pred_check
      _
    $region107: #{_lambda_.9} parent=1 // pred_check_branch
      %142 = sbr.rel (0) target = $region109
    $region108: #{_lambda_.9} parent=1 // pred_region
      %144 = dma.done [#allocation3], 16
    $region109: #{_lambda_.9} parent=1 // pred_fallthru
      _
    // Predicated region
    $region110: #{_lambda_.9} parent=1 // pred_check
      _
    $region111: #{_lambda_.9} parent=1 // pred_check_branch
      %146 = sbr.rel (0) target = $region113
    $region112: #{_lambda_.9} parent=1 // pred_region
      %148 = dma.done [#allocation5], 16
    $region113: #{_lambda_.9} parent=1 // pred_fallthru
      _
    // Predicated region
    $region114: #{_lambda_.9} parent=1 // pred_check
      _
    $region115: #{_lambda_.9} parent=1 // pred_check_branch
      %150 = sbr.rel (0) target = $region117
    $region116: #{_lambda_.9} parent=1 // pred_region
      %152 = dma.done [#allocation5], 16
    $region117: #{_lambda_.9} parent=1 // pred_fallthru
      _
    // Predicated region
    $region118: #{_lambda_.9} parent=1 // pred_check
      _
    $region119: #{_lambda_.9} parent=1 // pred_check_branch
      %154 = sbr.rel (0) target = $region121
    $region120: #{_lambda_.9} parent=1 // pred_region
      %156 = dma.done [#allocation8], 16
    $region121: #{_lambda_.9} parent=1 // pred_fallthru
      _
    // Predicated region
    $region122: #{_lambda_.9} parent=1 // pred_check
      _
    $region123: #{_lambda_.9} parent=1 // pred_check_branch
      %158 = sbr.rel (0) target = $region125
    $region124: #{_lambda_.9} parent=1 // pred_region
      %160 = dma.done [#allocation8], 16
    $region125: #{_lambda_.9} parent=1 // pred_fallthru
      _
    // Predicated region
    $region126: #{_lambda_.9} parent=1 // pred_check
      _
    $region127: #{_lambda_.9} parent=1 // pred_check_branch
      %162 = sbr.rel (0) target = $region129
    $region128: #{_lambda_.9} parent=1 // pred_region
      %164 = dma.done [#allocation11], 16
    $region129: #{_lambda_.9} parent=1 // pred_fallthru
      _
    %v166 = vld [vmem:[%s0] sm:$0xff]
    %v167 = vld [vmem:[%s0 + $0x8] sm:$0xff]
    %v168 = vld [vmem:[%s0 + $0x10] sm:$0xff]
    %v169 = vld [vmem:[%s0 + $0x18] sm:$0xff]
    %v170 = vld [vmem:[%s0 + $0x20] sm:$0xff]
    %v171 = vld [vmem:[%s0 + $0x28] sm:$0xff]
    %v172 = vld [vmem:[%s1] sm:$0xf]
    %v173 = vld [vmem:[%s1 + $0x4] sm:$0xf]
    %v174 = vld [vmem:[%s1 + $0x8] sm:$0xf]
    %v175 = vld [vmem:[%s1 + $0xc] sm:$0xf]
    %v176 = vld [vmem:[%s1 + $0x10] sm:$0xf]
    %v177 = vld [vmem:[%s1 + $0x14] sm:$0xf]
    %v178 = vld [vmem:[%s1 + $0x18] sm:$0xf]
    %v179 = vld [vmem:[%s1 + $0x1c] sm:$0xf]
    %v180 = vld [vmem:[%s1 + $0x20] sm:$0xf]
    %v181 = vld [vmem:[%s1 + $0x24] sm:$0xf]
    %v182 = vld [vmem:[%s1 + $0x28] sm:$0xf]
    %v183 = vld [vmem:[%s1 + $0x2c] sm:$0xf]
    %v184 = vld [vmem:[%s1 + $0x30] sm:$0xf]
    %v185 = vld [vmem:[%s1 + $0x34] sm:$0xf]
    %v186 = vld [vmem:[%s1 + $0x38] sm:$0xf]
    %v187 = vld [vmem:[%s1 + $0x3c] sm:$0xf]
    %v188 = vld [vmem:[%s1 + $0x40] sm:$0xf]
    %v189 = vld [vmem:[%s1 + $0x44] sm:$0xf]
    %v190 = vld [vmem:[%s1 + $0x48] sm:$0xf]
    %v191 = vld [vmem:[%s1 + $0x4c] sm:$0xf]
    %v192 = vld [vmem:[%s1 + $0x50] sm:$0xf]
    %v193 = vld [vmem:[%s1 + $0x54] sm:$0xf]
    %v194 = vld [vmem:[%s1 + $0x58] sm:$0xf]
    %v195 = vld [vmem:[%s1 + $0x5c] sm:$0xf]
    %v196 = vld [vmem:[%s1 + $0x60] sm:$0xf]
    %v197 = vld [vmem:[%s1 + $0x64] sm:$0xf]
    %v198 = vld [vmem:[%s1 + $0x68] sm:$0xf]
    %v199 = vld [vmem:[%s1 + $0x6c] sm:$0xf]
    %v200 = vld [vmem:[%s1 + $0x70] sm:$0xf]
    %v201 = vld [vmem:[%s1 + $0x74] sm:$0xf]
    %v202 = vld [vmem:[%s1 + $0x78] sm:$0xf]
    %v203 = vld [vmem:[%s1 + $0x7c] sm:$0xf]
    %v204 = vld [vmem:[%s1 + $0x80] sm:$0xf]
    %v205 = vld [vmem:[%s1 + $0x84] sm:$0xf]
    %v206 = vld [vmem:[%s1 + $0x88] sm:$0xf]
    %v207 = vld [vmem:[%s1 + $0x8c] sm:$0xf]
    %v208 = vld [vmem:[%s1 + $0x90] sm:$0xf]
    %v209 = vld [vmem:[%s1 + $0x94] sm:$0xf]
    %v210 = vld [vmem:[%s1 + $0x98] sm:$0xf]
    %v211 = vld [vmem:[%s1 + $0x9c] sm:$0xf]
    %v212 = vld [vmem:[%s1 + $0xa0] sm:$0xf]
    %v213 = vld [vmem:[%s1 + $0xa4] sm:$0xf]
    %v214 = vld [vmem:[%s1 + $0xa8] sm:$0xf]
    %v215 = vld [vmem:[%s1 + $0xac] sm:$0xf]
    %v216 = vld [vmem:[%s1 + $0xb0] sm:$0xf]
    %v217 = vld [vmem:[%s1 + $0xb4] sm:$0xf]
    %v218 = vld [vmem:[%s1 + $0xb8] sm:$0xf]
    %v219 = vld [vmem:[%s1 + $0xbc] sm:$0xf]
    %v220 = vld [vmem:[%s1 + $0xc0] sm:$0xf]
    %v221 = vld [vmem:[%s1 + $0xc4] sm:$0xf]
    %v222 = vld [vmem:[%s1 + $0xc8] sm:$0xf]
    %v223 = vld [vmem:[%s1 + $0xcc] sm:$0xf]
    %v224 = vld [vmem:[%s1 + $0xd0] sm:$0xf]
    %v225 = vld [vmem:[%s1 + $0xd4] sm:$0xf]
    %v226 = vld [vmem:[%s1 + $0xd8] sm:$0xf]
    %v227 = vld [vmem:[%s1 + $0xdc] sm:$0xf]
    %v228 = vld [vmem:[%s1 + $0xe0] sm:$0xf]
    %v229 = vld [vmem:[%s1 + $0xe4] sm:$0xf]
    %v230 = vld [vmem:[%s1 + $0xe8] sm:$0xf]
    %v231 = vld [vmem:[%s1 + $0xec] sm:$0xf]
    %v232 = vld [vmem:[%s1 + $0xf0] sm:$0xf]
    %v233 = vld [vmem:[%s1 + $0xf4] sm:$0xf]
    %v234 = vld [vmem:[%s1 + $0xf8] sm:$0xf]
    %v235 = vld [vmem:[%s1 + $0xfc] sm:$0xf]
    %v236 = vld [vmem:[%s1 + $0x100] sm:$0xf]
    %v237 = vld [vmem:[%s1 + $0x104] sm:$0xf]
    %v238 = vld [vmem:[%s1 + $0x108] sm:$0xf]
    %v239 = vld [vmem:[%s1 + $0x10c] sm:$0xf]
    %v240 = vld [vmem:[%s1 + $0x110] sm:$0xf]
    %v241 = vld [vmem:[%s1 + $0x114] sm:$0xf]
    %v242 = vld [vmem:[%s1 + $0x118] sm:$0xf]
    %v243 = vld [vmem:[%s1 + $0x11c] sm:$0xf]
    %v244 = vld [vmem:[%s1 + $0x120] sm:$0xf]
    %v245 = vld [vmem:[%s1 + $0x124] sm:$0xf]
    %v246 = vld [vmem:[%s1 + $0x128] sm:$0xf]
    %v247 = vld [vmem:[%s1 + $0x12c] sm:$0xf]
    %v248 = vld [vmem:[%s1 + $0x130] sm:$0xf]
    %v249 = vld [vmem:[%s1 + $0x134] sm:$0xf]
    %v250 = vld [vmem:[%s1 + $0x138] sm:$0xf]
    %v251 = vld [vmem:[%s1 + $0x13c] sm:$0xf]
    %v252 = vld [vmem:[%s1 + $0x140] sm:$0xf]
    %v253 = vld [vmem:[%s1 + $0x144] sm:$0xf]
    %v254 = vld [vmem:[%s1 + $0x148] sm:$0xf]
    %v255 = vld [vmem:[%s1 + $0x14c] sm:$0xf]
    %v256 = vld [vmem:[%s1 + $0x150] sm:$0xf]
    %v257 = vld [vmem:[%s1 + $0x154] sm:$0xf]
    %v258 = vld [vmem:[%s1 + $0x158] sm:$0xf]
    %v259 = vld [vmem:[%s1 + $0x15c] sm:$0xf]
    %v260 = vld [vmem:[%s1 + $0x160] sm:$0xf]
    %v261 = vld [vmem:[%s1 + $0x164] sm:$0xf]
    %v262 = vld [vmem:[%s1 + $0x168] sm:$0xf]
    %v263 = vld [vmem:[%s1 + $0x16c] sm:$0xf]
    %v264 = vld [vmem:[%s1 + $0x170] sm:$0xf]
    %v265 = vld [vmem:[%s1 + $0x174] sm:$0xf]
    %v266 = vld [vmem:[%s1 + $0x178] sm:$0xf]
    %v267 = vld [vmem:[%s1 + $0x17c] sm:$0xf]
    %v268 = vpack.c.bf16 %v166, %v166
    %v269 = vpack.c.bf16 %v167, %v167
    %v270 = vpack.c.bf16 %v168, %v168
    %v271 = vpack.c.bf16 %v169, %v169
    %v272 = vpack.c.bf16 %v170, %v170
    %v273 = vpack.c.bf16 %v171, %v171
    %v274 = vld [vmem:[#allocation2] sm:$0x1]
    %v276 = vperm.slane %v274, 0
    %v374 = vunpack.c.l.b16 %v172
    %v375 = vunpack.c.l.b16 %v173
    %v376 = vunpack.c.l.b16 %v174
    %v377 = vunpack.c.l.b16 %v175
    %v378 = vunpack.c.l.b16 %v176
    %v379 = vunpack.c.l.b16 %v177
    %v380 = vunpack.c.l.b16 %v178
    %v381 = vunpack.c.l.b16 %v179
    %v382 = vunpack.c.l.b16 %v180
    %v383 = vunpack.c.l.b16 %v181
    %v384 = vunpack.c.l.b16 %v182
    %v385 = vunpack.c.l.b16 %v183
    %v386 = vunpack.c.l.b16 %v184
    %v387 = vunpack.c.l.b16 %v185
    %v388 = vunpack.c.l.b16 %v186
    %v389 = vunpack.c.l.b16 %v187
    %v390 = vunpack.c.l.b16 %v188
    %v391 = vunpack.c.l.b16 %v189
    %v392 = vunpack.c.l.b16 %v190
    %v393 = vunpack.c.l.b16 %v191
    %v394 = vunpack.c.l.b16 %v192
    %v395 = vunpack.c.l.b16 %v193
    %v396 = vunpack.c.l.b16 %v194
    %v397 = vunpack.c.l.b16 %v195
    %v398 = vunpack.c.l.b16 %v196
    %v399 = vunpack.c.l.b16 %v197
    %v400 = vunpack.c.l.b16 %v198
    %v401 = vunpack.c.l.b16 %v199
    %v402 = vunpack.c.l.b16 %v200
    %v403 = vunpack.c.l.b16 %v201
    %v404 = vunpack.c.l.b16 %v202
    %v405 = vunpack.c.l.b16 %v203
    %v406 = vunpack.c.l.b16 %v204
    %v407 = vunpack.c.l.b16 %v205
    %v408 = vunpack.c.l.b16 %v206
    %v409 = vunpack.c.l.b16 %v207
    %v410 = vunpack.c.l.b16 %v208
    %v411 = vunpack.c.l.b16 %v209
    %v412 = vunpack.c.l.b16 %v210
    %v413 = vunpack.c.l.b16 %v211
    %v414 = vunpack.c.l.b16 %v212
    %v415 = vunpack.c.l.b16 %v213
    %v416 = vunpack.c.l.b16 %v214
    %v417 = vunpack.c.l.b16 %v215
    %v418 = vunpack.c.l.b16 %v216
    %v419 = vunpack.c.l.b16 %v217
    %v420 = vunpack.c.l.b16 %v218
    %v421 = vunpack.c.l.b16 %v219
    %v422 = vunpack.c.l.b16 %v220
    %v423 = vunpack.c.l.b16 %v221
    %v424 = vunpack.c.l.b16 %v222
    %v425 = vunpack.c.l.b16 %v223
    %v426 = vunpack.c.l.b16 %v224
    %v427 = vunpack.c.l.b16 %v225
    %v428 = vunpack.c.l.b16 %v226
    %v429 = vunpack.c.l.b16 %v227
    %v430 = vunpack.c.l.b16 %v228
    %v431 = vunpack.c.l.b16 %v229
    %v432 = vunpack.c.l.b16 %v230
    %v433 = vunpack.c.l.b16 %v231
    %v434 = vunpack.c.l.b16 %v232
    %v435 = vunpack.c.l.b16 %v233
    %v436 = vunpack.c.l.b16 %v234
    %v437 = vunpack.c.l.b16 %v235
    %v438 = vunpack.c.l.b16 %v236
    %v439 = vunpack.c.l.b16 %v237
    %v440 = vunpack.c.l.b16 %v238
    %v441 = vunpack.c.l.b16 %v239
    %v442 = vunpack.c.l.b16 %v240
    %v443 = vunpack.c.l.b16 %v241
    %v444 = vunpack.c.l.b16 %v242
    %v445 = vunpack.c.l.b16 %v243
    %v446 = vunpack.c.l.b16 %v244
    %v447 = vunpack.c.l.b16 %v245
    %v448 = vunpack.c.l.b16 %v246
    %v449 = vunpack.c.l.b16 %v247
    %v450 = vunpack.c.l.b16 %v248
    %v451 = vunpack.c.l.b16 %v249
    %v452 = vunpack.c.l.b16 %v250
    %v453 = vunpack.c.l.b16 %v251
    %v454 = vunpack.c.l.b16 %v252
    %v455 = vunpack.c.l.b16 %v253
    %v456 = vunpack.c.l.b16 %v254
    %v457 = vunpack.c.l.b16 %v255
    %v458 = vunpack.c.l.b16 %v256
    %v459 = vunpack.c.l.b16 %v257
    %v460 = vunpack.c.l.b16 %v258
    %v461 = vunpack.c.l.b16 %v259
    %v462 = vunpack.c.l.b16 %v260
    %v463 = vunpack.c.l.b16 %v261
    %v464 = vunpack.c.l.b16 %v262
    %v465 = vunpack.c.l.b16 %v263
    %v466 = vunpack.c.l.b16 %v264
    %v467 = vunpack.c.l.b16 %v265
    %v468 = vunpack.c.l.b16 %v266
    %v469 = vunpack.c.l.b16 %v267
    %v470 = vpack.c.b16 %v375, %v374
    %v471 = vpack.c.b16 %v377, %v376
    %v472 = vpack.c.b16 %v379, %v378
    %v473 = vpack.c.b16 %v381, %v380
    %v474 = vpack.c.b16 %v383, %v382
    %v475 = vpack.c.b16 %v385, %v384
    %v476 = vpack.c.b16 %v387, %v386
    %v477 = vpack.c.b16 %v389, %v388
    %v478 = vpack.c.b16 %v391, %v390
    %v479 = vpack.c.b16 %v393, %v392
    %v480 = vpack.c.b16 %v395, %v394
    %v481 = vpack.c.b16 %v397, %v396
    %v482 = vpack.c.b16 %v399, %v398
    %v483 = vpack.c.b16 %v401, %v400
    %v484 = vpack.c.b16 %v403, %v402
    %v485 = vpack.c.b16 %v405, %v404
    %v486 = vpack.c.b16 %v407, %v406
    %v487 = vpack.c.b16 %v409, %v408
    %v488 = vpack.c.b16 %v411, %v410
    %v489 = vpack.c.b16 %v413, %v412
    %v490 = vpack.c.b16 %v415, %v414
    %v491 = vpack.c.b16 %v417, %v416
    %v492 = vpack.c.b16 %v419, %v418
    %v493 = vpack.c.b16 %v421, %v420
    %v494 = vpack.c.b16 %v423, %v422
    %v495 = vpack.c.b16 %v425, %v424
    %v496 = vpack.c.b16 %v427, %v426
    %v497 = vpack.c.b16 %v429, %v428
    %v498 = vpack.c.b16 %v431, %v430
    %v499 = vpack.c.b16 %v433, %v432
    %v500 = vpack.c.b16 %v435, %v434
    %v501 = vpack.c.b16 %v437, %v436
    %v502 = vpack.c.b16 %v439, %v438
    %v503 = vpack.c.b16 %v441, %v440
    %v504 = vpack.c.b16 %v443, %v442
    %v505 = vpack.c.b16 %v445, %v444
    %v506 = vpack.c.b16 %v447, %v446
    %v507 = vpack.c.b16 %v449, %v448
    %v508 = vpack.c.b16 %v451, %v450
    %v509 = vpack.c.b16 %v453, %v452
    %v510 = vpack.c.b16 %v455, %v454
    %v511 = vpack.c.b16 %v457, %v456
    %v512 = vpack.c.b16 %v459, %v458
    %v513 = vpack.c.b16 %v461, %v460
    %v514 = vpack.c.b16 %v463, %v462
    %v515 = vpack.c.b16 %v465, %v464
    %v516 = vpack.c.b16 %v467, %v466
    %v517 = vpack.c.b16 %v469, %v468
    %566 = vmatpush.bf16.msra.mxu0 %v477
    %567 = vmatpush.bf16.msra.mxu0 %v476
    %568 = vmatpush.bf16.msra.mxu0 %v475
    %569 = vmatpush.bf16.msra.mxu0 %v474
    %570 = vmatpush.bf16.msra.mxu0 %v473
    %571 = vmatpush.bf16.msra.mxu0 %v472
    %572 = vmatpush.bf16.msra.mxu0 %v471
    %573 = vmatpush.bf16.msra.mxu0 %v470
    %574 = vmatmul.bf16.gmra.mxu0 %v268
    %v575 = vpop.f32.mrf.mxu0
    %v576 = vadd.f32 %v276, %v575
    %v577 = vpop.f32.mrf.mxu0
    %578 = vdwg.mxu0
    %579 = vmatpush.bf16.msra.mxu0 %v485
    %580 = vmatpush.bf16.msra.mxu0 %v484
    %581 = vmatpush.bf16.msra.mxu0 %v483
    %582 = vmatpush.bf16.msra.mxu0 %v482
    %583 = vmatpush.bf16.msra.mxu0 %v481
    %584 = vmatpush.bf16.msra.mxu0 %v480
    %585 = vmatpush.bf16.msra.mxu0 %v479
    %586 = vmatpush.bf16.msra.mxu0 %v478
    %587 = vmatmul.bf16.gmra.mxu0 %v269
    %v588 = vpop.f32.mrf.mxu0
    %v589 = vadd.f32 %v576, %v588
    %v590 = vpop.f32.mrf.mxu0
    %591 = vdwg.mxu0
    %592 = vmatpush.bf16.msra.mxu0 %v493
    %593 = vmatpush.bf16.msra.mxu0 %v492
    %594 = vmatpush.bf16.msra.mxu0 %v491
    %595 = vmatpush.bf16.msra.mxu0 %v490
    %596 = vmatpush.bf16.msra.mxu0 %v489
    %597 = vmatpush.bf16.msra.mxu0 %v488
    %598 = vmatpush.bf16.msra.mxu0 %v487
    %599 = vmatpush.bf16.msra.mxu0 %v486
    %600 = vmatmul.bf16.gmra.mxu0 %v270
    %v601 = vpop.f32.mrf.mxu0
    %v602 = vadd.f32 %v589, %v601
    %v603 = vpop.f32.mrf.mxu0
    %604 = vdwg.mxu0
    %605 = vmatpush.bf16.msra.mxu0 %v501
    %606 = vmatpush.bf16.msra.mxu0 %v500
    %607 = vmatpush.bf16.msra.mxu0 %v499
    %608 = vmatpush.bf16.msra.mxu0 %v498
    %609 = vmatpush.bf16.msra.mxu0 %v497
    %610 = vmatpush.bf16.msra.mxu0 %v496
    %611 = vmatpush.bf16.msra.mxu0 %v495
    %612 = vmatpush.bf16.msra.mxu0 %v494
    %613 = vmatmul.bf16.gmra.mxu0 %v271
    %v614 = vpop.f32.mrf.mxu0
    %v615 = vadd.f32 %v602, %v614
    %v616 = vpop.f32.mrf.mxu0
    %617 = vdwg.mxu0
    %618 = vmatpush.bf16.msra.mxu0 %v509
    %619 = vmatpush.bf16.msra.mxu0 %v508
    %620 = vmatpush.bf16.msra.mxu0 %v507
    %621 = vmatpush.bf16.msra.mxu0 %v506
    %622 = vmatpush.bf16.msra.mxu0 %v505
    %623 = vmatpush.bf16.msra.mxu0 %v504
    %624 = vmatpush.bf16.msra.mxu0 %v503
    %625 = vmatpush.bf16.msra.mxu0 %v502
    %626 = vmatmul.bf16.gmra.mxu0 %v272
    %v627 = vpop.f32.mrf.mxu0
    %v628 = vadd.f32 %v615, %v627
    %v629 = vpop.f32.mrf.mxu0
    %630 = vdwg.mxu0
    %631 = vmatpush.bf16.msra.mxu0 %v517
    %632 = vmatpush.bf16.msra.mxu0 %v516
    %633 = vmatpush.bf16.msra.mxu0 %v515
    %634 = vmatpush.bf16.msra.mxu0 %v514
    %635 = vmatpush.bf16.msra.mxu0 %v513
    %636 = vmatpush.bf16.msra.mxu0 %v512
    %637 = vmatpush.bf16.msra.mxu0 %v511
    %638 = vmatpush.bf16.msra.mxu0 %v510
    %639 = vmatmul.bf16.gmra.mxu0 %v273
    %v640 = vpop.f32.mrf.mxu0
    %v641 = vadd.f32 %v628, %v640
    %v642 = vpop.f32.mrf.mxu0
    %643 = vdwg.mxu0
    %v644 = vld [vmem:[%s3] sm:$0x1]
    %v645 = vld [vmem:[%s4] sm:$0x1]
    %vm646 = vcmask 261120
    %v647 = vsel %vm646, %v641, 0.0
    %v648 = vrot.slane %v647, 4
    %v649 = vadd.f32 %v647, %v648
    %v650 = vrot.slane %v649, 2
    %v651 = vadd.f32 %v649, %v650
    %v652 = vrot.slane %v651, 1
    %v653 = vadd.f32 %v651, %v652
    %v654 = vrcp.pop 8.0
    %v655 = vmul.f32 8.0, %v654
    %v656 = vsub.f32 1.0, %v655
    %v657 = vmul.f32 %v654, %v656
    %v658 = vadd.f32 %v654, %v657
    %vm659 = vweird.f32 %v654
    %v660 = vsel %vm659, %v654, %v658
    %v661 = vmul.f32 %v653, %v660
    %v662 = vsub.f32 %v641, %v661
    %v663 = vmul.f32 %v662, %v662
    %v664 = vsel %vm646, %v663, 0.0
    %v665 = vrot.slane %v664, 4
    %v666 = vadd.f32 %v664, %v665
    %v667 = vrot.slane %v666, 2
    %v668 = vadd.f32 %v666, %v667
    %v669 = vrot.slane %v668, 1
    %v670 = vadd.f32 %v668, %v669
    %v671 = vmul.f32 %v670, %v660
    %v672 = vadd.f32 %v671, 1e-05
    %v673 = vrsqrt.pop %v672
    %v674 = vmul.f32 %v673, %v672
    %v675 = vmul.f32 %v674, %v673
    %v676 = vmul.f32 0.5, %v675
    %v677 = vsub.f32 1.5, %v676
    %v678 = vmul.f32 %v673, %v677
    %vm679 = vweird.f32 %v672
    %vm680 = vweird.f32 %v673
    %vm681 = vmor %vm679, %vm680
    %v682 = vsel %vm681, %v673, %v678
    %v683 = vmul.f32 %v662, %v682
    %v685 = vperm.slane %v644, 0
    %v687 = vmul.f32 %v683, %v685
    %v689 = vperm.slane %v645, 0
    %v691 = vadd.f32 %v687, %v689
    %v692 = vmul.f32 %v691, 0.5
    %v693 = vmul.f32 %v691, 0.70710677
    %v694 = vmul.f32 %v693, %v693
    %v695 = vmin.f32 16.0, %v694
    %v696 = vmul.f32 %v695, 2.1237322e-06
    %v697 = vadd.f32 %v696, 0.00028619796
    %v698 = vmul.f32 %v695, %v697
    %v699 = vadd.f32 %v698, 0.0036580483
    %v700 = vmul.f32 %v695, %v699
    %v701 = vadd.f32 %v700, 0.05243302
    %v702 = vmul.f32 %v695, %v701
    %v703 = vadd.f32 %v702, 0.18741608
    %v704 = vmul.f32 %v695, %v703
    %v705 = vadd.f32 %v704, 1.1283791
    %v706 = vmul.f32 %v693, %v705
    %v707 = vmul.f32 %v695, 3.8918573e-05
    %v708 = vadd.f32 %v707, 0.001143296
    %v709 = vmul.f32 %v695, %v708
    %v710 = vadd.f32 %v709, 0.014752088
    %v711 = vmul.f32 %v695, %v710
    %v712 = vadd.f32 %v711, 0.112945676
    %v713 = vmul.f32 %v695, %v712
    %v714 = vadd.f32 %v713, 0.4994258
    %v715 = vmul.f32 %v695, %v714
    %v716 = vadd.f32 %v715, 1.0
    %v717 = vrcp.pop %v716
    %v718 = vmul.f32 %v716, %v717
    %v719 = vsub.f32 1.0, %v718
    %v720 = vmul.f32 %v717, %v719
    %v721 = vadd.f32 %v717, %v720
    %vm722 = vweird.f32 %v716
    %vm723 = vweird.f32 %v717
    %vm724 = vmor %vm722, %vm723
    %v725 = vsel %vm724, %v717, %v721
    %v726 = vand.u32 2147483647, %v716
    %vm727 = vcmp.eq.f32.partialorder %v726, 8.507059e+37
    %v728 = vand.u32 %v716, 2147483648
    %v729 = vor.u32 1.1754944e-38, %v728
    %v730 = vsel %vm727, %v729, %v725
    %v731 = vmul.f32 %v706, %v730
    %v732 = vmin.f32 %v731, 1.0
    %v733 = vmax.f32 %v732, -1.0
    %v734 = vadd.f32 %v733, 1.0
    %v735 = vmul.f32 %v692, %v734
    %v736 = vld [vmem:[%s5] sm:$0xf]
    %v737 = vld [vmem:[%s5 + $0x4] sm:$0xf]
    %v738 = vld [vmem:[%s5 + $0x8] sm:$0xf]
    %v739 = vld [vmem:[%s5 + $0xc] sm:$0xf]
    %v740 = vpack.c.bf16 %v735, %v735
    %v741 = vld [vmem:[#allocation4] sm:$0x1]
    %v743 = vperm.slane %v741, 0
    %v749 = vunpack.c.l.b16 %v736
    %v750 = vunpack.c.l.b16 %v737
    %v751 = vunpack.c.l.b16 %v738
    %v752 = vunpack.c.l.b16 %v739
    %v753 = vpack.c.b16 %v750, %v749
    %v754 = vpack.c.b16 %v752, %v751
    %v758 = vsel %vm646, %v740, 0
    %760 = vmatpush.bf16.msra.mxu0 0
    %761 = vmatpush.bf16.msra.mxu0 0
    %762 = vmatpush.bf16.msra.mxu0 0
    %763 = vmatpush.bf16.msra.mxu0 0
    %764 = vmatpush.bf16.msra.mxu0 0
    %765 = vmatpush.bf16.msra.mxu0 0
    %766 = vmatpush.bf16.msra.mxu0 %v754
    %767 = vmatpush.bf16.msra.mxu0 %v753
    %768 = vmatmul.bf16.gmra.mxu0 %v758
    %v769 = vpop.f32.mrf.mxu0
    %v770 = vadd.f32 %v743, %v769
    %v771 = vpop.f32.mrf.mxu0
    %772 = vdwg.mxu0
    %v773 = vld [vmem:[%s7] sm:$0x1]
    %v774 = vld [vmem:[%s8] sm:$0x1]
    %vm775 = vcmask 130048
    %v776 = vsel %vm775, %v770, 0.0
    %v777 = vrot.slane %v776, 4
    %v778 = vadd.f32 %v776, %v777
    %v779 = vrot.slane %v778, 2
    %v780 = vadd.f32 %v778, %v779
    %v781 = vrot.slane %v780, 1
    %v782 = vadd.f32 %v780, %v781
    %v783 = vmul.f32 %v782, %v660
    %v784 = vsub.f32 %v770, %v783
    %v785 = vmul.f32 %v784, %v784
    %v786 = vsel %vm775, %v785, 0.0
    %v787 = vrot.slane %v786, 4
    %v788 = vadd.f32 %v786, %v787
    %v789 = vrot.slane %v788, 2
    %v790 = vadd.f32 %v788, %v789
    %v791 = vrot.slane %v790, 1
    %v792 = vadd.f32 %v790, %v791
    %v793 = vmul.f32 %v792, %v660
    %v794 = vadd.f32 %v793, 1e-05
    %v795 = vrsqrt.pop %v794
    %v796 = vmul.f32 %v795, %v794
    %v797 = vmul.f32 %v796, %v795
    %v798 = vmul.f32 0.5, %v797
    %v799 = vsub.f32 1.5, %v798
    %v800 = vmul.f32 %v795, %v799
    %vm801 = vweird.f32 %v794
    %vm802 = vweird.f32 %v795
    %vm803 = vmor %vm801, %vm802
    %v804 = vsel %vm803, %v795, %v800
    %v805 = vmul.f32 %v784, %v804
    %v807 = vperm.slane %v773, 0
    %v809 = vmul.f32 %v805, %v807
    %v811 = vperm.slane %v774, 0
    %v813 = vadd.f32 %v809, %v811
    %v814 = vmul.f32 %v813, 0.5
    %v815 = vmul.f32 %v813, 0.70710677
    %v816 = vmul.f32 %v815, %v815
    %v817 = vmin.f32 16.0, %v816
    %v818 = vmul.f32 %v817, 2.1237322e-06
    %v819 = vadd.f32 %v818, 0.00028619796
    %v820 = vmul.f32 %v817, %v819
    %v821 = vadd.f32 %v820, 0.0036580483
    %v822 = vmul.f32 %v817, %v821
    %v823 = vadd.f32 %v822, 0.05243302
    %v824 = vmul.f32 %v817, %v823
    %v825 = vadd.f32 %v824, 0.18741608
    %v826 = vmul.f32 %v817, %v825
    %v827 = vadd.f32 %v826, 1.1283791
    %v828 = vmul.f32 %v815, %v827
    %v829 = vmul.f32 %v817, 3.8918573e-05
    %v830 = vadd.f32 %v829, 0.001143296
    %v831 = vmul.f32 %v817, %v830
    %v832 = vadd.f32 %v831, 0.014752088
    %v833 = vmul.f32 %v817, %v832
    %v834 = vadd.f32 %v833, 0.112945676
    %v835 = vmul.f32 %v817, %v834
    %v836 = vadd.f32 %v835, 0.4994258
    %v837 = vmul.f32 %v817, %v836
    %v838 = vadd.f32 %v837, 1.0
    %v839 = vrcp.pop %v838
    %v840 = vmul.f32 %v838, %v839
    %v841 = vsub.f32 1.0, %v840
    %v842 = vmul.f32 %v839, %v841
    %v843 = vadd.f32 %v839, %v842
    %vm844 = vweird.f32 %v838
    %vm845 = vweird.f32 %v839
    %vm846 = vmor %vm844, %vm845
    %v847 = vsel %vm846, %v839, %v843
    %v848 = vand.u32 2147483647, %v838
    %vm849 = vcmp.eq.f32.partialorder %v848, 8.507059e+37
    %v850 = vand.u32 %v838, 2147483648
    %v851 = vor.u32 1.1754944e-38, %v850
    %v852 = vsel %vm849, %v851, %v847
    %v853 = vmul.f32 %v828, %v852
    %v854 = vmin.f32 %v853, 1.0
    %v855 = vmax.f32 %v854, -1.0
    %v856 = vadd.f32 %v855, 1.0
    %v857 = vmul.f32 %v814, %v856
    %v858 = vld [vmem:[%s9] sm:$0xf]
    %v859 = vld [vmem:[%s9 + $0x4] sm:$0xf]
    %v860 = vpack.c.bf16 %v857, %v857
    %v861 = vld [vmem:[#allocation6] sm:$0x1]
    %v863 = vperm.slane %v861, 0
    %v867 = vunpack.c.l.b16 %v858
    %v868 = vunpack.c.l.b16 %v859
    %v869 = vpack.c.b16 %v868, %v867
    %v872 = vsel %vm775, %v860, 0
    %874 = vmatpush.bf16.msra.mxu0 0
    %875 = vmatpush.bf16.msra.mxu0 0
    %876 = vmatpush.bf16.msra.mxu0 0
    %877 = vmatpush.bf16.msra.mxu0 0
    %878 = vmatpush.bf16.msra.mxu0 0
    %879 = vmatpush.bf16.msra.mxu0 0
    %880 = vmatpush.bf16.msra.mxu0 0
    %881 = vmatpush.bf16.msra.mxu0 %v869
    %882 = vmatmul.bf16.gmra.mxu0 %v872
    %v883 = vpop.f32.mrf.mxu0
    %v884 = vadd.f32 %v863, %v883
    %v885 = vpop.f32.mrf.mxu0
    %886 = vdwg.mxu0
    %v887 = vld [vmem:[%s11] sm:$0x1]
    %v888 = vld [vmem:[%s12] sm:$0x1]
    %vm889 = vcmask 64512
    %v890 = vsel %vm889, %v884, 0.0
    %v891 = vrot.slane %v890, 4
    %v892 = vadd.f32 %v890, %v891
    %v893 = vrot.slane %v892, 2
    %v894 = vadd.f32 %v892, %v893
    %v895 = vrot.slane %v894, 1
    %v896 = vadd.f32 %v894, %v895
    %v897 = vmul.f32 %v896, %v660
    %v898 = vsub.f32 %v884, %v897
    %v899 = vmul.f32 %v898, %v898
    %v900 = vsel %vm889, %v899, 0.0
    %v901 = vrot.slane %v900, 4
    %v902 = vadd.f32 %v900, %v901
    %v903 = vrot.slane %v902, 2
    %v904 = vadd.f32 %v902, %v903
    %v905 = vrot.slane %v904, 1
    %v906 = vadd.f32 %v904, %v905
    %v907 = vmul.f32 %v906, %v660
    %v908 = vadd.f32 %v907, 1e-05
    %v909 = vrsqrt.pop %v908
    %v910 = vmul.f32 %v909, %v908
    %v911 = vmul.f32 %v910, %v909
    %v912 = vmul.f32 0.5, %v911
    %v913 = vsub.f32 1.5, %v912
    %v914 = vmul.f32 %v909, %v913
    %vm915 = vweird.f32 %v908
    %vm916 = vweird.f32 %v909
    %vm917 = vmor %vm915, %vm916
    %v918 = vsel %vm917, %v909, %v914
    %v919 = vmul.f32 %v898, %v918
    %v921 = vperm.slane %v887, 0
    %v923 = vmul.f32 %v919, %v921
    %v925 = vperm.slane %v888, 0
    %v927 = vadd.f32 %v923, %v925
    %v928 = vmul.f32 %v927, 0.5
    %v929 = vmul.f32 %v927, 0.70710677
    %v930 = vmul.f32 %v929, %v929
    %v931 = vmin.f32 16.0, %v930
    %v932 = vmul.f32 %v931, 2.1237322e-06
    %v933 = vadd.f32 %v932, 0.00028619796
    %v934 = vmul.f32 %v931, %v933
    %v935 = vadd.f32 %v934, 0.0036580483
    %v936 = vmul.f32 %v931, %v935
    %v937 = vadd.f32 %v936, 0.05243302
    %v938 = vmul.f32 %v931, %v937
    %v939 = vadd.f32 %v938, 0.18741608
    %v940 = vmul.f32 %v931, %v939
    %v941 = vadd.f32 %v940, 1.1283791
    %v942 = vmul.f32 %v929, %v941
    %v943 = vmul.f32 %v931, 3.8918573e-05
    %v944 = vadd.f32 %v943, 0.001143296
    %v945 = vmul.f32 %v931, %v944
    %v946 = vadd.f32 %v945, 0.014752088
    %v947 = vmul.f32 %v931, %v946
    %v948 = vadd.f32 %v947, 0.112945676
    %v949 = vmul.f32 %v931, %v948
    %v950 = vadd.f32 %v949, 0.4994258
    %v951 = vmul.f32 %v931, %v950
    %v952 = vadd.f32 %v951, 1.0
    %v953 = vrcp.pop %v952
    %v954 = vmul.f32 %v952, %v953
    %v955 = vsub.f32 1.0, %v954
    %v956 = vmul.f32 %v953, %v955
    %v957 = vadd.f32 %v953, %v956
    %vm958 = vweird.f32 %v952
    %vm959 = vweird.f32 %v953
    %vm960 = vmor %vm958, %vm959
    %v961 = vsel %vm960, %v953, %v957
    %v962 = vand.u32 2147483647, %v952
    %vm963 = vcmp.eq.f32.partialorder %v962, 8.507059e+37
    %v964 = vand.u32 %v952, 2147483648
    %v965 = vor.u32 1.1754944e-38, %v964
    %v966 = vsel %vm963, %v965, %v961
    %v967 = vmul.f32 %v942, %v966
    %v968 = vmin.f32 %v967, 1.0
    %v969 = vmax.f32 %v968, -1.0
    %v970 = vadd.f32 %v969, 1.0
    %v971 = vmul.f32 %v928, %v970
    %v972 = vld [vmem:[%s13] sm:$0xf]
    %v973 = vpack.c.bf16 %v971, %v971
    %v974 = vld [vmem:[#allocation7] sm:$0x1]
    %v976 = vperm.slane %v974, 0
    %v979 = vsel %vm889, %v973, 0
    %vm981 = vcmask 1043456
    %v983 = vsel %vm981, %v972, 0
    %985 = vmatpush.bf16.msra.mxu0 0
    %986 = vmatpush.bf16.msra.mxu0 0
    %987 = vmatpush.bf16.msra.mxu0 0
    %988 = vmatpush.bf16.msra.mxu0 0
    %989 = vmatpush.bf16.msra.mxu0 0
    %990 = vmatpush.bf16.msra.mxu0 0
    %991 = vmatpush.bf16.msra.mxu0 0
    %992 = vmatpush.bf16.msra.mxu0 %v983
    %993 = vmatmul.bf16.gmra.mxu0 %v979
    %v994 = vpop.f32.mrf.mxu0
    %v995 = vadd.f32 %v976, %v994
    %v996 = vpop.f32.mrf.mxu0
    %997 = vdwg.mxu0
    %v998 = vld [vmem:[%s15] sm:$0x1]
    %v999 = vld [vmem:[%s16] sm:$0x1]
    %v1000 = vsel %vm775, %v995, 0.0
    %v1001 = vrot.slane %v1000, 4
    %v1002 = vadd.f32 %v1000, %v1001
    %v1003 = vrot.slane %v1002, 2
    %v1004 = vadd.f32 %v1002, %v1003
    %v1005 = vrot.slane %v1004, 1
    %v1006 = vadd.f32 %v1004, %v1005
    %v1007 = vmul.f32 %v1006, %v660
    %v1008 = vsub.f32 %v995, %v1007
    %v1009 = vmul.f32 %v1008, %v1008
    %v1010 = vsel %vm775, %v1009, 0.0
    %v1011 = vrot.slane %v1010, 4
    %v1012 = vadd.f32 %v1010, %v1011
    %v1013 = vrot.slane %v1012, 2
    %v1014 = vadd.f32 %v1012, %v1013
    %v1015 = vrot.slane %v1014, 1
    %v1016 = vadd.f32 %v1014, %v1015
    %v1017 = vmul.f32 %v1016, %v660
    %v1018 = vadd.f32 %v1017, 1e-05
    %v1019 = vrsqrt.pop %v1018
    %v1020 = vmul.f32 %v1019, %v1018
    %v1021 = vmul.f32 %v1020, %v1019
    %v1022 = vmul.f32 0.5, %v1021
    %v1023 = vsub.f32 1.5, %v1022
    %v1024 = vmul.f32 %v1019, %v1023
    %vm1025 = vweird.f32 %v1018
    %vm1026 = vweird.f32 %v1019
    %vm1027 = vmor %vm1025, %vm1026
    %v1028 = vsel %vm1027, %v1019, %v1024
    %v1029 = vmul.f32 %v1008, %v1028
    %v1031 = vperm.slane %v998, 0
    %v1033 = vmul.f32 %v1029, %v1031
    %v1035 = vperm.slane %v999, 0
    %v1037 = vadd.f32 %v1033, %v1035
    %v1038 = vmul.f32 %v1037, 0.5
    %v1039 = vmul.f32 %v1037, 0.70710677
    %v1040 = vmul.f32 %v1039, %v1039
    %v1041 = vmin.f32 16.0, %v1040
    %v1042 = vmul.f32 %v1041, 2.1237322e-06
    %v1043 = vadd.f32 %v1042, 0.00028619796
    %v1044 = vmul.f32 %v1041, %v1043
    %v1045 = vadd.f32 %v1044, 0.0036580483
    %v1046 = vmul.f32 %v1041, %v1045
    %v1047 = vadd.f32 %v1046, 0.05243302
    %v1048 = vmul.f32 %v1041, %v1047
    %v1049 = vadd.f32 %v1048, 0.18741608
    %v1050 = vmul.f32 %v1041, %v1049
    %v1051 = vadd.f32 %v1050, 1.1283791
    %v1052 = vmul.f32 %v1039, %v1051
    %v1053 = vmul.f32 %v1041, 3.8918573e-05
    %v1054 = vadd.f32 %v1053, 0.001143296
    %v1055 = vmul.f32 %v1041, %v1054
    %v1056 = vadd.f32 %v1055, 0.014752088
    %v1057 = vmul.f32 %v1041, %v1056
    %v1058 = vadd.f32 %v1057, 0.112945676
    %v1059 = vmul.f32 %v1041, %v1058
    %v1060 = vadd.f32 %v1059, 0.4994258
    %v1061 = vmul.f32 %v1041, %v1060
    %v1062 = vadd.f32 %v1061, 1.0
    %v1063 = vrcp.pop %v1062
    %v1064 = vmul.f32 %v1062, %v1063
    %v1065 = vsub.f32 1.0, %v1064
    %v1066 = vmul.f32 %v1063, %v1065
    %v1067 = vadd.f32 %v1063, %v1066
    %vm1068 = vweird.f32 %v1062
    %vm1069 = vweird.f32 %v1063
    %vm1070 = vmor %vm1068, %vm1069
    %v1071 = vsel %vm1070, %v1063, %v1067
    %v1072 = vand.u32 2147483647, %v1062
    %vm1073 = vcmp.eq.f32.partialorder %v1072, 8.507059e+37
    %v1074 = vand.u32 %v1062, 2147483648
    %v1075 = vor.u32 1.1754944e-38, %v1074
    %v1076 = vsel %vm1073, %v1075, %v1071
    %v1077 = vmul.f32 %v1052, %v1076
    %v1078 = vmin.f32 %v1077, 1.0
    %v1079 = vmax.f32 %v1078, -1.0
    %v1080 = vadd.f32 %v1079, 1.0
    %v1081 = vmul.f32 %v1038, %v1080
    %v1082 = vld [vmem:[%s17] sm:$0xf]
    %v1083 = vld [vmem:[%s17 + $0x4] sm:$0xf]
    %v1084 = vpack.c.bf16 %v1081, %v1081
    %v1085 = vld [vmem:[#allocation9] sm:$0x1]
    %v1087 = vperm.slane %v1085, 0
    %v1091 = vunpack.c.l.b16 %v1082
    %v1092 = vunpack.c.l.b16 %v1083
    %v1093 = vpack.c.b16 %v1092, %v1091
    %v1096 = vsel %vm775, %v1084, 0
    %1098 = vmatpush.bf16.msra.mxu0 0
    %1099 = vmatpush.bf16.msra.mxu0 0
    %1100 = vmatpush.bf16.msra.mxu0 0
    %1101 = vmatpush.bf16.msra.mxu0 0
    %1102 = vmatpush.bf16.msra.mxu0 0
    %1103 = vmatpush.bf16.msra.mxu0 0
    %1104 = vmatpush.bf16.msra.mxu0 0
    %1105 = vmatpush.bf16.msra.mxu0 %v1093
    %1106 = vmatmul.bf16.gmra.mxu0 %v1096
    %v1107 = vpop.f32.mrf.mxu0
    %v1108 = vadd.f32 %v1087, %v1107
    %v1109 = vpop.f32.mrf.mxu0
    %1110 = vdwg.mxu0
    %v1111 = vld [vmem:[%s19] sm:$0x1]
    %v1112 = vld [vmem:[%s20] sm:$0x1]
    %v1113 = vsel %vm646, %v1108, 0.0
    %v1114 = vrot.slane %v1113, 4
    %v1115 = vadd.f32 %v1113, %v1114
    %v1116 = vrot.slane %v1115, 2
    %v1117 = vadd.f32 %v1115, %v1116
    %v1118 = vrot.slane %v1117, 1
    %v1119 = vadd.f32 %v1117, %v1118
    %v1120 = vmul.f32 %v1119, %v660
    %v1121 = vsub.f32 %v1108, %v1120
    %v1122 = vmul.f32 %v1121, %v1121
    %v1123 = vsel %vm646, %v1122, 0.0
    %v1124 = vrot.slane %v1123, 4
    %v1125 = vadd.f32 %v1123, %v1124
    %v1126 = vrot.slane %v1125, 2
    %v1127 = vadd.f32 %v1125, %v1126
    %v1128 = vrot.slane %v1127, 1
    %v1129 = vadd.f32 %v1127, %v1128
    %v1130 = vmul.f32 %v1129, %v660
    %v1131 = vadd.f32 %v1130, 1e-05
    %v1132 = vrsqrt.pop %v1131
    %v1133 = vmul.f32 %v1132, %v1131
    %v1134 = vmul.f32 %v1133, %v1132
    %v1135 = vmul.f32 0.5, %v1134
    %v1136 = vsub.f32 1.5, %v1135
    %v1137 = vmul.f32 %v1132, %v1136
    %vm1138 = vweird.f32 %v1131
    %vm1139 = vweird.f32 %v1132
    %vm1140 = vmor %vm1138, %vm1139
    %v1141 = vsel %vm1140, %v1132, %v1137
    %v1142 = vmul.f32 %v1121, %v1141
    %v1144 = vperm.slane %v1111, 0
    %v1146 = vmul.f32 %v1142, %v1144
    %v1148 = vperm.slane %v1112, 0
    %v1150 = vadd.f32 %v1146, %v1148
    %v1151 = vmul.f32 %v1150, 0.5
    %v1152 = vmul.f32 %v1150, 0.70710677
    %v1153 = vmul.f32 %v1152, %v1152
    %v1154 = vmin.f32 16.0, %v1153
    %v1155 = vmul.f32 %v1154, 2.1237322e-06
    %v1156 = vadd.f32 %v1155, 0.00028619796
    %v1157 = vmul.f32 %v1154, %v1156
    %v1158 = vadd.f32 %v1157, 0.0036580483
    %v1159 = vmul.f32 %v1154, %v1158
    %v1160 = vadd.f32 %v1159, 0.05243302
    %v1161 = vmul.f32 %v1154, %v1160
    %v1162 = vadd.f32 %v1161, 0.18741608
    %v1163 = vmul.f32 %v1154, %v1162
    %v1164 = vadd.f32 %v1163, 1.1283791
    %v1165 = vmul.f32 %v1152, %v1164
    %v1166 = vmul.f32 %v1154, 3.8918573e-05
    %v1167 = vadd.f32 %v1166, 0.001143296
    %v1168 = vmul.f32 %v1154, %v1167
    %v1169 = vadd.f32 %v1168, 0.014752088
    %v1170 = vmul.f32 %v1154, %v1169
    %v1171 = vadd.f32 %v1170, 0.112945676
    %v1172 = vmul.f32 %v1154, %v1171
    %v1173 = vadd.f32 %v1172, 0.4994258
    %v1174 = vmul.f32 %v1154, %v1173
    %v1175 = vadd.f32 %v1174, 1.0
    %v1176 = vrcp.pop %v1175
    %v1177 = vmul.f32 %v1175, %v1176
    %v1178 = vsub.f32 1.0, %v1177
    %v1179 = vmul.f32 %v1176, %v1178
    %v1180 = vadd.f32 %v1176, %v1179
    %vm1181 = vweird.f32 %v1175
    %vm1182 = vweird.f32 %v1176
    %vm1183 = vmor %vm1181, %vm1182
    %v1184 = vsel %vm1183, %v1176, %v1180
    %v1185 = vand.u32 2147483647, %v1175
    %vm1186 = vcmp.eq.f32.partialorder %v1185, 8.507059e+37
    %v1187 = vand.u32 %v1175, 2147483648
    %v1188 = vor.u32 1.1754944e-38, %v1187
    %v1189 = vsel %vm1186, %v1188, %v1184
    %v1190 = vmul.f32 %v1165, %v1189
    %v1191 = vmin.f32 %v1190, 1.0
    %v1192 = vmax.f32 %v1191, -1.0
    %v1193 = vadd.f32 %v1192, 1.0
    %v1194 = vmul.f32 %v1151, %v1193
    %v1195 = vld [vmem:[%s21] sm:$0xf]
    %v1196 = vld [vmem:[%s21 + $0x4] sm:$0xf]
    %v1197 = vld [vmem:[%s21 + $0x8] sm:$0xf]
    %v1198 = vld [vmem:[%s21 + $0xc] sm:$0xf]
    %v1199 = vpack.c.bf16 %v1194, %v1194
    %v1200 = vld [vmem:[#allocation10] sm:$0x1]
    %v1202 = vperm.slane %v1200, 0
    %v1208 = vunpack.c.l.b16 %v1195
    %v1209 = vunpack.c.l.b16 %v1196
    %v1210 = vunpack.c.l.b16 %v1197
    %v1211 = vunpack.c.l.b16 %v1198
    %v1212 = vpack.c.b16 %v1209, %v1208
    %v1213 = vpack.c.b16 %v1211, %v1210
    %v1217 = vsel %vm646, %v1199, 0
    %1219 = vmatpush.bf16.msra.mxu0 0
    %1220 = vmatpush.bf16.msra.mxu0 0
    %1221 = vmatpush.bf16.msra.mxu0 0
    %1222 = vmatpush.bf16.msra.mxu0 0
    %1223 = vmatpush.bf16.msra.mxu0 0
    %1224 = vmatpush.bf16.msra.mxu0 0
    %1225 = vmatpush.bf16.msra.mxu0 %v1213
    %1226 = vmatpush.bf16.msra.mxu0 %v1212
    %1227 = vmatmul.bf16.gmra.mxu0 %v1217
    %v1228 = vpop.f32.mrf.mxu0
    %v1229 = vadd.f32 %v1202, %v1228
    %v1230 = vpop.f32.mrf.mxu0
    %1231 = vdwg.mxu0
    %v1232 = vld [vmem:[%s23] sm:$0x1]
    %v1233 = vld [vmem:[%s24] sm:$0x1]
    %vm1234 = vcmask 523264
    %v1235 = vsel %vm1234, %v1229, 0.0
    %v1236 = vrot.slane %v1235, 4
    %v1237 = vadd.f32 %v1235, %v1236
    %v1238 = vrot.slane %v1237, 2
    %v1239 = vadd.f32 %v1237, %v1238
    %v1240 = vrot.slane %v1239, 1
    %v1241 = vadd.f32 %v1239, %v1240
    %v1242 = vmul.f32 %v1241, %v660
    %v1243 = vsub.f32 %v1229, %v1242
    %v1244 = vmul.f32 %v1243, %v1243
    %v1245 = vsel %vm1234, %v1244, 0.0
    %v1246 = vrot.slane %v1245, 4
    %v1247 = vadd.f32 %v1245, %v1246
    %v1248 = vrot.slane %v1247, 2
    %v1249 = vadd.f32 %v1247, %v1248
    %v1250 = vrot.slane %v1249, 1
    %v1251 = vadd.f32 %v1249, %v1250
    %v1252 = vmul.f32 %v1251, %v660
    %v1253 = vadd.f32 %v1252, 1e-05
    %v1254 = vrsqrt.pop %v1253
    %v1255 = vmul.f32 %v1254, %v1253
    %v1256 = vmul.f32 %v1255, %v1254
    %v1257 = vmul.f32 0.5, %v1256
    %v1258 = vsub.f32 1.5, %v1257
    %v1259 = vmul.f32 %v1254, %v1258
    %vm1260 = vweird.f32 %v1253
    %vm1261 = vweird.f32 %v1254
    %vm1262 = vmor %vm1260, %vm1261
    %v1263 = vsel %vm1262, %v1254, %v1259
    %v1264 = vmul.f32 %v1243, %v1263
    %v1266 = vperm.slane %v1232, 0
    %v1268 = vmul.f32 %v1264, %v1266
    %v1270 = vperm.slane %v1233, 0
    %v1272 = vadd.f32 %v1268, %v1270
    %v1273 = vld [vmem:[%s25] sm:$0xf]
    %v1275 = vrot.slane %v1273, 4
    %v1277 = vsel %vm981, %v1273, %v1275
    %v1278 = vadd.f32 %v1272, %v1277
    %1279 = vst.msk [vmem:[%s26] sm:$0xff] %vm1234, %v1278
    // Predicated region
    $region130: #{_lambda_.9} parent=1 // pred_check
      _
    $region131: #{_lambda_.9} parent=1 // pred_check_branch
      %1281 = sbr.rel (0) target = $region133
    $region132: #{_lambda_.9} parent=1 // pred_region
      _
    $region133: #{_lambda_.9} parent=1 // pred_fallthru
      _
    // Predicated region
    $region134: #{_lambda_.9} parent=1 // pred_check
      _
    $region135: #{_lambda_.9} parent=1 // pred_check_branch
      %1283 = sbr.rel (0) target = $region137
    $region136: #{_lambda_.9} parent=1 // pred_region
      _
    $region137: #{_lambda_.9} parent=1 // pred_fallthru
      _
    %1284 = vsyncpa [#allocation3], 1
    %1285 = vsyncpa [#allocation5], 1
    %1286 = vsyncpa [#allocation8], 1
    %1287 = vsyncpa [#allocation11], 1

// kernel: _lambda_.16
$region0: #{_lambda_.16}
  #allocation0 [shape = 'u32[]', space=smem, size = 0x4, offset = 0x4, fixed_abs, tag = 'smem constant byte address 0x4 - core index']
  #allocation1 [shape = 'u32[72,128]{1,0:T(1,128)}', space=vmem, size = 0x9000, scoped, tag = 'internal scratch']
  %s0 = inlined_call_operand.vmem [shape: f32[2,4,64], index: 0, kind: input, shape index: {}]
  %s1 = inlined_call_operand.vmem [shape: s32[2,4,3], index: 1, kind: input, shape index: {}]
  %s2 = inlined_call_operand.vmem [shape: f32[2,4,64], index: 2, kind: output, shape index: {}]
  %s3 = sld [smem:[#allocation0]]
  $region41: #{_lambda_.16} parent=0
    _
  %s5 = ssub.s32 1, %s3
  %s6 = scalar_select 0, %s5, %s3
  loop: start=0, step=1, limit=4
  $region2: #{_lambda_.16} parent=0 // loop_pre_header
    _
  $region3: #{_lambda_.16} parent=0 // loop_header
    %s8 = sphi 0, %s12
    %p9 = scmp.ge.s32.totalorder %s8, 4
    %s18 = sphi 0, %s20
    %s21 = sphi 0, %s18
    %s22 = sphi 0, %s21
    %s38 = sphi 0, %s22
    %s44 = sphi 0, %s46
    %s47 = sphi 0, %s44
    %s48 = sphi 0, %s47
    %s64 = sphi 0, %s48
    %s70 = sphi 0, %s72
    %s73 = sphi 0, %s70
    %s74 = sphi 0, %s73
    %s90 = sphi 0, %s74
  $region4: #{_lambda_.16} parent=0 // loop_header_branch
    %11 = sbr.rel (%p9) target = $region8
  $region5: #{_lambda_.16} parent=0 // loop_body
    %s13 = ssub.s32 %s8, 1
    %s14 = ssub.s32 %s8, 2
    %s15 = sadd.s32 %s8, 1
    %s16 = ssub.s32 %s8, %s15
    %p17 = scmp.eq.s32.totalorder %s16, 0
    %s19 = sadd.s32 %s18, 1
    %s20 = scalar_select %p17, %s18, %s19
    %p23 = pneg %p17
    %p24 = scmp.eq.s32.totalorder %s8, 1
    %p25 = por %p23, %p24
    %p26 = scmp.ne.s32.totalorder %s18, %s21
    %p27 = scmp.eq.s32.totalorder %s8, 0
    %p28 = por %p26, %p27
    %p29 = scmp.ne.s32.totalorder %s18, %s21
    %p30 = scmp.eq.s32.totalorder %s13, 1
    %p31 = por %p29, %p30
    %p32 = scmp.ne.s32.totalorder %s21, %s22
    %p33 = scmp.eq.s32.totalorder %s13, 0
    %p34 = por %p32, %p33
    %p35 = scmp.ne.s32.totalorder %s21, %s22
    %p36 = scmp.eq.s32.totalorder %s14, 1
    %p37 = por %p35, %p36
    %p39 = scmp.ne.s32.totalorder %s22, %s38
    %p40 = scmp.eq.s32.totalorder %s14, 0
    %p41 = por %p39, %p40
    %s42 = ssub.s32 %s8, %s15
    %p43 = scmp.eq.s32.totalorder %s42, 0
    %s45 = sadd.s32 %s44, 1
    %s46 = scalar_select %p43, %s44, %s45
    %p49 = pneg %p43
    %p50 = scmp.eq.s32.totalorder %s8, 1
    %p51 = por %p49, %p50
    %p52 = scmp.ne.s32.totalorder %s44, %s47
    %p53 = scmp.eq.s32.totalorder %s8, 0
    %p54 = por %p52, %p53
    %p55 = scmp.ne.s32.totalorder %s44, %s47
    %p56 = scmp.eq.s32.totalorder %s13, 1
    %p57 = por %p55, %p56
    %p58 = scmp.ne.s32.totalorder %s47, %s48
    %p59 = scmp.eq.s32.totalorder %s13, 0
    %p60 = por %p58, %p59
    %p61 = scmp.ne.s32.totalorder %s47, %s48
    %p62 = scmp.eq.s32.totalorder %s14, 1
    %p63 = por %p61, %p62
    %p65 = scmp.ne.s32.totalorder %s48, %s64
    %p66 = scmp.eq.s32.totalorder %s14, 0
    %p67 = por %p65, %p66
    %s68 = ssub.s32 %s8, %s15
    %p69 = scmp.eq.s32.totalorder %s68, 0
    %s71 = sadd.s32 %s70, 1
    %s72 = scalar_select %p69, %s70, %s71
    %p75 = pneg %p69
    %p76 = scmp.eq.s32.totalorder %s8, 1
    %p77 = por %p75, %p76
    %p78 = scmp.ne.s32.totalorder %s70, %s73
    %p79 = scmp.eq.s32.totalorder %s8, 0
    %p80 = por %p78, %p79
    %p81 = scmp.ne.s32.totalorder %s70, %s73
    %p82 = scmp.eq.s32.totalorder %s13, 1
    %p83 = por %p81, %p82
    %p84 = scmp.ne.s32.totalorder %s73, %s74
    %p85 = scmp.eq.s32.totalorder %s13, 0
    %p86 = por %p84, %p85
    %p87 = scmp.ne.s32.totalorder %s73, %s74
    %p88 = scmp.eq.s32.totalorder %s14, 1
    %p89 = por %p87, %p88
    %p91 = scmp.ne.s32.totalorder %s74, %s90
    %p92 = scmp.eq.s32.totalorder %s14, 0
    %p93 = por %p91, %p92
    %p94 = scmp.le.s32.totalorder 1, %s8
    %p95 = scmp.lt.s32.totalorder %s8, 3
    %p96 = pnand %p94, %p95
    %p97 = pneg %p96
    // Predicated region
    $region9: #{_lambda_.16} parent=5 // pred_check
      _
    $region10: #{_lambda_.16} parent=5 // pred_check_branch
      %99 = sbr.rel (%p96) target = $region12
    $region11: #{_lambda_.16} parent=5 // pred_region
      %s100 = ssub.s32 %s8, 1
    $region12: #{_lambda_.16} parent=5 // pred_fallthru
      _
    %p101 = scmp.lt.s32.totalorder %s8, 2
    // Predicated region
    $region13: #{_lambda_.16} parent=5 // pred_check
      %p102 = pneg %p101
    $region14: #{_lambda_.16} parent=5 // pred_check_branch
      %104 = sbr.rel (%p102) target = $region16
    $region15: #{_lambda_.16} parent=5 // pred_region
      // Predicated region
      $region17: #{_lambda_.16} parent=15 // pred_check
        %p105 = pneg %p28
      $region18: #{_lambda_.16} parent=15 // pred_check_branch
        %107 = sbr.rel (%p105) target = $region20
      $region19: #{_lambda_.16} parent=15 // pred_region
        %p108 = scmp.lt.s32.totalorder %s8, 1
        %s109 = scalar_select %p108, %s8, 1
        %s110 = smul.addr %s109, 4
        %s111 = scalar_lea.vmem %s0, %s110
      $region20: #{_lambda_.16} parent=15 // pred_fallthru
        _
      // Predicated region
      $region21: #{_lambda_.16} parent=15 // pred_check
        %p112 = pneg %p54
      $region22: #{_lambda_.16} parent=15 // pred_check_branch
        %114 = sbr.rel (%p112) target = $region24
      $region23: #{_lambda_.16} parent=15 // pred_region
        %p115 = scmp.lt.s32.totalorder %s8, 1
        %s116 = scalar_select %p115, %s8, 1
        %s117 = smul.addr %s116, 4
        %s118 = scalar_lea.vmem %s1, %s117
      $region24: #{_lambda_.16} parent=15 // pred_fallthru
        _
    $region16: #{_lambda_.16} parent=5 // pred_fallthru
      _
    %p119 = scmp.le.s32.totalorder 1, %s8
    %p120 = scmp.lt.s32.totalorder %s8, 3
    %p121 = pnand %p119, %p120
    %p122 = pneg %p121
    // Predicated region
    $region25: #{_lambda_.16} parent=5 // pred_check
      _
    $region26: #{_lambda_.16} parent=5 // pred_check_branch
      %124 = sbr.rel (%p121) target = $region28
    $region27: #{_lambda_.16} parent=5 // pred_region
      %s125 = ssub.s32 %s8, 1
      %p126 = scmp.lt.s32.totalorder %s13, 1
      %s127 = scalar_select %p126, %s13, 1
      %s128 = smul.addr %s127, 4
      %s129 = scalar_lea.vmem %s0, %s128
      %p130 = pneg %p34
      %p131 = pneg %p31
      %p132 = scmp.lt.s32.totalorder %s13, 1
      %s133 = scalar_select %p132, %s13, 1
      %s134 = smul.addr %s133, 4
      %s135 = scalar_lea.vmem %s1, %s134
      %p136 = pneg %p60
      %p137 = pneg %p57
      %p138 = pneg %p86
      %p139 = pneg %p83
      %p140 = scmp.lt.s32.totalorder %s13, 1
      %s141 = scalar_select %p140, %s13, 1
      %s142 = smul.addr %s141, 4
      %s143 = scalar_lea.vmem %s2, %s142
      %p144 = scmp.lt.s32.totalorder %s13, 1
      %s145 = scalar_select %p144, %s13, 1
      %s146 = smul.addr %s145, 4
      %s147 = scalar_lea.vmem %s0, %s146
      %p148 = scmp.lt.s32.totalorder %s13, 1
      %s149 = scalar_select %p148, %s13, 1
      %s150 = smul.addr %s149, 4
      %s151 = scalar_lea.vmem %s1, %s150
      %p152 = scmp.lt.s32.totalorder %s13, 1
      %s153 = scalar_select %p152, %s13, 1
      %s154 = smul.addr %s153, 4
      %s155 = scalar_lea.vmem %s2, %s154
      %v156 = vlaneseq
      %v157 = vand.u32 %v156, 127
      %v158 = vld [vmem:[%s147] sm:$0xf]
      %v159 = vld [vmem:[%s151] sm:$0xf]
      %160 = vset.pattern.permute.xlu0 0
      %161 = vperm.xlu0 %160, %v159
      %v162 = vpop.permute.xlu0 %161
      %vm163 = vcmp.eq.s32.totalorder %v162, %v157
      %v164 = vsel %vm163, 1, 0
      %v165 = vcvt.s32.f32 %v164
      %vm166 = vcmask 31744
      %v168 = vsel %vm166, %v165, 0
      %vm170 = vcmask 1043456
      %v172 = vsel %vm170, %v158, 0
      %174 = vmatpush.msra.mxu0 0.0
      %175 = vmatpush.msra.mxu0 0.0
      %176 = vmatpush.msra.mxu0 0.0
      %177 = vmatpush.msra.mxu0 0.0
      %178 = vmatpush.msra.mxu0 0.0
      %179 = vmatpush.msra.mxu0 0.0
      %180 = vmatpush.msra.mxu0 0.0
      %181 = vmatpush.msra.mxu0 0.0
      %182 = vmatpush.msra.mxu0 0.0
      %183 = vmatpush.msra.mxu0 0.0
      %184 = vmatpush.msra.mxu0 0.0
      %185 = vmatpush.msra.mxu0 0.0
      %186 = vmatpush.msra.mxu0 0.0
      %187 = vmatpush.msra.mxu0 0.0
      %188 = vmatpush.msra.mxu0 0.0
      %189 = vmatpush.msra.mxu0 %v172
      %190 = vmatmul.f32.gmra.mxu0 %v168
      %v191 = vpop.f32.mrf.mxu0
      %v192 = vadd.f32 0.0, %v191
      %193 = vdwg.mxu0
      %194 = vset.pattern.permute.xlu0 1
      %195 = vperm.xlu0 %194, %v159
      %v196 = vpop.permute.xlu0 %195
      %vm197 = vcmp.eq.s32.totalorder %v196, %v157
      %v198 = vsel %vm197, 1, 0
      %v199 = vcvt.s32.f32 %v198
      %v201 = vsel %vm166, %v199, 0
      %203 = vmatpush.msra.mxu0 0.0
      %204 = vmatpush.msra.mxu0 0.0
      %205 = vmatpush.msra.mxu0 0.0
      %206 = vmatpush.msra.mxu0 0.0
      %207 = vmatpush.msra.mxu0 0.0
      %208 = vmatpush.msra.mxu0 0.0
      %209 = vmatpush.msra.mxu0 0.0
      %210 = vmatpush.msra.mxu0 0.0
      %211 = vmatpush.msra.mxu0 0.0
      %212 = vmatpush.msra.mxu0 0.0
      %213 = vmatpush.msra.mxu0 0.0
      %214 = vmatpush.msra.mxu0 0.0
      %215 = vmatpush.msra.mxu0 0.0
      %216 = vmatpush.msra.mxu0 0.0
      %217 = vmatpush.msra.mxu0 0.0
      %218 = vmatpush.msra.mxu0 %v172
      %219 = vmatmul.f32.gmra.mxu0 %v201
      %v220 = vpop.f32.mrf.mxu0
      %v221 = vadd.f32 0.0, %v220
      %222 = vdwg.mxu0
      %v223 = vmax.f32 %v192, %v221
      %224 = vset.pattern.permute.xlu0 2
      %225 = vperm.xlu0 %224, %v159
      %v226 = vpop.permute.xlu0 %225
      %vm227 = vcmp.eq.s32.totalorder %v226, %v157
      %v228 = vsel %vm227, 1, 0
      %v229 = vcvt.s32.f32 %v228
      %v231 = vsel %vm166, %v229, 0
      %233 = vmatpush.msra.mxu0 0.0
      %234 = vmatpush.msra.mxu0 0.0
      %235 = vmatpush.msra.mxu0 0.0
      %236 = vmatpush.msra.mxu0 0.0
      %237 = vmatpush.msra.mxu0 0.0
      %238 = vmatpush.msra.mxu0 0.0
      %239 = vmatpush.msra.mxu0 0.0
      %240 = vmatpush.msra.mxu0 0.0
      %241 = vmatpush.msra.mxu0 0.0
      %242 = vmatpush.msra.mxu0 0.0
      %243 = vmatpush.msra.mxu0 0.0
      %244 = vmatpush.msra.mxu0 0.0
      %245 = vmatpush.msra.mxu0 0.0
      %246 = vmatpush.msra.mxu0 0.0
      %247 = vmatpush.msra.mxu0 0.0
      %248 = vmatpush.msra.mxu0 %v172
      %249 = vmatmul.f32.gmra.mxu0 %v231
      %v250 = vpop.f32.mrf.mxu0
      %v251 = vadd.f32 0.0, %v250
      %252 = vdwg.mxu0
      %v253 = vmax.f32 %v223, %v251
      %v254 = vsub.f32 %v253, %v158
      %vm255 = vcmask 519168
      %256 = vst.msk [vmem:[%s155] sm:$0xf] %vm255, %v254
      %p257 = scmp.lt.s32.totalorder %s13, 1
      %s258 = scalar_select %p257, %s13, 1
      %s259 = smul.addr %s258, 4
      %s260 = scalar_lea.vmem %s2, %s259
      // Predicated region
      $region29: #{_lambda_.16} parent=27 // pred_check
        %p261 = pneg %p83
      $region30: #{_lambda_.16} parent=27 // pred_check_branch
        %263 = sbr.rel (%p261) target = $region32
      $region31: #{_lambda_.16} parent=27 // pred_region
        _
      $region32: #{_lambda_.16} parent=27 // pred_fallthru
        _
    $region28: #{_lambda_.16} parent=5 // pred_fallthru
      _
    %p264 = scmp.le.s32.totalorder 2, %s8
    // Predicated region
    $region33: #{_lambda_.16} parent=5 // pred_check
      %p265 = pneg %p264
    $region34: #{_lambda_.16} parent=5 // pred_check_branch
      %267 = sbr.rel (%p265) target = $region36
    $region35: #{_lambda_.16} parent=5 // pred_region
      %s268 = ssub.s32 %s8, 2
      // Predicated region
      $region37: #{_lambda_.16} parent=35 // pred_check
        %p269 = pneg %p89
      $region38: #{_lambda_.16} parent=35 // pred_check_branch
        %271 = sbr.rel (%p269) target = $region40
      $region39: #{_lambda_.16} parent=35 // pred_region
        %p272 = scmp.lt.s32.totalorder %s14, 1
        %s273 = scalar_select %p272, %s14, 1
        %s274 = smul.addr %s273, 4
        %s275 = scalar_lea.vmem %s2, %s274
      $region40: #{_lambda_.16} parent=35 // pred_fallthru
        _
    $region36: #{_lambda_.16} parent=5 // pred_fallthru
      _
  $region6: #{_lambda_.16} parent=0 // loop_footer
    %s12 = sadd.s32 1, %s8
  $region7: #{_lambda_.16} parent=0 // loop_footer_branch
    %7 = sbr.rel target = $region3
  $region8: #{_lambda_.16} parent=0 // loop_exit
    _

// kernel: _lambda_.13
$region0: #{_lambda_.13}
  #allocation0 [shape = 'u32[]', space=smem, size = 0x4, offset = 0x4, fixed_abs, tag = 'smem constant byte address 0x4 - core index']
  #allocation1 [shape = 'u32[72,128]{1,0:T(1,128)}', space=vmem, size = 0x9000, scoped, tag = 'internal scratch']
  %s0 = inlined_call_operand.vmem [shape: f32[8,64], index: 0, kind: input, shape index: {}]
  %s1 = inlined_call_operand.vmem [shape: f32[8,64], index: 1, kind: input, shape index: {}]
  %s2 = inlined_call_operand.vmem [shape: f32[8,64], index: 2, kind: input, shape index: {}]
  %s3 = inlined_call_operand.vmem [shape: bf16[128,64], index: 3, kind: input, shape index: {}]
  %s4 = inlined_call_operand.vmem [shape: f32[1,64], index: 4, kind: input, shape index: {}]
  %s5 = inlined_call_operand.vmem [shape: bf16[64,64], index: 5, kind: input, shape index: {}]
  %s6 = inlined_call_operand.vmem [shape: f32[1,64], index: 6, kind: input, shape index: {}]
  %s7 = inlined_call_operand.vmem [shape: f32[1,64], index: 7, kind: input, shape index: {}]
  %s8 = inlined_call_operand.vmem [shape: f32[1,64], index: 8, kind: input, shape index: {}]
  %s9 = inlined_call_operand.vmem [shape: bf16[64,64], index: 9, kind: input, shape index: {}]
  %s10 = inlined_call_operand.vmem [shape: f32[1,64], index: 10, kind: input, shape index: {}]
  %s11 = inlined_call_operand.vmem [shape: bf16[64,256], index: 11, kind: input, shape index: {}]
  %s12 = inlined_call_operand.vmem [shape: f32[1,256], index: 12, kind: input, shape index: {}]
  %s13 = inlined_call_operand.vmem [shape: f32[1,256], index: 13, kind: input, shape index: {}, may-alias: {13,19}]
  %s14 = inlined_call_operand.vmem [shape: f32[1,256], index: 14, kind: input, shape index: {}, may-alias: {14,20}]
  %s15 = inlined_call_operand.vmem [shape: bf16[256,64], index: 15, kind: input, shape index: {}]
  %s16 = inlined_call_operand.vmem [shape: f32[1,64], index: 16, kind: input, shape index: {}]
  %s17 = inlined_call_operand.vmem [shape: bf16[64,256], index: 17, kind: input, shape index: {}]
  %s18 = inlined_call_operand.vmem [shape: f32[1,256], index: 18, kind: input, shape index: {}]
  %s19 = inlined_call_operand.vmem [shape: f32[1,256], index: 19, kind: input, shape index: {}, may-alias: {13,19}]
  %s20 = inlined_call_operand.vmem [shape: f32[1,256], index: 20, kind: input, shape index: {}, may-alias: {14,20}]
  %s21 = inlined_call_operand.vmem [shape: bf16[256,64], index: 21, kind: input, shape index: {}]
  %s22 = inlined_call_operand.vmem [shape: f32[1,64], index: 22, kind: input, shape index: {}]
  %s23 = inlined_call_operand.vmem [shape: f32[8,64], index: 23, kind: output, shape index: {}]
  %s24 = sld [smem:[#allocation0]]
  $region102: #{_lambda_.13} parent=0
    _
  %s26 = ssub.s32 1, %s24
  %s27 = scalar_select 0, %s26, %s24
  // Predicated region
  $region2: #{_lambda_.13} parent=0 // pred_check
    _
  $region3: #{_lambda_.13} parent=0 // pred_check_branch
    %29 = sbr.rel (0) target = $region5
  $region4: #{_lambda_.13} parent=0 // pred_region
    _
  $region5: #{_lambda_.13} parent=0 // pred_fallthru
    _
  // Predicated region
  $region6: #{_lambda_.13} parent=0 // pred_check
    _
  $region7: #{_lambda_.13} parent=0 // pred_check_branch
    %31 = sbr.rel (0) target = $region9
  $region8: #{_lambda_.13} parent=0 // pred_region
    _
  $region9: #{_lambda_.13} parent=0 // pred_fallthru
    _
  // Predicated region
  $region10: #{_lambda_.13} parent=0 // pred_check
    _
  $region11: #{_lambda_.13} parent=0 // pred_check_branch
    %33 = sbr.rel (0) target = $region13
  $region12: #{_lambda_.13} parent=0 // pred_region
    _
  $region13: #{_lambda_.13} parent=0 // pred_fallthru
    _
  // Predicated region
  $region14: #{_lambda_.13} parent=0 // pred_check
    _
  $region15: #{_lambda_.13} parent=0 // pred_check_branch
    %35 = sbr.rel (0) target = $region17
  $region16: #{_lambda_.13} parent=0 // pred_region
    _
  $region17: #{_lambda_.13} parent=0 // pred_fallthru
    _
  // Predicated region
  $region18: #{_lambda_.13} parent=0 // pred_check
    _
  $region19: #{_lambda_.13} parent=0 // pred_check_branch
    %37 = sbr.rel (0) target = $region21
  $region20: #{_lambda_.13} parent=0 // pred_region
    _
  $region21: #{_lambda_.13} parent=0 // pred_fallthru
    _
  // Predicated region
  $region22: #{_lambda_.13} parent=0 // pred_check
    _
  $region23: #{_lambda_.13} parent=0 // pred_check_branch
    %39 = sbr.rel (0) target = $region25
  $region24: #{_lambda_.13} parent=0 // pred_region
    _
  $region25: #{_lambda_.13} parent=0 // pred_fallthru
    _
  // Predicated region
  $region26: #{_lambda_.13} parent=0 // pred_check
    _
  $region27: #{_lambda_.13} parent=0 // pred_check_branch
    %41 = sbr.rel (0) target = $region29
  $region28: #{_lambda_.13} parent=0 // pred_region
    _
  $region29: #{_lambda_.13} parent=0 // pred_fallthru
    _
  // Predicated region
  $region30: #{_lambda_.13} parent=0 // pred_check
    _
  $region31: #{_lambda_.13} parent=0 // pred_check_branch
    %43 = sbr.rel (0) target = $region33
  $region32: #{_lambda_.13} parent=0 // pred_region
    _
  $region33: #{_lambda_.13} parent=0 // pred_fallthru
    _
  // Predicated region
  $region34: #{_lambda_.13} parent=0 // pred_check
    _
  $region35: #{_lambda_.13} parent=0 // pred_check_branch
    %45 = sbr.rel (0) target = $region37
  $region36: #{_lambda_.13} parent=0 // pred_region
    _
  $region37: #{_lambda_.13} parent=0 // pred_fallthru
    _
  // Predicated region
  $region38: #{_lambda_.13} parent=0 // pred_check
    _
  $region39: #{_lambda_.13} parent=0 // pred_check_branch
    %47 = sbr.rel (0) target = $region41
  $region40: #{_lambda_.13} parent=0 // pred_region
    _
  $region41: #{_lambda_.13} parent=0 // pred_fallthru
    _
  // Predicated region
  $region42: #{_lambda_.13} parent=0 // pred_check
    _
  $region43: #{_lambda_.13} parent=0 // pred_check_branch
    %49 = sbr.rel (0) target = $region45
  $region44: #{_lambda_.13} parent=0 // pred_region
    _
  $region45: #{_lambda_.13} parent=0 // pred_fallthru
    _
  // Predicated region
  $region46: #{_lambda_.13} parent=0 // pred_check
    _
  $region47: #{_lambda_.13} parent=0 // pred_check_branch
    %51 = sbr.rel (0) target = $region49
  $region48: #{_lambda_.13} parent=0 // pred_region
    _
  $region49: #{_lambda_.13} parent=0 // pred_fallthru
    _
  // Predicated region
  $region50: #{_lambda_.13} parent=0 // pred_check
    _
  $region51: #{_lambda_.13} parent=0 // pred_check_branch
    %53 = sbr.rel (0) target = $region53
  $region52: #{_lambda_.13} parent=0 // pred_region
    _
  $region53: #{_lambda_.13} parent=0 // pred_fallthru
    _
  // Predicated region
  $region54: #{_lambda_.13} parent=0 // pred_check
    _
  $region55: #{_lambda_.13} parent=0 // pred_check_branch
    %55 = sbr.rel (0) target = $region57
  $region56: #{_lambda_.13} parent=0 // pred_region
    _
  $region57: #{_lambda_.13} parent=0 // pred_fallthru
    _
  // Predicated region
  $region58: #{_lambda_.13} parent=0 // pred_check
    _
  $region59: #{_lambda_.13} parent=0 // pred_check_branch
    %57 = sbr.rel (0) target = $region61
  $region60: #{_lambda_.13} parent=0 // pred_region
    _
  $region61: #{_lambda_.13} parent=0 // pred_fallthru
    _
  // Predicated region
  $region62: #{_lambda_.13} parent=0 // pred_check
    _
  $region63: #{_lambda_.13} parent=0 // pred_check_branch
    %59 = sbr.rel (0) target = $region65
  $region64: #{_lambda_.13} parent=0 // pred_region
    _
  $region65: #{_lambda_.13} parent=0 // pred_fallthru
    _
  // Predicated region
  $region66: #{_lambda_.13} parent=0 // pred_check
    _
  $region67: #{_lambda_.13} parent=0 // pred_check_branch
    %61 = sbr.rel (0) target = $region69
  $region68: #{_lambda_.13} parent=0 // pred_region
    _
  $region69: #{_lambda_.13} parent=0 // pred_fallthru
    _
  // Predicated region
  $region70: #{_lambda_.13} parent=0 // pred_check
    _
  $region71: #{_lambda_.13} parent=0 // pred_check_branch
    %63 = sbr.rel (0) target = $region73
  $region72: #{_lambda_.13} parent=0 // pred_region
    _
  $region73: #{_lambda_.13} parent=0 // pred_fallthru
    _
  // Predicated region
  $region74: #{_lambda_.13} parent=0 // pred_check
    _
  $region75: #{_lambda_.13} parent=0 // pred_check_branch
    %65 = sbr.rel (0) target = $region77
  $region76: #{_lambda_.13} parent=0 // pred_region
    _
  $region77: #{_lambda_.13} parent=0 // pred_fallthru
    _
  // Predicated region
  $region78: #{_lambda_.13} parent=0 // pred_check
    _
  $region79: #{_lambda_.13} parent=0 // pred_check_branch
    %67 = sbr.rel (0) target = $region81
  $region80: #{_lambda_.13} parent=0 // pred_region
    _
  $region81: #{_lambda_.13} parent=0 // pred_fallthru
    _
  // Predicated region
  $region82: #{_lambda_.13} parent=0 // pred_check
    _
  $region83: #{_lambda_.13} parent=0 // pred_check_branch
    %69 = sbr.rel (0) target = $region85
  $region84: #{_lambda_.13} parent=0 // pred_region
    _
  $region85: #{_lambda_.13} parent=0 // pred_fallthru
    _
  // Predicated region
  $region86: #{_lambda_.13} parent=0 // pred_check
    _
  $region87: #{_lambda_.13} parent=0 // pred_check_branch
    %71 = sbr.rel (0) target = $region89
  $region88: #{_lambda_.13} parent=0 // pred_region
    _
  $region89: #{_lambda_.13} parent=0 // pred_fallthru
    _
  // Predicated region
  $region90: #{_lambda_.13} parent=0 // pred_check
    _
  $region91: #{_lambda_.13} parent=0 // pred_check_branch
    %73 = sbr.rel (0) target = $region93
  $region92: #{_lambda_.13} parent=0 // pred_region
    _
  $region93: #{_lambda_.13} parent=0 // pred_fallthru
    _
  %v75 = vld [vmem:[%s0] sm:$0xff]
  %v76 = vld [vmem:[%s1] sm:$0xff]
  %78 = vrot.lane.b32.xlu0 %v76, 64
  %v79 = vpop.permute.xlu0 %78
  %vm81 = vcmask 523264
  %v82 = vsel %vm81, %v75, %v79
  %v83 = vld [vmem:[%s3] sm:$0xf]
  %v84 = vld [vmem:[%s3 + $0x4] sm:$0xf]
  %v85 = vld [vmem:[%s3 + $0x8] sm:$0xf]
  %v86 = vld [vmem:[%s3 + $0xc] sm:$0xf]
  %v87 = vld [vmem:[%s3 + $0x10] sm:$0xf]
  %v88 = vld [vmem:[%s3 + $0x14] sm:$0xf]
  %v89 = vld [vmem:[%s3 + $0x18] sm:$0xf]
  %v90 = vld [vmem:[%s3 + $0x1c] sm:$0xf]
  %v91 = vld [vmem:[%s3 + $0x20] sm:$0xf]
  %v92 = vld [vmem:[%s3 + $0x24] sm:$0xf]
  %v93 = vld [vmem:[%s3 + $0x28] sm:$0xf]
  %v94 = vld [vmem:[%s3 + $0x2c] sm:$0xf]
  %v95 = vld [vmem:[%s3 + $0x30] sm:$0xf]
  %v96 = vld [vmem:[%s3 + $0x34] sm:$0xf]
  %v97 = vld [vmem:[%s3 + $0x38] sm:$0xf]
  %v98 = vld [vmem:[%s3 + $0x3c] sm:$0xf]
  %v99 = vpack.c.bf16 %v82, %v82
  %v100 = vld [vmem:[%s4] sm:$0x1]
  %v102 = vperm.slane %v100, 0
  %v120 = vunpack.c.l.b16 %v83
  %v121 = vunpack.c.l.b16 %v84
  %v122 = vunpack.c.l.b16 %v85
  %v123 = vunpack.c.l.b16 %v86
  %v124 = vunpack.c.l.b16 %v87
  %v125 = vunpack.c.l.b16 %v88
  %v126 = vunpack.c.l.b16 %v89
  %v127 = vunpack.c.l.b16 %v90
  %v128 = vunpack.c.l.b16 %v91
  %v129 = vunpack.c.l.b16 %v92
  %v130 = vunpack.c.l.b16 %v93
  %v131 = vunpack.c.l.b16 %v94
  %v132 = vunpack.c.l.b16 %v95
  %v133 = vunpack.c.l.b16 %v96
  %v134 = vunpack.c.l.b16 %v97
  %v135 = vunpack.c.l.b16 %v98
  %v136 = vpack.c.b16 %v121, %v120
  %v137 = vpack.c.b16 %v123, %v122
  %v138 = vpack.c.b16 %v125, %v124
  %v139 = vpack.c.b16 %v127, %v126
  %v140 = vpack.c.b16 %v129, %v128
  %v141 = vpack.c.b16 %v131, %v130
  %v142 = vpack.c.b16 %v133, %v132
  %v143 = vpack.c.b16 %v135, %v134
  %152 = vmatpush.bf16.msra.mxu0 %v143
  %153 = vmatpush.bf16.msra.mxu0 %v142
  %154 = vmatpush.bf16.msra.mxu0 %v141
  %155 = vmatpush.bf16.msra.mxu0 %v140
  %156 = vmatpush.bf16.msra.mxu0 %v139
  %157 = vmatpush.bf16.msra.mxu0 %v138
  %158 = vmatpush.bf16.msra.mxu0 %v137
  %159 = vmatpush.bf16.msra.mxu0 %v136
  %160 = vmatmul.bf16.gmra.mxu0 %v99
  %v161 = vpop.f32.mrf.mxu0
  %v162 = vadd.f32 %v102, %v161
  %v163 = vpop.f32.mrf.mxu0
  %164 = vdwg.mxu0
  %v165 = vmul.f32 %v162, 0.5
  %v166 = vmul.f32 %v162, 0.70710677
  %v167 = vmul.f32 %v166, %v166
  %v168 = vmin.f32 16.0, %v167
  %v169 = vmul.f32 %v168, 2.1237322e-06
  %v170 = vadd.f32 %v169, 0.00028619796
  %v171 = vmul.f32 %v168, %v170
  %v172 = vadd.f32 %v171, 0.0036580483
  %v173 = vmul.f32 %v168, %v172
  %v174 = vadd.f32 %v173, 0.05243302
  %v175 = vmul.f32 %v168, %v174
  %v176 = vadd.f32 %v175, 0.18741608
  %v177 = vmul.f32 %v168, %v176
  %v178 = vadd.f32 %v177, 1.1283791
  %v179 = vmul.f32 %v166, %v178
  %v180 = vmul.f32 %v168, 3.8918573e-05
  %v181 = vadd.f32 %v180, 0.001143296
  %v182 = vmul.f32 %v168, %v181
  %v183 = vadd.f32 %v182, 0.014752088
  %v184 = vmul.f32 %v168, %v183
  %v185 = vadd.f32 %v184, 0.112945676
  %v186 = vmul.f32 %v168, %v185
  %v187 = vadd.f32 %v186, 0.4994258
  %v188 = vmul.f32 %v168, %v187
  %v189 = vadd.f32 %v188, 1.0
  %v190 = vrcp.pop %v189
  %v191 = vmul.f32 %v189, %v190
  %v192 = vsub.f32 1.0, %v191
  %v193 = vmul.f32 %v190, %v192
  %v194 = vadd.f32 %v190, %v193
  %vm195 = vweird.f32 %v189
  %vm196 = vweird.f32 %v190
  %vm197 = vmor %vm195, %vm196
  %v198 = vsel %vm197, %v190, %v194
  %v199 = vand.u32 2147483647, %v189
  %vm200 = vcmp.eq.f32.partialorder %v199, 8.507059e+37
  %v201 = vand.u32 %v189, 2147483648
  %v202 = vor.u32 1.1754944e-38, %v201
  %v203 = vsel %vm200, %v202, %v198
  %v204 = vmul.f32 %v179, %v203
  %v205 = vmin.f32 %v204, 1.0
  %v206 = vmax.f32 %v205, -1.0
  %v207 = vadd.f32 %v206, 1.0
  %v208 = vmul.f32 %v165, %v207
  %v209 = vld [vmem:[%s5] sm:$0xf]
  %v210 = vld [vmem:[%s5 + $0x4] sm:$0xf]
  %v211 = vld [vmem:[%s5 + $0x8] sm:$0xf]
  %v212 = vld [vmem:[%s5 + $0xc] sm:$0xf]
  %v213 = vld [vmem:[%s5 + $0x10] sm:$0xf]
  %v214 = vld [vmem:[%s5 + $0x14] sm:$0xf]
  %v215 = vld [vmem:[%s5 + $0x18] sm:$0xf]
  %v216 = vld [vmem:[%s5 + $0x1c] sm:$0xf]
  %v217 = vpack.c.bf16 %v208, %v208
  %v218 = vld [vmem:[%s6] sm:$0x1]
  %v220 = vperm.slane %v218, 0
  %v230 = vunpack.c.l.b16 %v209
  %v231 = vunpack.c.l.b16 %v210
  %v232 = vunpack.c.l.b16 %v211
  %v233 = vunpack.c.l.b16 %v212
  %v234 = vunpack.c.l.b16 %v213
  %v235 = vunpack.c.l.b16 %v214
  %v236 = vunpack.c.l.b16 %v215
  %v237 = vunpack.c.l.b16 %v216
  %v238 = vpack.c.b16 %v231, %v230
  %v239 = vpack.c.b16 %v233, %v232
  %v240 = vpack.c.b16 %v235, %v234
  %v241 = vpack.c.b16 %v237, %v236
  %v247 = vsel %vm81, %v217, 0
  %249 = vmatpush.bf16.msra.mxu0 0
  %250 = vmatpush.bf16.msra.mxu0 0
  %251 = vmatpush.bf16.msra.mxu0 0
  %252 = vmatpush.bf16.msra.mxu0 0
  %253 = vmatpush.bf16.msra.mxu0 %v241
  %254 = vmatpush.bf16.msra.mxu0 %v240
  %255 = vmatpush.bf16.msra.mxu0 %v239
  %256 = vmatpush.bf16.msra.mxu0 %v238
  %257 = vmatmul.bf16.gmra.mxu0 %v247
  %v258 = vpop.f32.mrf.mxu0
  %v259 = vadd.f32 %v220, %v258
  %v260 = vpop.f32.mrf.mxu0
  %261 = vdwg.mxu0
  %v262 = vld [vmem:[%s7] sm:$0x1]
  %v263 = vld [vmem:[%s8] sm:$0x1]
  %v264 = vsel %vm81, %v259, 0.0
  %v265 = vrot.slane %v264, 4
  %v266 = vadd.f32 %v264, %v265
  %v267 = vrot.slane %v266, 2
  %v268 = vadd.f32 %v266, %v267
  %v269 = vrot.slane %v268, 1
  %v270 = vadd.f32 %v268, %v269
  %v271 = vrcp.pop 8.0
  %v272 = vmul.f32 8.0, %v271
  %v273 = vsub.f32 1.0, %v272
  %v274 = vmul.f32 %v271, %v273
  %v275 = vadd.f32 %v271, %v274
  %vm276 = vweird.f32 %v271
  %v277 = vsel %vm276, %v271, %v275
  %v278 = vmul.f32 %v270, %v277
  %v279 = vsub.f32 %v259, %v278
  %v280 = vmul.f32 %v279, %v279
  %v281 = vsel %vm81, %v280, 0.0
  %v282 = vrot.slane %v281, 4
  %v283 = vadd.f32 %v281, %v282
  %v284 = vrot.slane %v283, 2
  %v285 = vadd.f32 %v283, %v284
  %v286 = vrot.slane %v285, 1
  %v287 = vadd.f32 %v285, %v286
  %v288 = vmul.f32 %v287, %v277
  %v289 = vadd.f32 %v288, 1e-05
  %v290 = vrsqrt.pop %v289
  %v291 = vmul.f32 %v290, %v289
  %v292 = vmul.f32 %v291, %v290
  %v293 = vmul.f32 0.5, %v292
  %v294 = vsub.f32 1.5, %v293
  %v295 = vmul.f32 %v290, %v294
  %vm296 = vweird.f32 %v289
  %vm297 = vweird.f32 %v290
  %vm298 = vmor %vm296, %vm297
  %v299 = vsel %vm298, %v290, %v295
  %v300 = vmul.f32 %v279, %v299
  %v302 = vperm.slane %v262, 0
  %v304 = vmul.f32 %v300, %v302
  %v306 = vperm.slane %v263, 0
  %v308 = vadd.f32 %v304, %v306
  %v309 = vmul.f32 %v308, 0.5
  %v310 = vmul.f32 %v308, 0.70710677
  %v311 = vmul.f32 %v310, %v310
  %v312 = vmin.f32 16.0, %v311
  %v313 = vmul.f32 %v312, 2.1237322e-06
  %v314 = vadd.f32 %v313, 0.00028619796
  %v315 = vmul.f32 %v312, %v314
  %v316 = vadd.f32 %v315, 0.0036580483
  %v317 = vmul.f32 %v312, %v316
  %v318 = vadd.f32 %v317, 0.05243302
  %v319 = vmul.f32 %v312, %v318
  %v320 = vadd.f32 %v319, 0.18741608
  %v321 = vmul.f32 %v312, %v320
  %v322 = vadd.f32 %v321, 1.1283791
  %v323 = vmul.f32 %v310, %v322
  %v324 = vmul.f32 %v312, 3.8918573e-05
  %v325 = vadd.f32 %v324, 0.001143296
  %v326 = vmul.f32 %v312, %v325
  %v327 = vadd.f32 %v326, 0.014752088
  %v328 = vmul.f32 %v312, %v327
  %v329 = vadd.f32 %v328, 0.112945676
  %v330 = vmul.f32 %v312, %v329
  %v331 = vadd.f32 %v330, 0.4994258
  %v332 = vmul.f32 %v312, %v331
  %v333 = vadd.f32 %v332, 1.0
  %v334 = vrcp.pop %v333
  %v335 = vmul.f32 %v333, %v334
  %v336 = vsub.f32 1.0, %v335
  %v337 = vmul.f32 %v334, %v336
  %v338 = vadd.f32 %v334, %v337
  %vm339 = vweird.f32 %v333
  %vm340 = vweird.f32 %v334
  %vm341 = vmor %vm339, %vm340
  %v342 = vsel %vm341, %v334, %v338
  %v343 = vand.u32 2147483647, %v333
  %vm344 = vcmp.eq.f32.partialorder %v343, 8.507059e+37
  %v345 = vand.u32 %v333, 2147483648
  %v346 = vor.u32 1.1754944e-38, %v345
  %v347 = vsel %vm344, %v346, %v342
  %v348 = vmul.f32 %v323, %v347
  %v349 = vmin.f32 %v348, 1.0
  %v350 = vmax.f32 %v349, -1.0
  %v351 = vadd.f32 %v350, 1.0
  %v352 = vmul.f32 %v309, %v351
  %v353 = vld [vmem:[%s9] sm:$0xf]
  %v354 = vld [vmem:[%s9 + $0x4] sm:$0xf]
  %v355 = vld [vmem:[%s9 + $0x8] sm:$0xf]
  %v356 = vld [vmem:[%s9 + $0xc] sm:$0xf]
  %v357 = vld [vmem:[%s9 + $0x10] sm:$0xf]
  %v358 = vld [vmem:[%s9 + $0x14] sm:$0xf]
  %v359 = vld [vmem:[%s9 + $0x18] sm:$0xf]
  %v360 = vld [vmem:[%s9 + $0x1c] sm:$0xf]
  %v361 = vpack.c.bf16 %v352, %v352
  %v362 = vld [vmem:[%s10] sm:$0x1]
  %v364 = vperm.slane %v362, 0
  %v374 = vunpack.c.l.b16 %v353
  %v375 = vunpack.c.l.b16 %v354
  %v376 = vunpack.c.l.b16 %v355
  %v377 = vunpack.c.l.b16 %v356
  %v378 = vunpack.c.l.b16 %v357
  %v379 = vunpack.c.l.b16 %v358
  %v380 = vunpack.c.l.b16 %v359
  %v381 = vunpack.c.l.b16 %v360
  %v382 = vpack.c.b16 %v375, %v374
  %v383 = vpack.c.b16 %v377, %v376
  %v384 = vpack.c.b16 %v379, %v378
  %v385 = vpack.c.b16 %v381, %v380
  %v391 = vsel %vm81, %v361, 0
  %393 = vmatpush.bf16.msra.mxu0 0
  %394 = vmatpush.bf16.msra.mxu0 0
  %395 = vmatpush.bf16.msra.mxu0 0
  %396 = vmatpush.bf16.msra.mxu0 0
  %397 = vmatpush.bf16.msra.mxu0 %v385
  %398 = vmatpush.bf16.msra.mxu0 %v384
  %399 = vmatpush.bf16.msra.mxu0 %v383
  %400 = vmatpush.bf16.msra.mxu0 %v382
  %401 = vmatmul.bf16.gmra.mxu0 %v391
  %v402 = vpop.f32.mrf.mxu0
  %v403 = vadd.f32 %v364, %v402
  %v404 = vpop.f32.mrf.mxu0
  %405 = vdwg.mxu0
  %v406 = vadd.f32 %v403, %v208
  %v407 = vld [vmem:[%s2] sm:$0xff]
  %v408 = vadd.f32 %v406, %v407
  %v409 = vld [vmem:[%s11] sm:$0xff]
  %v410 = vld [vmem:[%s11 + $0x8] sm:$0xff]
  %v411 = vld [vmem:[%s11 + $0x10] sm:$0xff]
  %v412 = vld [vmem:[%s11 + $0x18] sm:$0xff]
  %v413 = vld [vmem:[%s11 + $0x20] sm:$0xff]
  %v414 = vld [vmem:[%s11 + $0x28] sm:$0xff]
  %v415 = vld [vmem:[%s11 + $0x30] sm:$0xff]
  %v416 = vld [vmem:[%s11 + $0x38] sm:$0xff]
  %v417 = vpack.c.bf16 %v408, %v408
  %v418 = vld [vmem:[%s12] sm:$0x3]
  %v420 = vperm.slane %v418, 0
  %v421 = vperm.slane %v418, 1
  %v432 = vunpack.c.l.b16 %v409
  %v433 = vunpack.c.h.b16 %v409
  %v434 = vunpack.c.l.b16 %v410
  %v435 = vunpack.c.h.b16 %v410
  %v436 = vunpack.c.l.b16 %v411
  %v437 = vunpack.c.h.b16 %v411
  %v438 = vunpack.c.l.b16 %v412
  %v439 = vunpack.c.h.b16 %v412
  %v440 = vunpack.c.l.b16 %v413
  %v441 = vunpack.c.h.b16 %v413
  %v442 = vunpack.c.l.b16 %v414
  %v443 = vunpack.c.h.b16 %v414
  %v444 = vunpack.c.l.b16 %v415
  %v445 = vunpack.c.h.b16 %v415
  %v446 = vunpack.c.l.b16 %v416
  %v447 = vunpack.c.h.b16 %v416
  %v448 = vpack.c.b16 %v434, %v432
  %v449 = vpack.c.b16 %v435, %v433
  %v450 = vpack.c.b16 %v438, %v436
  %v451 = vpack.c.b16 %v439, %v437
  %v452 = vpack.c.b16 %v442, %v440
  %v453 = vpack.c.b16 %v443, %v441
  %v454 = vpack.c.b16 %v446, %v444
  %v455 = vpack.c.b16 %v447, %v445
  %v465 = vsel %vm81, %v417, 0
  %467 = vmatpush.bf16.msra.mxu0 0
  %468 = vmatpush.bf16.msra.mxu0 0
  %469 = vmatpush.bf16.msra.mxu0 0
  %470 = vmatpush.bf16.msra.mxu0 0
  %471 = vmatpush.bf16.msra.mxu0 %v454
  %472 = vmatpush.bf16.msra.mxu0 %v452
  %473 = vmatpush.bf16.msra.mxu0 %v450
  %474 = vmatpush.bf16.msra.mxu0 %v448
  %475 = vmatmul.bf16.gmra.mxu0 %v465
  %v476 = vpop.f32.mrf.mxu0
  %v477 = vadd.f32 %v420, %v476
  %v478 = vpop.f32.mrf.mxu0
  %479 = vdwg.mxu0
  %480 = vmatpush.bf16.msra.mxu0 0
  %481 = vmatpush.bf16.msra.mxu0 0
  %482 = vmatpush.bf16.msra.mxu0 0
  %483 = vmatpush.bf16.msra.mxu0 0
  %484 = vmatpush.bf16.msra.mxu0 %v455
  %485 = vmatpush.bf16.msra.mxu0 %v453
  %486 = vmatpush.bf16.msra.mxu0 %v451
  %487 = vmatpush.bf16.msra.mxu0 %v449
  %488 = vmatmul.bf16.gmra.mxu0 %v465
  %v489 = vpop.f32.mrf.mxu0
  %v490 = vadd.f32 %v421, %v489
  %v491 = vpop.f32.mrf.mxu0
  %492 = vdwg.mxu0
  %v493 = vld [vmem:[%s13] sm:$0x3]
  %v494 = vld [vmem:[%s14] sm:$0x3]
  %v495 = vrot.slane %v477, 4
  %v496 = vadd.f32 %v477, %v495
  %v497 = vrot.slane %v496, 2
  %v498 = vadd.f32 %v496, %v497
  %v499 = vrot.slane %v498, 1
  %v500 = vadd.f32 %v498, %v499
  %v501 = vrot.slane %v490, 4
  %v502 = vadd.f32 %v490, %v501
  %v503 = vrot.slane %v502, 2
  %v504 = vadd.f32 %v502, %v503
  %v505 = vrot.slane %v504, 1
  %v506 = vadd.f32 %v504, %v505
  %v507 = vmul.f32 %v500, %v277
  %v508 = vmul.f32 %v506, %v277
  %v509 = vsub.f32 %v477, %v507
  %v510 = vsub.f32 %v490, %v508
  %v511 = vmul.f32 %v509, %v509
  %v512 = vmul.f32 %v510, %v510
  %v513 = vrot.slane %v511, 4
  %v514 = vadd.f32 %v511, %v513
  %v515 = vrot.slane %v514, 2
  %v516 = vadd.f32 %v514, %v515
  %v517 = vrot.slane %v516, 1
  %v518 = vadd.f32 %v516, %v517
  %v519 = vrot.slane %v512, 4
  %v520 = vadd.f32 %v512, %v519
  %v521 = vrot.slane %v520, 2
  %v522 = vadd.f32 %v520, %v521
  %v523 = vrot.slane %v522, 1
  %v524 = vadd.f32 %v522, %v523
  %v525 = vmul.f32 %v518, %v277
  %v526 = vmul.f32 %v524, %v277
  %v527 = vadd.f32 %v525, 1e-05
  %v528 = vadd.f32 %v526, 1e-05
  %v529 = vrsqrt.pop %v527
  %v530 = vmul.f32 %v529, %v527
  %v531 = vmul.f32 %v530, %v529
  %v532 = vmul.f32 0.5, %v531
  %v533 = vsub.f32 1.5, %v532
  %v534 = vmul.f32 %v529, %v533
  %vm535 = vweird.f32 %v527
  %vm536 = vweird.f32 %v529
  %vm537 = vmor %vm535, %vm536
  %v538 = vsel %vm537, %v529, %v534
  %v539 = vrsqrt.pop %v528
  %v540 = vmul.f32 %v539, %v528
  %v541 = vmul.f32 %v540, %v539
  %v542 = vmul.f32 0.5, %v541
  %v543 = vsub.f32 1.5, %v542
  %v544 = vmul.f32 %v539, %v543
  %vm545 = vweird.f32 %v528
  %vm546 = vweird.f32 %v539
  %vm547 = vmor %vm545, %vm546
  %v548 = vsel %vm547, %v539, %v544
  %v549 = vmul.f32 %v509, %v538
  %v550 = vmul.f32 %v510, %v548
  %v552 = vperm.slane %v493, 0
  %v553 = vperm.slane %v493, 1
  %v556 = vmul.f32 %v549, %v552
  %v557 = vmul.f32 %v550, %v553
  %v559 = vperm.slane %v494, 0
  %v560 = vperm.slane %v494, 1
  %v563 = vadd.f32 %v556, %v559
  %v564 = vadd.f32 %v557, %v560
  %v565 = vmul.f32 %v563, 0.5
  %v566 = vmul.f32 %v564, 0.5
  %v567 = vmul.f32 %v563, 0.70710677
  %v568 = vmul.f32 %v564, 0.70710677
  %v569 = vmul.f32 %v567, %v567
  %v570 = vmin.f32 16.0, %v569
  %v571 = vmul.f32 %v570, 2.1237322e-06
  %v572 = vadd.f32 %v571, 0.00028619796
  %v573 = vmul.f32 %v570, %v572
  %v574 = vadd.f32 %v573, 0.0036580483
  %v575 = vmul.f32 %v570, %v574
  %v576 = vadd.f32 %v575, 0.05243302
  %v577 = vmul.f32 %v570, %v576
  %v578 = vadd.f32 %v577, 0.18741608
  %v579 = vmul.f32 %v570, %v578
  %v580 = vadd.f32 %v579, 1.1283791
  %v581 = vmul.f32 %v567, %v580
  %v582 = vmul.f32 %v570, 3.8918573e-05
  %v583 = vadd.f32 %v582, 0.001143296
  %v584 = vmul.f32 %v570, %v583
  %v585 = vadd.f32 %v584, 0.014752088
  %v586 = vmul.f32 %v570, %v585
  %v587 = vadd.f32 %v586, 0.112945676
  %v588 = vmul.f32 %v570, %v587
  %v589 = vadd.f32 %v588, 0.4994258
  %v590 = vmul.f32 %v570, %v589
  %v591 = vadd.f32 %v590, 1.0
  %v592 = vrcp.pop %v591
  %v593 = vmul.f32 %v591, %v592
  %v594 = vsub.f32 1.0, %v593
  %v595 = vmul.f32 %v592, %v594
  %v596 = vadd.f32 %v592, %v595
  %vm597 = vweird.f32 %v591
  %vm598 = vweird.f32 %v592
  %vm599 = vmor %vm597, %vm598
  %v600 = vsel %vm599, %v592, %v596
  %v601 = vand.u32 2147483647, %v591
  %vm602 = vcmp.eq.f32.partialorder %v601, 8.507059e+37
  %v603 = vand.u32 %v591, 2147483648
  %v604 = vor.u32 1.1754944e-38, %v603
  %v605 = vsel %vm602, %v604, %v600
  %v606 = vmul.f32 %v581, %v605
  %v607 = vmin.f32 %v606, 1.0
  %v608 = vmax.f32 %v607, -1.0
  %v609 = vmul.f32 %v568, %v568
  %v610 = vmin.f32 16.0, %v609
  %v611 = vmul.f32 %v610, 2.1237322e-06
  %v612 = vadd.f32 %v611, 0.00028619796
  %v613 = vmul.f32 %v610, %v612
  %v614 = vadd.f32 %v613, 0.0036580483
  %v615 = vmul.f32 %v610, %v614
  %v616 = vadd.f32 %v615, 0.05243302
  %v617 = vmul.f32 %v610, %v616
  %v618 = vadd.f32 %v617, 0.18741608
  %v619 = vmul.f32 %v610, %v618
  %v620 = vadd.f32 %v619, 1.1283791
  %v621 = vmul.f32 %v568, %v620
  %v622 = vmul.f32 %v610, 3.8918573e-05
  %v623 = vadd.f32 %v622, 0.001143296
  %v624 = vmul.f32 %v610, %v623
  %v625 = vadd.f32 %v624, 0.014752088
  %v626 = vmul.f32 %v610, %v625
  %v627 = vadd.f32 %v626, 0.112945676
  %v628 = vmul.f32 %v610, %v627
  %v629 = vadd.f32 %v628, 0.4994258
  %v630 = vmul.f32 %v610, %v629
  %v631 = vadd.f32 %v630, 1.0
  %v632 = vrcp.pop %v631
  %v633 = vmul.f32 %v631, %v632
  %v634 = vsub.f32 1.0, %v633
  %v635 = vmul.f32 %v632, %v634
  %v636 = vadd.f32 %v632, %v635
  %vm637 = vweird.f32 %v631
  %vm638 = vweird.f32 %v632
  %vm639 = vmor %vm637, %vm638
  %v640 = vsel %vm639, %v632, %v636
  %v641 = vand.u32 2147483647, %v631
  %vm642 = vcmp.eq.f32.partialorder %v641, 8.507059e+37
  %v643 = vand.u32 %v631, 2147483648
  %v644 = vor.u32 1.1754944e-38, %v643
  %v645 = vsel %vm642, %v644, %v640
  %v646 = vmul.f32 %v621, %v645
  %v647 = vmin.f32 %v646, 1.0
  %v648 = vmax.f32 %v647, -1.0
  %v649 = vadd.f32 %v608, 1.0
  %v650 = vadd.f32 %v648, 1.0
  %v651 = vmul.f32 %v565, %v649
  %v652 = vmul.f32 %v566, %v650
  %v653 = vld [vmem:[%s15] sm:$0xf]
  %v654 = vld [vmem:[%s15 + $0x4] sm:$0xf]
  %v655 = vld [vmem:[%s15 + $0x8] sm:$0xf]
  %v656 = vld [vmem:[%s15 + $0xc] sm:$0xf]
  %v657 = vld [vmem:[%s15 + $0x10] sm:$0xf]
  %v658 = vld [vmem:[%s15 + $0x14] sm:$0xf]
  %v659 = vld [vmem:[%s15 + $0x18] sm:$0xf]
  %v660 = vld [vmem:[%s15 + $0x1c] sm:$0xf]
  %v661 = vld [vmem:[%s15 + $0x20] sm:$0xf]
  %v662 = vld [vmem:[%s15 + $0x24] sm:$0xf]
  %v663 = vld [vmem:[%s15 + $0x28] sm:$0xf]
  %v664 = vld [vmem:[%s15 + $0x2c] sm:$0xf]
  %v665 = vld [vmem:[%s15 + $0x30] sm:$0xf]
  %v666 = vld [vmem:[%s15 + $0x34] sm:$0xf]
  %v667 = vld [vmem:[%s15 + $0x38] sm:$0xf]
  %v668 = vld [vmem:[%s15 + $0x3c] sm:$0xf]
  %v669 = vld [vmem:[%s15 + $0x40] sm:$0xf]
  %v670 = vld [vmem:[%s15 + $0x44] sm:$0xf]
  %v671 = vld [vmem:[%s15 + $0x48] sm:$0xf]
  %v672 = vld [vmem:[%s15 + $0x4c] sm:$0xf]
  %v673 = vld [vmem:[%s15 + $0x50] sm:$0xf]
  %v674 = vld [vmem:[%s15 + $0x54] sm:$0xf]
  %v675 = vld [vmem:[%s15 + $0x58] sm:$0xf]
  %v676 = vld [vmem:[%s15 + $0x5c] sm:$0xf]
  %v677 = vld [vmem:[%s15 + $0x60] sm:$0xf]
  %v678 = vld [vmem:[%s15 + $0x64] sm:$0xf]
  %v679 = vld [vmem:[%s15 + $0x68] sm:$0xf]
  %v680 = vld [vmem:[%s15 + $0x6c] sm:$0xf]
  %v681 = vld [vmem:[%s15 + $0x70] sm:$0xf]
  %v682 = vld [vmem:[%s15 + $0x74] sm:$0xf]
  %v683 = vld [vmem:[%s15 + $0x78] sm:$0xf]
  %v684 = vld [vmem:[%s15 + $0x7c] sm:$0xf]
  %v685 = vpack.c.bf16 %v651, %v651
  %v686 = vpack.c.bf16 %v652, %v652
  %v687 = vld [vmem:[%s16] sm:$0x1]
  %v689 = vperm.slane %v687, 0
  %v723 = vunpack.c.l.b16 %v653
  %v724 = vunpack.c.l.b16 %v654
  %v725 = vunpack.c.l.b16 %v655
  %v726 = vunpack.c.l.b16 %v656
  %v727 = vunpack.c.l.b16 %v657
  %v728 = vunpack.c.l.b16 %v658
  %v729 = vunpack.c.l.b16 %v659
  %v730 = vunpack.c.l.b16 %v660
  %v731 = vunpack.c.l.b16 %v661
  %v732 = vunpack.c.l.b16 %v662
  %v733 = vunpack.c.l.b16 %v663
  %v734 = vunpack.c.l.b16 %v664
  %v735 = vunpack.c.l.b16 %v665
  %v736 = vunpack.c.l.b16 %v666
  %v737 = vunpack.c.l.b16 %v667
  %v738 = vunpack.c.l.b16 %v668
  %v739 = vunpack.c.l.b16 %v669
  %v740 = vunpack.c.l.b16 %v670
  %v741 = vunpack.c.l.b16 %v671
  %v742 = vunpack.c.l.b16 %v672
  %v743 = vunpack.c.l.b16 %v673
  %v744 = vunpack.c.l.b16 %v674
  %v745 = vunpack.c.l.b16 %v675
  %v746 = vunpack.c.l.b16 %v676
  %v747 = vunpack.c.l.b16 %v677
  %v748 = vunpack.c.l.b16 %v678
  %v749 = vunpack.c.l.b16 %v679
  %v750 = vunpack.c.l.b16 %v680
  %v751 = vunpack.c.l.b16 %v681
  %v752 = vunpack.c.l.b16 %v682
  %v753 = vunpack.c.l.b16 %v683
  %v754 = vunpack.c.l.b16 %v684
  %v755 = vpack.c.b16 %v724, %v723
  %v756 = vpack.c.b16 %v726, %v725
  %v757 = vpack.c.b16 %v728, %v727
  %v758 = vpack.c.b16 %v730, %v729
  %v759 = vpack.c.b16 %v732, %v731
  %v760 = vpack.c.b16 %v734, %v733
  %v761 = vpack.c.b16 %v736, %v735
  %v762 = vpack.c.b16 %v738, %v737
  %v763 = vpack.c.b16 %v740, %v739
  %v764 = vpack.c.b16 %v742, %v741
  %v765 = vpack.c.b16 %v744, %v743
  %v766 = vpack.c.b16 %v746, %v745
  %v767 = vpack.c.b16 %v748, %v747
  %v768 = vpack.c.b16 %v750, %v749
  %v769 = vpack.c.b16 %v752, %v751
  %v770 = vpack.c.b16 %v754, %v753
  %787 = vmatpush.bf16.msra.mxu0 %v762
  %788 = vmatpush.bf16.msra.mxu0 %v761
  %789 = vmatpush.bf16.msra.mxu0 %v760
  %790 = vmatpush.bf16.msra.mxu0 %v759
  %791 = vmatpush.bf16.msra.mxu0 %v758
  %792 = vmatpush.bf16.msra.mxu0 %v757
  %793 = vmatpush.bf16.msra.mxu0 %v756
  %794 = vmatpush.bf16.msra.mxu0 %v755
  %795 = vmatmul.bf16.gmra.mxu0 %v685
  %v796 = vpop.f32.mrf.mxu0
  %v797 = vadd.f32 %v689, %v796
  %v798 = vpop.f32.mrf.mxu0
  %799 = vdwg.mxu0
  %800 = vmatpush.bf16.msra.mxu0 %v770
  %801 = vmatpush.bf16.msra.mxu0 %v769
  %802 = vmatpush.bf16.msra.mxu0 %v768
  %803 = vmatpush.bf16.msra.mxu0 %v767
  %804 = vmatpush.bf16.msra.mxu0 %v766
  %805 = vmatpush.bf16.msra.mxu0 %v765
  %806 = vmatpush.bf16.msra.mxu0 %v764
  %807 = vmatpush.bf16.msra.mxu0 %v763
  %808 = vmatmul.bf16.gmra.mxu0 %v686
  %v809 = vpop.f32.mrf.mxu0
  %v810 = vadd.f32 %v797, %v809
  %v811 = vpop.f32.mrf.mxu0
  %812 = vdwg.mxu0
  %v813 = vadd.f32 %v810, %v408
  %v814 = vmul.f32 %v813, 0.5
  %v815 = vmul.f32 %v813, 0.70710677
  %v816 = vmul.f32 %v815, %v815
  %v817 = vmin.f32 16.0, %v816
  %v818 = vmul.f32 %v817, 2.1237322e-06
  %v819 = vadd.f32 %v818, 0.00028619796
  %v820 = vmul.f32 %v817, %v819
  %v821 = vadd.f32 %v820, 0.0036580483
  %v822 = vmul.f32 %v817, %v821
  %v823 = vadd.f32 %v822, 0.05243302
  %v824 = vmul.f32 %v817, %v823
  %v825 = vadd.f32 %v824, 0.18741608
  %v826 = vmul.f32 %v817, %v825
  %v827 = vadd.f32 %v826, 1.1283791
  %v828 = vmul.f32 %v815, %v827
  %v829 = vmul.f32 %v817, 3.8918573e-05
  %v830 = vadd.f32 %v829, 0.001143296
  %v831 = vmul.f32 %v817, %v830
  %v832 = vadd.f32 %v831, 0.014752088
  %v833 = vmul.f32 %v817, %v832
  %v834 = vadd.f32 %v833, 0.112945676
  %v835 = vmul.f32 %v817, %v834
  %v836 = vadd.f32 %v835, 0.4994258
  %v837 = vmul.f32 %v817, %v836
  %v838 = vadd.f32 %v837, 1.0
  %v839 = vrcp.pop %v838
  %v840 = vmul.f32 %v838, %v839
  %v841 = vsub.f32 1.0, %v840
  %v842 = vmul.f32 %v839, %v841
  %v843 = vadd.f32 %v839, %v842
  %vm844 = vweird.f32 %v838
  %vm845 = vweird.f32 %v839
  %vm846 = vmor %vm844, %vm845
  %v847 = vsel %vm846, %v839, %v843
  %v848 = vand.u32 2147483647, %v838
  %vm849 = vcmp.eq.f32.partialorder %v848, 8.507059e+37
  %v850 = vand.u32 %v838, 2147483648
  %v851 = vor.u32 1.1754944e-38, %v850
  %v852 = vsel %vm849, %v851, %v847
  %v853 = vmul.f32 %v828, %v852
  %v854 = vmin.f32 %v853, 1.0
  %v855 = vmax.f32 %v854, -1.0
  %v856 = vadd.f32 %v855, 1.0
  %v857 = vmul.f32 %v814, %v856
  %v858 = vld [vmem:[%s17] sm:$0xff]
  %v859 = vld [vmem:[%s17 + $0x8] sm:$0xff]
  %v860 = vld [vmem:[%s17 + $0x10] sm:$0xff]
  %v861 = vld [vmem:[%s17 + $0x18] sm:$0xff]
  %v862 = vld [vmem:[%s17 + $0x20] sm:$0xff]
  %v863 = vld [vmem:[%s17 + $0x28] sm:$0xff]
  %v864 = vld [vmem:[%s17 + $0x30] sm:$0xff]
  %v865 = vld [vmem:[%s17 + $0x38] sm:$0xff]
  %v866 = vpack.c.bf16 %v857, %v857
  %v867 = vld [vmem:[%s18] sm:$0x3]
  %v869 = vperm.slane %v867, 0
  %v870 = vperm.slane %v867, 1
  %v881 = vunpack.c.l.b16 %v858
  %v882 = vunpack.c.h.b16 %v858
  %v883 = vunpack.c.l.b16 %v859
  %v884 = vunpack.c.h.b16 %v859
  %v885 = vunpack.c.l.b16 %v860
  %v886 = vunpack.c.h.b16 %v860
  %v887 = vunpack.c.l.b16 %v861
  %v888 = vunpack.c.h.b16 %v861
  %v889 = vunpack.c.l.b16 %v862
  %v890 = vunpack.c.h.b16 %v862
  %v891 = vunpack.c.l.b16 %v863
  %v892 = vunpack.c.h.b16 %v863
  %v893 = vunpack.c.l.b16 %v864
  %v894 = vunpack.c.h.b16 %v864
  %v895 = vunpack.c.l.b16 %v865
  %v896 = vunpack.c.h.b16 %v865
  %v897 = vpack.c.b16 %v883, %v881
  %v898 = vpack.c.b16 %v884, %v882
  %v899 = vpack.c.b16 %v887, %v885
  %v900 = vpack.c.b16 %v888, %v886
  %v901 = vpack.c.b16 %v891, %v889
  %v902 = vpack.c.b16 %v892, %v890
  %v903 = vpack.c.b16 %v895, %v893
  %v904 = vpack.c.b16 %v896, %v894
  %v914 = vsel %vm81, %v866, 0
  %916 = vmatpush.bf16.msra.mxu0 0
  %917 = vmatpush.bf16.msra.mxu0 0
  %918 = vmatpush.bf16.msra.mxu0 0
  %919 = vmatpush.bf16.msra.mxu0 0
  %920 = vmatpush.bf16.msra.mxu0 %v903
  %921 = vmatpush.bf16.msra.mxu0 %v901
  %922 = vmatpush.bf16.msra.mxu0 %v899
  %923 = vmatpush.bf16.msra.mxu0 %v897
  %924 = vmatmul.bf16.gmra.mxu0 %v914
  %v925 = vpop.f32.mrf.mxu0
  %v926 = vadd.f32 %v869, %v925
  %v927 = vpop.f32.mrf.mxu0
  %928 = vdwg.mxu0
  %929 = vmatpush.bf16.msra.mxu0 0
  %930 = vmatpush.bf16.msra.mxu0 0
  %931 = vmatpush.bf16.msra.mxu0 0
  %932 = vmatpush.bf16.msra.mxu0 0
  %933 = vmatpush.bf16.msra.mxu0 %v904
  %934 = vmatpush.bf16.msra.mxu0 %v902
  %935 = vmatpush.bf16.msra.mxu0 %v900
  %936 = vmatpush.bf16.msra.mxu0 %v898
  %937 = vmatmul.bf16.gmra.mxu0 %v914
  %v938 = vpop.f32.mrf.mxu0
  %v939 = vadd.f32 %v870, %v938
  %v940 = vpop.f32.mrf.mxu0
  %941 = vdwg.mxu0
  %v942 = vld [vmem:[%s19] sm:$0x3]
  %v943 = vld [vmem:[%s20] sm:$0x3]
  %v944 = vrot.slane %v926, 4
  %v945 = vadd.f32 %v926, %v944
  %v946 = vrot.slane %v945, 2
  %v947 = vadd.f32 %v945, %v946
  %v948 = vrot.slane %v947, 1
  %v949 = vadd.f32 %v947, %v948
  %v950 = vrot.slane %v939, 4
  %v951 = vadd.f32 %v939, %v950
  %v952 = vrot.slane %v951, 2
  %v953 = vadd.f32 %v951, %v952
  %v954 = vrot.slane %v953, 1
  %v955 = vadd.f32 %v953, %v954
  %v956 = vmul.f32 %v949, %v277
  %v957 = vmul.f32 %v955, %v277
  %v958 = vsub.f32 %v926, %v956
  %v959 = vsub.f32 %v939, %v957
  %v960 = vmul.f32 %v958, %v958
  %v961 = vmul.f32 %v959, %v959
  %v962 = vrot.slane %v960, 4
  %v963 = vadd.f32 %v960, %v962
  %v964 = vrot.slane %v963, 2
  %v965 = vadd.f32 %v963, %v964
  %v966 = vrot.slane %v965, 1
  %v967 = vadd.f32 %v965, %v966
  %v968 = vrot.slane %v961, 4
  %v969 = vadd.f32 %v961, %v968
  %v970 = vrot.slane %v969, 2
  %v971 = vadd.f32 %v969, %v970
  %v972 = vrot.slane %v971, 1
  %v973 = vadd.f32 %v971, %v972
  %v974 = vmul.f32 %v967, %v277
  %v975 = vmul.f32 %v973, %v277
  %v976 = vadd.f32 %v974, 1e-05
  %v977 = vadd.f32 %v975, 1e-05
  %v978 = vrsqrt.pop %v976
  %v979 = vmul.f32 %v978, %v976
  %v980 = vmul.f32 %v979, %v978
  %v981 = vmul.f32 0.5, %v980
  %v982 = vsub.f32 1.5, %v981
  %v983 = vmul.f32 %v978, %v982
  %vm984 = vweird.f32 %v976
  %vm985 = vweird.f32 %v978
  %vm986 = vmor %vm984, %vm985
  %v987 = vsel %vm986, %v978, %v983
  %v988 = vrsqrt.pop %v977
  %v989 = vmul.f32 %v988, %v977
  %v990 = vmul.f32 %v989, %v988
  %v991 = vmul.f32 0.5, %v990
  %v992 = vsub.f32 1.5, %v991
  %v993 = vmul.f32 %v988, %v992
  %vm994 = vweird.f32 %v977
  %vm995 = vweird.f32 %v988
  %vm996 = vmor %vm994, %vm995
  %v997 = vsel %vm996, %v988, %v993
  %v998 = vmul.f32 %v958, %v987
  %v999 = vmul.f32 %v959, %v997
  %v1001 = vperm.slane %v942, 0
  %v1002 = vperm.slane %v942, 1
  %v1005 = vmul.f32 %v998, %v1001
  %v1006 = vmul.f32 %v999, %v1002
  %v1008 = vperm.slane %v943, 0
  %v1009 = vperm.slane %v943, 1
  %v1012 = vadd.f32 %v1005, %v1008
  %v1013 = vadd.f32 %v1006, %v1009
  %v1014 = vmul.f32 %v1012, 0.5
  %v1015 = vmul.f32 %v1013, 0.5
  %v1016 = vmul.f32 %v1012, 0.70710677
  %v1017 = vmul.f32 %v1013, 0.70710677
  %v1018 = vmul.f32 %v1016, %v1016
  %v1019 = vmin.f32 16.0, %v1018
  %v1020 = vmul.f32 %v1019, 2.1237322e-06
  %v1021 = vadd.f32 %v1020, 0.00028619796
  %v1022 = vmul.f32 %v1019, %v1021
  %v1023 = vadd.f32 %v1022, 0.0036580483
  %v1024 = vmul.f32 %v1019, %v1023
  %v1025 = vadd.f32 %v1024, 0.05243302
  %v1026 = vmul.f32 %v1019, %v1025
  %v1027 = vadd.f32 %v1026, 0.18741608
  %v1028 = vmul.f32 %v1019, %v1027
  %v1029 = vadd.f32 %v1028, 1.1283791
  %v1030 = vmul.f32 %v1016, %v1029
  %v1031 = vmul.f32 %v1019, 3.8918573e-05
  %v1032 = vadd.f32 %v1031, 0.001143296
  %v1033 = vmul.f32 %v1019, %v1032
  %v1034 = vadd.f32 %v1033, 0.014752088
  %v1035 = vmul.f32 %v1019, %v1034
  %v1036 = vadd.f32 %v1035, 0.112945676
  %v1037 = vmul.f32 %v1019, %v1036
  %v1038 = vadd.f32 %v1037, 0.4994258
  %v1039 = vmul.f32 %v1019, %v1038
  %v1040 = vadd.f32 %v1039, 1.0
  %v1041 = vrcp.pop %v1040
  %v1042 = vmul.f32 %v1040, %v1041
  %v1043 = vsub.f32 1.0, %v1042
  %v1044 = vmul.f32 %v1041, %v1043
  %v1045 = vadd.f32 %v1041, %v1044
  %vm1046 = vweird.f32 %v1040
  %vm1047 = vweird.f32 %v1041
  %vm1048 = vmor %vm1046, %vm1047
  %v1049 = vsel %vm1048, %v1041, %v1045
  %v1050 = vand.u32 2147483647, %v1040
  %vm1051 = vcmp.eq.f32.partialorder %v1050, 8.507059e+37
  %v1052 = vand.u32 %v1040, 2147483648
  %v1053 = vor.u32 1.1754944e-38, %v1052
  %v1054 = vsel %vm1051, %v1053, %v1049
  %v1055 = vmul.f32 %v1030, %v1054
  %v1056 = vmin.f32 %v1055, 1.0
  %v1057 = vmax.f32 %v1056, -1.0
  %v1058 = vmul.f32 %v1017, %v1017
  %v1059 = vmin.f32 16.0, %v1058
  %v1060 = vmul.f32 %v1059, 2.1237322e-06
  %v1061 = vadd.f32 %v1060, 0.00028619796
  %v1062 = vmul.f32 %v1059, %v1061
  %v1063 = vadd.f32 %v1062, 0.0036580483
  %v1064 = vmul.f32 %v1059, %v1063
  %v1065 = vadd.f32 %v1064, 0.05243302
  %v1066 = vmul.f32 %v1059, %v1065
  %v1067 = vadd.f32 %v1066, 0.18741608
  %v1068 = vmul.f32 %v1059, %v1067
  %v1069 = vadd.f32 %v1068, 1.1283791
  %v1070 = vmul.f32 %v1017, %v1069
  %v1071 = vmul.f32 %v1059, 3.8918573e-05
  %v1072 = vadd.f32 %v1071, 0.001143296
  %v1073 = vmul.f32 %v1059, %v1072
  %v1074 = vadd.f32 %v1073, 0.014752088
  %v1075 = vmul.f32 %v1059, %v1074
  %v1076 = vadd.f32 %v1075, 0.112945676
  %v1077 = vmul.f32 %v1059, %v1076
  %v1078 = vadd.f32 %v1077, 0.4994258
  %v1079 = vmul.f32 %v1059, %v1078
  %v1080 = vadd.f32 %v1079, 1.0
  %v1081 = vrcp.pop %v1080
  %v1082 = vmul.f32 %v1080, %v1081
  %v1083 = vsub.f32 1.0, %v1082
  %v1084 = vmul.f32 %v1081, %v1083
  %v1085 = vadd.f32 %v1081, %v1084
  %vm1086 = vweird.f32 %v1080
  %vm1087 = vweird.f32 %v1081
  %vm1088 = vmor %vm1086, %vm1087
  %v1089 = vsel %vm1088, %v1081, %v1085
  %v1090 = vand.u32 2147483647, %v1080
  %vm1091 = vcmp.eq.f32.partialorder %v1090, 8.507059e+37
  %v1092 = vand.u32 %v1080, 2147483648
  %v1093 = vor.u32 1.1754944e-38, %v1092
  %v1094 = vsel %vm1091, %v1093, %v1089
  %v1095 = vmul.f32 %v1070, %v1094
  %v1096 = vmin.f32 %v1095, 1.0
  %v1097 = vmax.f32 %v1096, -1.0
  %v1098 = vadd.f32 %v1057, 1.0
  %v1099 = vadd.f32 %v1097, 1.0
  %v1100 = vmul.f32 %v1014, %v1098
  %v1101 = vmul.f32 %v1015, %v1099
  %v1102 = vld [vmem:[%s21] sm:$0xf]
  %v1103 = vld [vmem:[%s21 + $0x4] sm:$0xf]
  %v1104 = vld [vmem:[%s21 + $0x8] sm:$0xf]
  %v1105 = vld [vmem:[%s21 + $0xc] sm:$0xf]
  %v1106 = vld [vmem:[%s21 + $0x10] sm:$0xf]
  %v1107 = vld [vmem:[%s21 + $0x14] sm:$0xf]
  %v1108 = vld [vmem:[%s21 + $0x18] sm:$0xf]
  %v1109 = vld [vmem:[%s21 + $0x1c] sm:$0xf]
  %v1110 = vld [vmem:[%s21 + $0x20] sm:$0xf]
  %v1111 = vld [vmem:[%s21 + $0x24] sm:$0xf]
  %v1112 = vld [vmem:[%s21 + $0x28] sm:$0xf]
  %v1113 = vld [vmem:[%s21 + $0x2c] sm:$0xf]
  %v1114 = vld [vmem:[%s21 + $0x30] sm:$0xf]
  %v1115 = vld [vmem:[%s21 + $0x34] sm:$0xf]
  %v1116 = vld [vmem:[%s21 + $0x38] sm:$0xf]
  %v1117 = vld [vmem:[%s21 + $0x3c] sm:$0xf]
  %v1118 = vld [vmem:[%s21 + $0x40] sm:$0xf]
  %v1119 = vld [vmem:[%s21 + $0x44] sm:$0xf]
  %v1120 = vld [vmem:[%s21 + $0x48] sm:$0xf]
  %v1121 = vld [vmem:[%s21 + $0x4c] sm:$0xf]
  %v1122 = vld [vmem:[%s21 + $0x50] sm:$0xf]
  %v1123 = vld [vmem:[%s21 + $0x54] sm:$0xf]
  %v1124 = vld [vmem:[%s21 + $0x58] sm:$0xf]
  %v1125 = vld [vmem:[%s21 + $0x5c] sm:$0xf]
  %v1126 = vld [vmem:[%s21 + $0x60] sm:$0xf]
  %v1127 = vld [vmem:[%s21 + $0x64] sm:$0xf]
  %v1128 = vld [vmem:[%s21 + $0x68] sm:$0xf]
  %v1129 = vld [vmem:[%s21 + $0x6c] sm:$0xf]
  %v1130 = vld [vmem:[%s21 + $0x70] sm:$0xf]
  %v1131 = vld [vmem:[%s21 + $0x74] sm:$0xf]
  %v1132 = vld [vmem:[%s21 + $0x78] sm:$0xf]
  %v1133 = vld [vmem:[%s21 + $0x7c] sm:$0xf]
  %v1134 = vpack.c.bf16 %v1100, %v1100
  %v1135 = vpack.c.bf16 %v1101, %v1101
  %v1136 = vld [vmem:[%s22] sm:$0x1]
  %v1138 = vperm.slane %v1136, 0
  %v1172 = vunpack.c.l.b16 %v1102
  %v1173 = vunpack.c.l.b16 %v1103
  %v1174 = vunpack.c.l.b16 %v1104
  %v1175 = vunpack.c.l.b16 %v1105
  %v1176 = vunpack.c.l.b16 %v1106
  %v1177 = vunpack.c.l.b16 %v1107
  %v1178 = vunpack.c.l.b16 %v1108
  %v1179 = vunpack.c.l.b16 %v1109
  %v1180 = vunpack.c.l.b16 %v1110
  %v1181 = vunpack.c.l.b16 %v1111
  %v1182 = vunpack.c.l.b16 %v1112
  %v1183 = vunpack.c.l.b16 %v1113
  %v1184 = vunpack.c.l.b16 %v1114
  %v1185 = vunpack.c.l.b16 %v1115
  %v1186 = vunpack.c.l.b16 %v1116
  %v1187 = vunpack.c.l.b16 %v1117
  %v1188 = vunpack.c.l.b16 %v1118
  %v1189 = vunpack.c.l.b16 %v1119
  %v1190 = vunpack.c.l.b16 %v1120
  %v1191 = vunpack.c.l.b16 %v1121
  %v1192 = vunpack.c.l.b16 %v1122
  %v1193 = vunpack.c.l.b16 %v1123
  %v1194 = vunpack.c.l.b16 %v1124
  %v1195 = vunpack.c.l.b16 %v1125
  %v1196 = vunpack.c.l.b16 %v1126
  %v1197 = vunpack.c.l.b16 %v1127
  %v1198 = vunpack.c.l.b16 %v1128
  %v1199 = vunpack.c.l.b16 %v1129
  %v1200 = vunpack.c.l.b16 %v1130
  %v1201 = vunpack.c.l.b16 %v1131
  %v1202 = vunpack.c.l.b16 %v1132
  %v1203 = vunpack.c.l.b16 %v1133
  %v1204 = vpack.c.b16 %v1173, %v1172
  %v1205 = vpack.c.b16 %v1175, %v1174
  %v1206 = vpack.c.b16 %v1177, %v1176
  %v1207 = vpack.c.b16 %v1179, %v1178
  %v1208 = vpack.c.b16 %v1181, %v1180
  %v1209 = vpack.c.b16 %v1183, %v1182
  %v1210 = vpack.c.b16 %v1185, %v1184
  %v1211 = vpack.c.b16 %v1187, %v1186
  %v1212 = vpack.c.b16 %v1189, %v1188
  %v1213 = vpack.c.b16 %v1191, %v1190
  %v1214 = vpack.c.b16 %v1193, %v1192
  %v1215 = vpack.c.b16 %v1195, %v1194
  %v1216 = vpack.c.b16 %v1197, %v1196
  %v1217 = vpack.c.b16 %v1199, %v1198
  %v1218 = vpack.c.b16 %v1201, %v1200
  %v1219 = vpack.c.b16 %v1203, %v1202
  %1236 = vmatpush.bf16.msra.mxu0 %v1211
  %1237 = vmatpush.bf16.msra.mxu0 %v1210
  %1238 = vmatpush.bf16.msra.mxu0 %v1209
  %1239 = vmatpush.bf16.msra.mxu0 %v1208
  %1240 = vmatpush.bf16.msra.mxu0 %v1207
  %1241 = vmatpush.bf16.msra.mxu0 %v1206
  %1242 = vmatpush.bf16.msra.mxu0 %v1205
  %1243 = vmatpush.bf16.msra.mxu0 %v1204
  %1244 = vmatmul.bf16.gmra.mxu0 %v1134
  %v1245 = vpop.f32.mrf.mxu0
  %v1246 = vadd.f32 %v1138, %v1245
  %v1247 = vpop.f32.mrf.mxu0
  %1248 = vdwg.mxu0
  %1249 = vmatpush.bf16.msra.mxu0 %v1219
  %1250 = vmatpush.bf16.msra.mxu0 %v1218
  %1251 = vmatpush.bf16.msra.mxu0 %v1217
  %1252 = vmatpush.bf16.msra.mxu0 %v1216
  %1253 = vmatpush.bf16.msra.mxu0 %v1215
  %1254 = vmatpush.bf16.msra.mxu0 %v1214
  %1255 = vmatpush.bf16.msra.mxu0 %v1213
  %1256 = vmatpush.bf16.msra.mxu0 %v1212
  %1257 = vmatmul.bf16.gmra.mxu0 %v1135
  %v1258 = vpop.f32.mrf.mxu0
  %v1259 = vadd.f32 %v1246, %v1258
  %v1260 = vpop.f32.mrf.mxu0
  %1261 = vdwg.mxu0
  %v1262 = vadd.f32 %v1259, %v857
  %v1263 = vadd.f32 %v1262, %v408
  %1264 = vst.msk [vmem:[%s23] sm:$0xff] %vm81, %v1263
  // Predicated region
  $region94: #{_lambda_.13} parent=0 // pred_check
    _
  $region95: #{_lambda_.13} parent=0 // pred_check_branch
    %1266 = sbr.rel (0) target = $region97
  $region96: #{_lambda_.13} parent=0 // pred_region
    _
  $region97: #{_lambda_.13} parent=0 // pred_fallthru
    _
  // Predicated region
  $region98: #{_lambda_.13} parent=0 // pred_check
    _
  $region99: #{_lambda_.13} parent=0 // pred_check_branch
    %1268 = sbr.rel (0) target = $region101
  $region100: #{_lambda_.13} parent=0 // pred_region
    _
  $region101: #{_lambda_.13} parent=0 // pred_fallthru
    _

// kernel: _lambda_.17
$region0: #{_lambda_.17}
  #allocation0 [shape = 'u32[]', space=smem, size = 0x4, offset = 0x4, fixed_abs, tag = 'smem constant byte address 0x4 - core index']
  #allocation1 [shape = 'u32[72,128]{1,0:T(1,128)}', space=vmem, size = 0x9000, scoped, tag = 'internal scratch']
  %s0 = inlined_call_operand.vmem [shape: f32[8,64], index: 0, kind: input, shape index: {}]
  %s1 = inlined_call_operand.vmem [shape: f32[8,64], index: 1, kind: input, shape index: {}]
  %s2 = inlined_call_operand.vmem [shape: f32[8,64], index: 2, kind: input, shape index: {}]
  %s3 = inlined_call_operand.vmem [shape: bf16[128,64], index: 3, kind: input, shape index: {}]
  %s4 = inlined_call_operand.vmem [shape: f32[1,64], index: 4, kind: input, shape index: {}]
  %s5 = inlined_call_operand.vmem [shape: bf16[64,64], index: 5, kind: input, shape index: {}]
  %s6 = inlined_call_operand.vmem [shape: f32[1,64], index: 6, kind: input, shape index: {}]
  %s7 = inlined_call_operand.vmem [shape: f32[1,64], index: 7, kind: input, shape index: {}]
  %s8 = inlined_call_operand.vmem [shape: f32[1,64], index: 8, kind: input, shape index: {}]
  %s9 = inlined_call_operand.vmem [shape: bf16[64,64], index: 9, kind: input, shape index: {}]
  %s10 = inlined_call_operand.vmem [shape: f32[1,64], index: 10, kind: input, shape index: {}]
  %s11 = inlined_call_operand.vmem [shape: bf16[64,256], index: 11, kind: input, shape index: {}]
  %s12 = inlined_call_operand.vmem [shape: f32[1,256], index: 12, kind: input, shape index: {}]
  %s13 = inlined_call_operand.vmem [shape: f32[1,256], index: 13, kind: input, shape index: {}, may-alias: {13,19}]
  %s14 = inlined_call_operand.vmem [shape: f32[1,256], index: 14, kind: input, shape index: {}, may-alias: {14,20}]
  %s15 = inlined_call_operand.vmem [shape: bf16[256,64], index: 15, kind: input, shape index: {}]
  %s16 = inlined_call_operand.vmem [shape: f32[1,64], index: 16, kind: input, shape index: {}]
  %s17 = inlined_call_operand.vmem [shape: bf16[64,256], index: 17, kind: input, shape index: {}]
  %s18 = inlined_call_operand.vmem [shape: f32[1,256], index: 18, kind: input, shape index: {}]
  %s19 = inlined_call_operand.vmem [shape: f32[1,256], index: 19, kind: input, shape index: {}, may-alias: {13,19}]
  %s20 = inlined_call_operand.vmem [shape: f32[1,256], index: 20, kind: input, shape index: {}, may-alias: {14,20}]
  %s21 = inlined_call_operand.vmem [shape: bf16[256,64], index: 21, kind: input, shape index: {}]
  %s22 = inlined_call_operand.vmem [shape: f32[1,64], index: 22, kind: input, shape index: {}]
  %s23 = inlined_call_operand.hbm [shape: f32[8,64], index: 23, kind: output, shape index: {}]
  %s24 = sld [smem:[#allocation0]]
  $region102: #{_lambda_.17} parent=0
    _
  %s26 = ssub.s32 1, %s24
  %s27 = scalar_select 0, %s26, %s24
  $region1: #{_lambda_.17} parent=0
    #allocation2 [shape = 'u8[4096]{0}', space=vmem, size = 0x1000, scoped, tag = 'output window, operand 0, single buffered']
    #allocation3 [shape = 's32[1]{0}', space=sflag, size = 0x4, scoped, tag = 'scoped memory for _lambda_.17']
    %28 = vsyncpa [#allocation3], 0
    // Predicated region
    $region2: #{_lambda_.17} parent=1 // pred_check
      _
    $region3: #{_lambda_.17} parent=1 // pred_check_branch
      %30 = sbr.rel (0) target = $region5
    $region4: #{_lambda_.17} parent=1 // pred_region
      _
    $region5: #{_lambda_.17} parent=1 // pred_fallthru
      _
    // Predicated region
    $region6: #{_lambda_.17} parent=1 // pred_check
      _
    $region7: #{_lambda_.17} parent=1 // pred_check_branch
      %32 = sbr.rel (0) target = $region9
    $region8: #{_lambda_.17} parent=1 // pred_region
      _
    $region9: #{_lambda_.17} parent=1 // pred_fallthru
      _
    // Predicated region
    $region10: #{_lambda_.17} parent=1 // pred_check
      _
    $region11: #{_lambda_.17} parent=1 // pred_check_branch
      %34 = sbr.rel (0) target = $region13
    $region12: #{_lambda_.17} parent=1 // pred_region
      _
    $region13: #{_lambda_.17} parent=1 // pred_fallthru
      _
    // Predicated region
    $region14: #{_lambda_.17} parent=1 // pred_check
      _
    $region15: #{_lambda_.17} parent=1 // pred_check_branch
      %36 = sbr.rel (0) target = $region17
    $region16: #{_lambda_.17} parent=1 // pred_region
      _
    $region17: #{_lambda_.17} parent=1 // pred_fallthru
      _
    // Predicated region
    $region18: #{_lambda_.17} parent=1 // pred_check
      _
    $region19: #{_lambda_.17} parent=1 // pred_check_branch
      %38 = sbr.rel (0) target = $region21
    $region20: #{_lambda_.17} parent=1 // pred_region
      _
    $region21: #{_lambda_.17} parent=1 // pred_fallthru
      _
    // Predicated region
    $region22: #{_lambda_.17} parent=1 // pred_check
      _
    $region23: #{_lambda_.17} parent=1 // pred_check_branch
      %40 = sbr.rel (0) target = $region25
    $region24: #{_lambda_.17} parent=1 // pred_region
      _
    $region25: #{_lambda_.17} parent=1 // pred_fallthru
      _
    // Predicated region
    $region26: #{_lambda_.17} parent=1 // pred_check
      _
    $region27: #{_lambda_.17} parent=1 // pred_check_branch
      %42 = sbr.rel (0) target = $region29
    $region28: #{_lambda_.17} parent=1 // pred_region
      _
    $region29: #{_lambda_.17} parent=1 // pred_fallthru
      _
    // Predicated region
    $region30: #{_lambda_.17} parent=1 // pred_check
      _
    $region31: #{_lambda_.17} parent=1 // pred_check_branch
      %44 = sbr.rel (0) target = $region33
    $region32: #{_lambda_.17} parent=1 // pred_region
      _
    $region33: #{_lambda_.17} parent=1 // pred_fallthru
      _
    // Predicated region
    $region34: #{_lambda_.17} parent=1 // pred_check
      _
    $region35: #{_lambda_.17} parent=1 // pred_check_branch
      %46 = sbr.rel (0) target = $region37
    $region36: #{_lambda_.17} parent=1 // pred_region
      _
    $region37: #{_lambda_.17} parent=1 // pred_fallthru
      _
    // Predicated region
    $region38: #{_lambda_.17} parent=1 // pred_check
      _
    $region39: #{_lambda_.17} parent=1 // pred_check_branch
      %48 = sbr.rel (0) target = $region41
    $region40: #{_lambda_.17} parent=1 // pred_region
      _
    $region41: #{_lambda_.17} parent=1 // pred_fallthru
      _
    // Predicated region
    $region42: #{_lambda_.17} parent=1 // pred_check
      _
    $region43: #{_lambda_.17} parent=1 // pred_check_branch
      %50 = sbr.rel (0) target = $region45
    $region44: #{_lambda_.17} parent=1 // pred_region
      _
    $region45: #{_lambda_.17} parent=1 // pred_fallthru
      _
    // Predicated region
    $region46: #{_lambda_.17} parent=1 // pred_check
      _
    $region47: #{_lambda_.17} parent=1 // pred_check_branch
      %52 = sbr.rel (0) target = $region49
    $region48: #{_lambda_.17} parent=1 // pred_region
      _
    $region49: #{_lambda_.17} parent=1 // pred_fallthru
      _
    // Predicated region
    $region50: #{_lambda_.17} parent=1 // pred_check
      _
    $region51: #{_lambda_.17} parent=1 // pred_check_branch
      %54 = sbr.rel (0) target = $region53
    $region52: #{_lambda_.17} parent=1 // pred_region
      _
    $region53: #{_lambda_.17} parent=1 // pred_fallthru
      _
    // Predicated region
    $region54: #{_lambda_.17} parent=1 // pred_check
      _
    $region55: #{_lambda_.17} parent=1 // pred_check_branch
      %56 = sbr.rel (0) target = $region57
    $region56: #{_lambda_.17} parent=1 // pred_region
      _
    $region57: #{_lambda_.17} parent=1 // pred_fallthru
      _
    // Predicated region
    $region58: #{_lambda_.17} parent=1 // pred_check
      _
    $region59: #{_lambda_.17} parent=1 // pred_check_branch
      %58 = sbr.rel (0) target = $region61
    $region60: #{_lambda_.17} parent=1 // pred_region
      _
    $region61: #{_lambda_.17} parent=1 // pred_fallthru
      _
    // Predicated region
    $region62: #{_lambda_.17} parent=1 // pred_check
      _
    $region63: #{_lambda_.17} parent=1 // pred_check_branch
      %60 = sbr.rel (0) target = $region65
    $region64: #{_lambda_.17} parent=1 // pred_region
      _
    $region65: #{_lambda_.17} parent=1 // pred_fallthru
      _
    // Predicated region
    $region66: #{_lambda_.17} parent=1 // pred_check
      _
    $region67: #{_lambda_.17} parent=1 // pred_check_branch
      %62 = sbr.rel (0) target = $region69
    $region68: #{_lambda_.17} parent=1 // pred_region
      _
    $region69: #{_lambda_.17} parent=1 // pred_fallthru
      _
    // Predicated region
    $region70: #{_lambda_.17} parent=1 // pred_check
      _
    $region71: #{_lambda_.17} parent=1 // pred_check_branch
      %64 = sbr.rel (0) target = $region73
    $region72: #{_lambda_.17} parent=1 // pred_region
      _
    $region73: #{_lambda_.17} parent=1 // pred_fallthru
      _
    // Predicated region
    $region74: #{_lambda_.17} parent=1 // pred_check
      _
    $region75: #{_lambda_.17} parent=1 // pred_check_branch
      %66 = sbr.rel (0) target = $region77
    $region76: #{_lambda_.17} parent=1 // pred_region
      _
    $region77: #{_lambda_.17} parent=1 // pred_fallthru
      _
    // Predicated region
    $region78: #{_lambda_.17} parent=1 // pred_check
      _
    $region79: #{_lambda_.17} parent=1 // pred_check_branch
      %68 = sbr.rel (0) target = $region81
    $region80: #{_lambda_.17} parent=1 // pred_region
      _
    $region81: #{_lambda_.17} parent=1 // pred_fallthru
      _
    // Predicated region
    $region82: #{_lambda_.17} parent=1 // pred_check
      _
    $region83: #{_lambda_.17} parent=1 // pred_check_branch
      %70 = sbr.rel (0) target = $region85
    $region84: #{_lambda_.17} parent=1 // pred_region
      _
    $region85: #{_lambda_.17} parent=1 // pred_fallthru
      _
    // Predicated region
    $region86: #{_lambda_.17} parent=1 // pred_check
      _
    $region87: #{_lambda_.17} parent=1 // pred_check_branch
      %72 = sbr.rel (0) target = $region89
    $region88: #{_lambda_.17} parent=1 // pred_region
      _
    $region89: #{_lambda_.17} parent=1 // pred_fallthru
      _
    // Predicated region
    $region90: #{_lambda_.17} parent=1 // pred_check
      _
    $region91: #{_lambda_.17} parent=1 // pred_check_branch
      %74 = sbr.rel (0) target = $region93
    $region92: #{_lambda_.17} parent=1 // pred_region
      _
    $region93: #{_lambda_.17} parent=1 // pred_fallthru
      _
    %v76 = vld [vmem:[%s0] sm:$0xff]
    %v77 = vld [vmem:[%s1] sm:$0xff]
    %79 = vrot.lane.b32.xlu0 %v77, 64
    %v80 = vpop.permute.xlu0 %79
    %vm82 = vcmask 523264
    %v83 = vsel %vm82, %v76, %v80
    %v84 = vld [vmem:[%s3] sm:$0xf]
    %v85 = vld [vmem:[%s3 + $0x4] sm:$0xf]
    %v86 = vld [vmem:[%s3 + $0x8] sm:$0xf]
    %v87 = vld [vmem:[%s3 + $0xc] sm:$0xf]
    %v88 = vld [vmem:[%s3 + $0x10] sm:$0xf]
    %v89 = vld [vmem:[%s3 + $0x14] sm:$0xf]
    %v90 = vld [vmem:[%s3 + $0x18] sm:$0xf]
    %v91 = vld [vmem:[%s3 + $0x1c] sm:$0xf]
    %v92 = vld [vmem:[%s3 + $0x20] sm:$0xf]
    %v93 = vld [vmem:[%s3 + $0x24] sm:$0xf]
    %v94 = vld [vmem:[%s3 + $0x28] sm:$0xf]
    %v95 = vld [vmem:[%s3 + $0x2c] sm:$0xf]
    %v96 = vld [vmem:[%s3 + $0x30] sm:$0xf]
    %v97 = vld [vmem:[%s3 + $0x34] sm:$0xf]
    %v98 = vld [vmem:[%s3 + $0x38] sm:$0xf]
    %v99 = vld [vmem:[%s3 + $0x3c] sm:$0xf]
    %v100 = vpack.c.bf16 %v83, %v83
    %v101 = vld [vmem:[%s4] sm:$0x1]
    %v103 = vperm.slane %v101, 0
    %v121 = vunpack.c.l.b16 %v84
    %v122 = vunpack.c.l.b16 %v85
    %v123 = vunpack.c.l.b16 %v86
    %v124 = vunpack.c.l.b16 %v87
    %v125 = vunpack.c.l.b16 %v88
    %v126 = vunpack.c.l.b16 %v89
    %v127 = vunpack.c.l.b16 %v90
    %v128 = vunpack.c.l.b16 %v91
    %v129 = vunpack.c.l.b16 %v92
    %v130 = vunpack.c.l.b16 %v93
    %v131 = vunpack.c.l.b16 %v94
    %v132 = vunpack.c.l.b16 %v95
    %v133 = vunpack.c.l.b16 %v96
    %v134 = vunpack.c.l.b16 %v97
    %v135 = vunpack.c.l.b16 %v98
    %v136 = vunpack.c.l.b16 %v99
    %v137 = vpack.c.b16 %v122, %v121
    %v138 = vpack.c.b16 %v124, %v123
    %v139 = vpack.c.b16 %v126, %v125
    %v140 = vpack.c.b16 %v128, %v127
    %v141 = vpack.c.b16 %v130, %v129
    %v142 = vpack.c.b16 %v132, %v131
    %v143 = vpack.c.b16 %v134, %v133
    %v144 = vpack.c.b16 %v136, %v135
    %153 = vmatpush.bf16.msra.mxu0 %v144
    %154 = vmatpush.bf16.msra.mxu0 %v143
    %155 = vmatpush.bf16.msra.mxu0 %v142
    %156 = vmatpush.bf16.msra.mxu0 %v141
    %157 = vmatpush.bf16.msra.mxu0 %v140
    %158 = vmatpush.bf16.msra.mxu0 %v139
    %159 = vmatpush.bf16.msra.mxu0 %v138
    %160 = vmatpush.bf16.msra.mxu0 %v137
    %161 = vmatmul.bf16.gmra.mxu0 %v100
    %v162 = vpop.f32.mrf.mxu0
    %v163 = vadd.f32 %v103, %v162
    %v164 = vpop.f32.mrf.mxu0
    %165 = vdwg.mxu0
    %v166 = vmul.f32 %v163, 0.5
    %v167 = vmul.f32 %v163, 0.70710677
    %v168 = vmul.f32 %v167, %v167
    %v169 = vmin.f32 16.0, %v168
    %v170 = vmul.f32 %v169, 2.1237322e-06
    %v171 = vadd.f32 %v170, 0.00028619796
    %v172 = vmul.f32 %v169, %v171
    %v173 = vadd.f32 %v172, 0.0036580483
    %v174 = vmul.f32 %v169, %v173
    %v175 = vadd.f32 %v174, 0.05243302
    %v176 = vmul.f32 %v169, %v175
    %v177 = vadd.f32 %v176, 0.18741608
    %v178 = vmul.f32 %v169, %v177
    %v179 = vadd.f32 %v178, 1.1283791
    %v180 = vmul.f32 %v167, %v179
    %v181 = vmul.f32 %v169, 3.8918573e-05
    %v182 = vadd.f32 %v181, 0.001143296
    %v183 = vmul.f32 %v169, %v182
    %v184 = vadd.f32 %v183, 0.014752088
    %v185 = vmul.f32 %v169, %v184
    %v186 = vadd.f32 %v185, 0.112945676
    %v187 = vmul.f32 %v169, %v186
    %v188 = vadd.f32 %v187, 0.4994258
    %v189 = vmul.f32 %v169, %v188
    %v190 = vadd.f32 %v189, 1.0
    %v191 = vrcp.pop %v190
    %v192 = vmul.f32 %v190, %v191
    %v193 = vsub.f32 1.0, %v192
    %v194 = vmul.f32 %v191, %v193
    %v195 = vadd.f32 %v191, %v194
    %vm196 = vweird.f32 %v190
    %vm197 = vweird.f32 %v191
    %vm198 = vmor %vm196, %vm197
    %v199 = vsel %vm198, %v191, %v195
    %v200 = vand.u32 2147483647, %v190
    %vm201 = vcmp.eq.f32.partialorder %v200, 8.507059e+37
    %v202 = vand.u32 %v190, 2147483648
    %v203 = vor.u32 1.1754944e-38, %v202
    %v204 = vsel %vm201, %v203, %v199
    %v205 = vmul.f32 %v180, %v204
    %v206 = vmin.f32 %v205, 1.0
    %v207 = vmax.f32 %v206, -1.0
    %v208 = vadd.f32 %v207, 1.0
    %v209 = vmul.f32 %v166, %v208
    %v210 = vld [vmem:[%s5] sm:$0xf]
    %v211 = vld [vmem:[%s5 + $0x4] sm:$0xf]
    %v212 = vld [vmem:[%s5 + $0x8] sm:$0xf]
    %v213 = vld [vmem:[%s5 + $0xc] sm:$0xf]
    %v214 = vld [vmem:[%s5 + $0x10] sm:$0xf]
    %v215 = vld [vmem:[%s5 + $0x14] sm:$0xf]
    %v216 = vld [vmem:[%s5 + $0x18] sm:$0xf]
    %v217 = vld [vmem:[%s5 + $0x1c] sm:$0xf]
    %v218 = vpack.c.bf16 %v209, %v209
    %v219 = vld [vmem:[%s6] sm:$0x1]
    %v221 = vperm.slane %v219, 0
    %v231 = vunpack.c.l.b16 %v210
    %v232 = vunpack.c.l.b16 %v211
    %v233 = vunpack.c.l.b16 %v212
    %v234 = vunpack.c.l.b16 %v213
    %v235 = vunpack.c.l.b16 %v214
    %v236 = vunpack.c.l.b16 %v215
    %v237 = vunpack.c.l.b16 %v216
    %v238 = vunpack.c.l.b16 %v217
    %v239 = vpack.c.b16 %v232, %v231
    %v240 = vpack.c.b16 %v234, %v233
    %v241 = vpack.c.b16 %v236, %v235
    %v242 = vpack.c.b16 %v238, %v237
    %v248 = vsel %vm82, %v218, 0
    %250 = vmatpush.bf16.msra.mxu0 0
    %251 = vmatpush.bf16.msra.mxu0 0
    %252 = vmatpush.bf16.msra.mxu0 0
    %253 = vmatpush.bf16.msra.mxu0 0
    %254 = vmatpush.bf16.msra.mxu0 %v242
    %255 = vmatpush.bf16.msra.mxu0 %v241
    %256 = vmatpush.bf16.msra.mxu0 %v240
    %257 = vmatpush.bf16.msra.mxu0 %v239
    %258 = vmatmul.bf16.gmra.mxu0 %v248
    %v259 = vpop.f32.mrf.mxu0
    %v260 = vadd.f32 %v221, %v259
    %v261 = vpop.f32.mrf.mxu0
    %262 = vdwg.mxu0
    %v263 = vld [vmem:[%s7] sm:$0x1]
    %v264 = vld [vmem:[%s8] sm:$0x1]
    %v265 = vsel %vm82, %v260, 0.0
    %v266 = vrot.slane %v265, 4
    %v267 = vadd.f32 %v265, %v266
    %v268 = vrot.slane %v267, 2
    %v269 = vadd.f32 %v267, %v268
    %v270 = vrot.slane %v269, 1
    %v271 = vadd.f32 %v269, %v270
    %v272 = vrcp.pop 8.0
    %v273 = vmul.f32 8.0, %v272
    %v274 = vsub.f32 1.0, %v273
    %v275 = vmul.f32 %v272, %v274
    %v276 = vadd.f32 %v272, %v275
    %vm277 = vweird.f32 %v272
    %v278 = vsel %vm277, %v272, %v276
    %v279 = vmul.f32 %v271, %v278
    %v280 = vsub.f32 %v260, %v279
    %v281 = vmul.f32 %v280, %v280
    %v282 = vsel %vm82, %v281, 0.0
    %v283 = vrot.slane %v282, 4
    %v284 = vadd.f32 %v282, %v283
    %v285 = vrot.slane %v284, 2
    %v286 = vadd.f32 %v284, %v285
    %v287 = vrot.slane %v286, 1
    %v288 = vadd.f32 %v286, %v287
    %v289 = vmul.f32 %v288, %v278
    %v290 = vadd.f32 %v289, 1e-05
    %v291 = vrsqrt.pop %v290
    %v292 = vmul.f32 %v291, %v290
    %v293 = vmul.f32 %v292, %v291
    %v294 = vmul.f32 0.5, %v293
    %v295 = vsub.f32 1.5, %v294
    %v296 = vmul.f32 %v291, %v295
    %vm297 = vweird.f32 %v290
    %vm298 = vweird.f32 %v291
    %vm299 = vmor %vm297, %vm298
    %v300 = vsel %vm299, %v291, %v296
    %v301 = vmul.f32 %v280, %v300
    %v303 = vperm.slane %v263, 0
    %v305 = vmul.f32 %v301, %v303
    %v307 = vperm.slane %v264, 0
    %v309 = vadd.f32 %v305, %v307
    %v310 = vmul.f32 %v309, 0.5
    %v311 = vmul.f32 %v309, 0.70710677
    %v312 = vmul.f32 %v311, %v311
    %v313 = vmin.f32 16.0, %v312
    %v314 = vmul.f32 %v313, 2.1237322e-06
    %v315 = vadd.f32 %v314, 0.00028619796
    %v316 = vmul.f32 %v313, %v315
    %v317 = vadd.f32 %v316, 0.0036580483
    %v318 = vmul.f32 %v313, %v317
    %v319 = vadd.f32 %v318, 0.05243302
    %v320 = vmul.f32 %v313, %v319
    %v321 = vadd.f32 %v320, 0.18741608
    %v322 = vmul.f32 %v313, %v321
    %v323 = vadd.f32 %v322, 1.1283791
    %v324 = vmul.f32 %v311, %v323
    %v325 = vmul.f32 %v313, 3.8918573e-05
    %v326 = vadd.f32 %v325, 0.001143296
    %v327 = vmul.f32 %v313, %v326
    %v328 = vadd.f32 %v327, 0.014752088
    %v329 = vmul.f32 %v313, %v328
    %v330 = vadd.f32 %v329, 0.112945676
    %v331 = vmul.f32 %v313, %v330
    %v332 = vadd.f32 %v331, 0.4994258
    %v333 = vmul.f32 %v313, %v332
    %v334 = vadd.f32 %v333, 1.0
    %v335 = vrcp.pop %v334
    %v336 = vmul.f32 %v334, %v335
    %v337 = vsub.f32 1.0, %v336
    %v338 = vmul.f32 %v335, %v337
    %v339 = vadd.f32 %v335, %v338
    %vm340 = vweird.f32 %v334
    %vm341 = vweird.f32 %v335
    %vm342 = vmor %vm340, %vm341
    %v343 = vsel %vm342, %v335, %v339
    %v344 = vand.u32 2147483647, %v334
    %vm345 = vcmp.eq.f32.partialorder %v344, 8.507059e+37
    %v346 = vand.u32 %v334, 2147483648
    %v347 = vor.u32 1.1754944e-38, %v346
    %v348 = vsel %vm345, %v347, %v343
    %v349 = vmul.f32 %v324, %v348
    %v350 = vmin.f32 %v349, 1.0
    %v351 = vmax.f32 %v350, -1.0
    %v352 = vadd.f32 %v351, 1.0
    %v353 = vmul.f32 %v310, %v352
    %v354 = vld [vmem:[%s9] sm:$0xf]
    %v355 = vld [vmem:[%s9 + $0x4] sm:$0xf]
    %v356 = vld [vmem:[%s9 + $0x8] sm:$0xf]
    %v357 = vld [vmem:[%s9 + $0xc] sm:$0xf]
    %v358 = vld [vmem:[%s9 + $0x10] sm:$0xf]
    %v359 = vld [vmem:[%s9 + $0x14] sm:$0xf]
    %v360 = vld [vmem:[%s9 + $0x18] sm:$0xf]
    %v361 = vld [vmem:[%s9 + $0x1c] sm:$0xf]
    %v362 = vpack.c.bf16 %v353, %v353
    %v363 = vld [vmem:[%s10] sm:$0x1]
    %v365 = vperm.slane %v363, 0
    %v375 = vunpack.c.l.b16 %v354
    %v376 = vunpack.c.l.b16 %v355
    %v377 = vunpack.c.l.b16 %v356
    %v378 = vunpack.c.l.b16 %v357
    %v379 = vunpack.c.l.b16 %v358
    %v380 = vunpack.c.l.b16 %v359
    %v381 = vunpack.c.l.b16 %v360
    %v382 = vunpack.c.l.b16 %v361
    %v383 = vpack.c.b16 %v376, %v375
    %v384 = vpack.c.b16 %v378, %v377
    %v385 = vpack.c.b16 %v380, %v379
    %v386 = vpack.c.b16 %v382, %v381
    %v392 = vsel %vm82, %v362, 0
    %394 = vmatpush.bf16.msra.mxu0 0
    %395 = vmatpush.bf16.msra.mxu0 0
    %396 = vmatpush.bf16.msra.mxu0 0
    %397 = vmatpush.bf16.msra.mxu0 0
    %398 = vmatpush.bf16.msra.mxu0 %v386
    %399 = vmatpush.bf16.msra.mxu0 %v385
    %400 = vmatpush.bf16.msra.mxu0 %v384
    %401 = vmatpush.bf16.msra.mxu0 %v383
    %402 = vmatmul.bf16.gmra.mxu0 %v392
    %v403 = vpop.f32.mrf.mxu0
    %v404 = vadd.f32 %v365, %v403
    %v405 = vpop.f32.mrf.mxu0
    %406 = vdwg.mxu0
    %v407 = vadd.f32 %v404, %v209
    %v408 = vld [vmem:[%s2] sm:$0xff]
    %v409 = vadd.f32 %v407, %v408
    %v410 = vld [vmem:[%s11] sm:$0xff]
    %v411 = vld [vmem:[%s11 + $0x8] sm:$0xff]
    %v412 = vld [vmem:[%s11 + $0x10] sm:$0xff]
    %v413 = vld [vmem:[%s11 + $0x18] sm:$0xff]
    %v414 = vld [vmem:[%s11 + $0x20] sm:$0xff]
    %v415 = vld [vmem:[%s11 + $0x28] sm:$0xff]
    %v416 = vld [vmem:[%s11 + $0x30] sm:$0xff]
    %v417 = vld [vmem:[%s11 + $0x38] sm:$0xff]
    %v418 = vpack.c.bf16 %v409, %v409
    %v419 = vld [vmem:[%s12] sm:$0x3]
    %v421 = vperm.slane %v419, 0
    %v422 = vperm.slane %v419, 1
    %v433 = vunpack.c.l.b16 %v410
    %v434 = vunpack.c.h.b16 %v410
    %v435 = vunpack.c.l.b16 %v411
    %v436 = vunpack.c.h.b16 %v411
    %v437 = vunpack.c.l.b16 %v412
    %v438 = vunpack.c.h.b16 %v412
    %v439 = vunpack.c.l.b16 %v413
    %v440 = vunpack.c.h.b16 %v413
    %v441 = vunpack.c.l.b16 %v414
    %v442 = vunpack.c.h.b16 %v414
    %v443 = vunpack.c.l.b16 %v415
    %v444 = vunpack.c.h.b16 %v415
    %v445 = vunpack.c.l.b16 %v416
    %v446 = vunpack.c.h.b16 %v416
    %v447 = vunpack.c.l.b16 %v417
    %v448 = vunpack.c.h.b16 %v417
    %v449 = vpack.c.b16 %v435, %v433
    %v450 = vpack.c.b16 %v436, %v434
    %v451 = vpack.c.b16 %v439, %v437
    %v452 = vpack.c.b16 %v440, %v438
    %v453 = vpack.c.b16 %v443, %v441
    %v454 = vpack.c.b16 %v444, %v442
    %v455 = vpack.c.b16 %v447, %v445
    %v456 = vpack.c.b16 %v448, %v446
    %v466 = vsel %vm82, %v418, 0
    %468 = vmatpush.bf16.msra.mxu0 0
    %469 = vmatpush.bf16.msra.mxu0 0
    %470 = vmatpush.bf16.msra.mxu0 0
    %471 = vmatpush.bf16.msra.mxu0 0
    %472 = vmatpush.bf16.msra.mxu0 %v455
    %473 = vmatpush.bf16.msra.mxu0 %v453
    %474 = vmatpush.bf16.msra.mxu0 %v451
    %475 = vmatpush.bf16.msra.mxu0 %v449
    %476 = vmatmul.bf16.gmra.mxu0 %v466
    %v477 = vpop.f32.mrf.mxu0
    %v478 = vadd.f32 %v421, %v477
    %v479 = vpop.f32.mrf.mxu0
    %480 = vdwg.mxu0
    %481 = vmatpush.bf16.msra.mxu0 0
    %482 = vmatpush.bf16.msra.mxu0 0
    %483 = vmatpush.bf16.msra.mxu0 0
    %484 = vmatpush.bf16.msra.mxu0 0
    %485 = vmatpush.bf16.msra.mxu0 %v456
    %486 = vmatpush.bf16.msra.mxu0 %v454
    %487 = vmatpush.bf16.msra.mxu0 %v452
    %488 = vmatpush.bf16.msra.mxu0 %v450
    %489 = vmatmul.bf16.gmra.mxu0 %v466
    %v490 = vpop.f32.mrf.mxu0
    %v491 = vadd.f32 %v422, %v490
    %v492 = vpop.f32.mrf.mxu0
    %493 = vdwg.mxu0
    %v494 = vld [vmem:[%s13] sm:$0x3]
    %v495 = vld [vmem:[%s14] sm:$0x3]
    %v496 = vrot.slane %v478, 4
    %v497 = vadd.f32 %v478, %v496
    %v498 = vrot.slane %v497, 2
    %v499 = vadd.f32 %v497, %v498
    %v500 = vrot.slane %v499, 1
    %v501 = vadd.f32 %v499, %v500
    %v502 = vrot.slane %v491, 4
    %v503 = vadd.f32 %v491, %v502
    %v504 = vrot.slane %v503, 2
    %v505 = vadd.f32 %v503, %v504
    %v506 = vrot.slane %v505, 1
    %v507 = vadd.f32 %v505, %v506
    %v508 = vmul.f32 %v501, %v278
    %v509 = vmul.f32 %v507, %v278
    %v510 = vsub.f32 %v478, %v508
    %v511 = vsub.f32 %v491, %v509
    %v512 = vmul.f32 %v510, %v510
    %v513 = vmul.f32 %v511, %v511
    %v514 = vrot.slane %v512, 4
    %v515 = vadd.f32 %v512, %v514
    %v516 = vrot.slane %v515, 2
    %v517 = vadd.f32 %v515, %v516
    %v518 = vrot.slane %v517, 1
    %v519 = vadd.f32 %v517, %v518
    %v520 = vrot.slane %v513, 4
    %v521 = vadd.f32 %v513, %v520
    %v522 = vrot.slane %v521, 2
    %v523 = vadd.f32 %v521, %v522
    %v524 = vrot.slane %v523, 1
    %v525 = vadd.f32 %v523, %v524
    %v526 = vmul.f32 %v519, %v278
    %v527 = vmul.f32 %v525, %v278
    %v528 = vadd.f32 %v526, 1e-05
    %v529 = vadd.f32 %v527, 1e-05
    %v530 = vrsqrt.pop %v528
    %v531 = vmul.f32 %v530, %v528
    %v532 = vmul.f32 %v531, %v530
    %v533 = vmul.f32 0.5, %v532
    %v534 = vsub.f32 1.5, %v533
    %v535 = vmul.f32 %v530, %v534
    %vm536 = vweird.f32 %v528
    %vm537 = vweird.f32 %v530
    %vm538 = vmor %vm536, %vm537
    %v539 = vsel %vm538, %v530, %v535
    %v540 = vrsqrt.pop %v529
    %v541 = vmul.f32 %v540, %v529
    %v542 = vmul.f32 %v541, %v540
    %v543 = vmul.f32 0.5, %v542
    %v544 = vsub.f32 1.5, %v543
    %v545 = vmul.f32 %v540, %v544
    %vm546 = vweird.f32 %v529
    %vm547 = vweird.f32 %v540
    %vm548 = vmor %vm546, %vm547
    %v549 = vsel %vm548, %v540, %v545
    %v550 = vmul.f32 %v510, %v539
    %v551 = vmul.f32 %v511, %v549
    %v553 = vperm.slane %v494, 0
    %v554 = vperm.slane %v494, 1
    %v557 = vmul.f32 %v550, %v553
    %v558 = vmul.f32 %v551, %v554
    %v560 = vperm.slane %v495, 0
    %v561 = vperm.slane %v495, 1
    %v564 = vadd.f32 %v557, %v560
    %v565 = vadd.f32 %v558, %v561
    %v566 = vmul.f32 %v564, 0.5
    %v567 = vmul.f32 %v565, 0.5
    %v568 = vmul.f32 %v564, 0.70710677
    %v569 = vmul.f32 %v565, 0.70710677
    %v570 = vmul.f32 %v568, %v568
    %v571 = vmin.f32 16.0, %v570
    %v572 = vmul.f32 %v571, 2.1237322e-06
    %v573 = vadd.f32 %v572, 0.00028619796
    %v574 = vmul.f32 %v571, %v573
    %v575 = vadd.f32 %v574, 0.0036580483
    %v576 = vmul.f32 %v571, %v575
    %v577 = vadd.f32 %v576, 0.05243302
    %v578 = vmul.f32 %v571, %v577
    %v579 = vadd.f32 %v578, 0.18741608
    %v580 = vmul.f32 %v571, %v579
    %v581 = vadd.f32 %v580, 1.1283791
    %v582 = vmul.f32 %v568, %v581
    %v583 = vmul.f32 %v571, 3.8918573e-05
    %v584 = vadd.f32 %v583, 0.001143296
    %v585 = vmul.f32 %v571, %v584
    %v586 = vadd.f32 %v585, 0.014752088
    %v587 = vmul.f32 %v571, %v586
    %v588 = vadd.f32 %v587, 0.112945676
    %v589 = vmul.f32 %v571, %v588
    %v590 = vadd.f32 %v589, 0.4994258
    %v591 = vmul.f32 %v571, %v590
    %v592 = vadd.f32 %v591, 1.0
    %v593 = vrcp.pop %v592
    %v594 = vmul.f32 %v592, %v593
    %v595 = vsub.f32 1.0, %v594
    %v596 = vmul.f32 %v593, %v595
    %v597 = vadd.f32 %v593, %v596
    %vm598 = vweird.f32 %v592
    %vm599 = vweird.f32 %v593
    %vm600 = vmor %vm598, %vm599
    %v601 = vsel %vm600, %v593, %v597
    %v602 = vand.u32 2147483647, %v592
    %vm603 = vcmp.eq.f32.partialorder %v602, 8.507059e+37
    %v604 = vand.u32 %v592, 2147483648
    %v605 = vor.u32 1.1754944e-38, %v604
    %v606 = vsel %vm603, %v605, %v601
    %v607 = vmul.f32 %v582, %v606
    %v608 = vmin.f32 %v607, 1.0
    %v609 = vmax.f32 %v608, -1.0
    %v610 = vmul.f32 %v569, %v569
    %v611 = vmin.f32 16.0, %v610
    %v612 = vmul.f32 %v611, 2.1237322e-06
    %v613 = vadd.f32 %v612, 0.00028619796
    %v614 = vmul.f32 %v611, %v613
    %v615 = vadd.f32 %v614, 0.0036580483
    %v616 = vmul.f32 %v611, %v615
    %v617 = vadd.f32 %v616, 0.05243302
    %v618 = vmul.f32 %v611, %v617
    %v619 = vadd.f32 %v618, 0.18741608
    %v620 = vmul.f32 %v611, %v619
    %v621 = vadd.f32 %v620, 1.1283791
    %v622 = vmul.f32 %v569, %v621
    %v623 = vmul.f32 %v611, 3.8918573e-05
    %v624 = vadd.f32 %v623, 0.001143296
    %v625 = vmul.f32 %v611, %v624
    %v626 = vadd.f32 %v625, 0.014752088
    %v627 = vmul.f32 %v611, %v626
    %v628 = vadd.f32 %v627, 0.112945676
    %v629 = vmul.f32 %v611, %v628
    %v630 = vadd.f32 %v629, 0.4994258
    %v631 = vmul.f32 %v611, %v630
    %v632 = vadd.f32 %v631, 1.0
    %v633 = vrcp.pop %v632
    %v634 = vmul.f32 %v632, %v633
    %v635 = vsub.f32 1.0, %v634
    %v636 = vmul.f32 %v633, %v635
    %v637 = vadd.f32 %v633, %v636
    %vm638 = vweird.f32 %v632
    %vm639 = vweird.f32 %v633
    %vm640 = vmor %vm638, %vm639
    %v641 = vsel %vm640, %v633, %v637
    %v642 = vand.u32 2147483647, %v632
    %vm643 = vcmp.eq.f32.partialorder %v642, 8.507059e+37
    %v644 = vand.u32 %v632, 2147483648
    %v645 = vor.u32 1.1754944e-38, %v644
    %v646 = vsel %vm643, %v645, %v641
    %v647 = vmul.f32 %v622, %v646
    %v648 = vmin.f32 %v647, 1.0
    %v649 = vmax.f32 %v648, -1.0
    %v650 = vadd.f32 %v609, 1.0
    %v651 = vadd.f32 %v649, 1.0
    %v652 = vmul.f32 %v566, %v650
    %v653 = vmul.f32 %v567, %v651
    %v654 = vld [vmem:[%s15] sm:$0xf]
    %v655 = vld [vmem:[%s15 + $0x4] sm:$0xf]
    %v656 = vld [vmem:[%s15 + $0x8] sm:$0xf]
    %v657 = vld [vmem:[%s15 + $0xc] sm:$0xf]
    %v658 = vld [vmem:[%s15 + $0x10] sm:$0xf]
    %v659 = vld [vmem:[%s15 + $0x14] sm:$0xf]
    %v660 = vld [vmem:[%s15 + $0x18] sm:$0xf]
    %v661 = vld [vmem:[%s15 + $0x1c] sm:$0xf]
    %v662 = vld [vmem:[%s15 + $0x20] sm:$0xf]
    %v663 = vld [vmem:[%s15 + $0x24] sm:$0xf]
    %v664 = vld [vmem:[%s15 + $0x28] sm:$0xf]
    %v665 = vld [vmem:[%s15 + $0x2c] sm:$0xf]
    %v666 = vld [vmem:[%s15 + $0x30] sm:$0xf]
    %v667 = vld [vmem:[%s15 + $0x34] sm:$0xf]
    %v668 = vld [vmem:[%s15 + $0x38] sm:$0xf]
    %v669 = vld [vmem:[%s15 + $0x3c] sm:$0xf]
    %v670 = vld [vmem:[%s15 + $0x40] sm:$0xf]
    %v671 = vld [vmem:[%s15 + $0x44] sm:$0xf]
    %v672 = vld [vmem:[%s15 + $0x48] sm:$0xf]
    %v673 = vld [vmem:[%s15 + $0x4c] sm:$0xf]
    %v674 = vld [vmem:[%s15 + $0x50] sm:$0xf]
    %v675 = vld [vmem:[%s15 + $0x54] sm:$0xf]
    %v676 = vld [vmem:[%s15 + $0x58] sm:$0xf]
    %v677 = vld [vmem:[%s15 + $0x5c] sm:$0xf]
    %v678 = vld [vmem:[%s15 + $0x60] sm:$0xf]
    %v679 = vld [vmem:[%s15 + $0x64] sm:$0xf]
    %v680 = vld [vmem:[%s15 + $0x68] sm:$0xf]
    %v681 = vld [vmem:[%s15 + $0x6c] sm:$0xf]
    %v682 = vld [vmem:[%s15 + $0x70] sm:$0xf]
    %v683 = vld [vmem:[%s15 + $0x74] sm:$0xf]
    %v684 = vld [vmem:[%s15 + $0x78] sm:$0xf]
    %v685 = vld [vmem:[%s15 + $0x7c] sm:$0xf]
    %v686 = vpack.c.bf16 %v652, %v652
    %v687 = vpack.c.bf16 %v653, %v653
    %v688 = vld [vmem:[%s16] sm:$0x1]
    %v690 = vperm.slane %v688, 0
    %v724 = vunpack.c.l.b16 %v654
    %v725 = vunpack.c.l.b16 %v655
    %v726 = vunpack.c.l.b16 %v656
    %v727 = vunpack.c.l.b16 %v657
    %v728 = vunpack.c.l.b16 %v658
    %v729 = vunpack.c.l.b16 %v659
    %v730 = vunpack.c.l.b16 %v660
    %v731 = vunpack.c.l.b16 %v661
    %v732 = vunpack.c.l.b16 %v662
    %v733 = vunpack.c.l.b16 %v663
    %v734 = vunpack.c.l.b16 %v664
    %v735 = vunpack.c.l.b16 %v665
    %v736 = vunpack.c.l.b16 %v666
    %v737 = vunpack.c.l.b16 %v667
    %v738 = vunpack.c.l.b16 %v668
    %v739 = vunpack.c.l.b16 %v669
    %v740 = vunpack.c.l.b16 %v670
    %v741 = vunpack.c.l.b16 %v671
    %v742 = vunpack.c.l.b16 %v672
    %v743 = vunpack.c.l.b16 %v673
    %v744 = vunpack.c.l.b16 %v674
    %v745 = vunpack.c.l.b16 %v675
    %v746 = vunpack.c.l.b16 %v676
    %v747 = vunpack.c.l.b16 %v677
    %v748 = vunpack.c.l.b16 %v678
    %v749 = vunpack.c.l.b16 %v679
    %v750 = vunpack.c.l.b16 %v680
    %v751 = vunpack.c.l.b16 %v681
    %v752 = vunpack.c.l.b16 %v682
    %v753 = vunpack.c.l.b16 %v683
    %v754 = vunpack.c.l.b16 %v684
    %v755 = vunpack.c.l.b16 %v685
    %v756 = vpack.c.b16 %v725, %v724
    %v757 = vpack.c.b16 %v727, %v726
    %v758 = vpack.c.b16 %v729, %v728
    %v759 = vpack.c.b16 %v731, %v730
    %v760 = vpack.c.b16 %v733, %v732
    %v761 = vpack.c.b16 %v735, %v734
    %v762 = vpack.c.b16 %v737, %v736
    %v763 = vpack.c.b16 %v739, %v738
    %v764 = vpack.c.b16 %v741, %v740
    %v765 = vpack.c.b16 %v743, %v742
    %v766 = vpack.c.b16 %v745, %v744
    %v767 = vpack.c.b16 %v747, %v746
    %v768 = vpack.c.b16 %v749, %v748
    %v769 = vpack.c.b16 %v751, %v750
    %v770 = vpack.c.b16 %v753, %v752
    %v771 = vpack.c.b16 %v755, %v754
    %788 = vmatpush.bf16.msra.mxu0 %v763
    %789 = vmatpush.bf16.msra.mxu0 %v762
    %790 = vmatpush.bf16.msra.mxu0 %v761
    %791 = vmatpush.bf16.msra.mxu0 %v760
    %792 = vmatpush.bf16.msra.mxu0 %v759
    %793 = vmatpush.bf16.msra.mxu0 %v758
    %794 = vmatpush.bf16.msra.mxu0 %v757
    %795 = vmatpush.bf16.msra.mxu0 %v756
    %796 = vmatmul.bf16.gmra.mxu0 %v686
    %v797 = vpop.f32.mrf.mxu0
    %v798 = vadd.f32 %v690, %v797
    %v799 = vpop.f32.mrf.mxu0
    %800 = vdwg.mxu0
    %801 = vmatpush.bf16.msra.mxu0 %v771
    %802 = vmatpush.bf16.msra.mxu0 %v770
    %803 = vmatpush.bf16.msra.mxu0 %v769
    %804 = vmatpush.bf16.msra.mxu0 %v768
    %805 = vmatpush.bf16.msra.mxu0 %v767
    %806 = vmatpush.bf16.msra.mxu0 %v766
    %807 = vmatpush.bf16.msra.mxu0 %v765
    %808 = vmatpush.bf16.msra.mxu0 %v764
    %809 = vmatmul.bf16.gmra.mxu0 %v687
    %v810 = vpop.f32.mrf.mxu0
    %v811 = vadd.f32 %v798, %v810
    %v812 = vpop.f32.mrf.mxu0
    %813 = vdwg.mxu0
    %v814 = vadd.f32 %v811, %v409
    %v815 = vmul.f32 %v814, 0.5
    %v816 = vmul.f32 %v814, 0.70710677
    %v817 = vmul.f32 %v816, %v816
    %v818 = vmin.f32 16.0, %v817
    %v819 = vmul.f32 %v818, 2.1237322e-06
    %v820 = vadd.f32 %v819, 0.00028619796
    %v821 = vmul.f32 %v818, %v820
    %v822 = vadd.f32 %v821, 0.0036580483
    %v823 = vmul.f32 %v818, %v822
    %v824 = vadd.f32 %v823, 0.05243302
    %v825 = vmul.f32 %v818, %v824
    %v826 = vadd.f32 %v825, 0.18741608
    %v827 = vmul.f32 %v818, %v826
    %v828 = vadd.f32 %v827, 1.1283791
    %v829 = vmul.f32 %v816, %v828
    %v830 = vmul.f32 %v818, 3.8918573e-05
    %v831 = vadd.f32 %v830, 0.001143296
    %v832 = vmul.f32 %v818, %v831
    %v833 = vadd.f32 %v832, 0.014752088
    %v834 = vmul.f32 %v818, %v833
    %v835 = vadd.f32 %v834, 0.112945676
    %v836 = vmul.f32 %v818, %v835
    %v837 = vadd.f32 %v836, 0.4994258
    %v838 = vmul.f32 %v818, %v837
    %v839 = vadd.f32 %v838, 1.0
    %v840 = vrcp.pop %v839
    %v841 = vmul.f32 %v839, %v840
    %v842 = vsub.f32 1.0, %v841
    %v843 = vmul.f32 %v840, %v842
    %v844 = vadd.f32 %v840, %v843
    %vm845 = vweird.f32 %v839
    %vm846 = vweird.f32 %v840
    %vm847 = vmor %vm845, %vm846
    %v848 = vsel %vm847, %v840, %v844
    %v849 = vand.u32 2147483647, %v839
    %vm850 = vcmp.eq.f32.partialorder %v849, 8.507059e+37
    %v851 = vand.u32 %v839, 2147483648
    %v852 = vor.u32 1.1754944e-38, %v851
    %v853 = vsel %vm850, %v852, %v848
    %v854 = vmul.f32 %v829, %v853
    %v855 = vmin.f32 %v854, 1.0
    %v856 = vmax.f32 %v855, -1.0
    %v857 = vadd.f32 %v856, 1.0
    %v858 = vmul.f32 %v815, %v857
    %v859 = vld [vmem:[%s17] sm:$0xff]
    %v860 = vld [vmem:[%s17 + $0x8] sm:$0xff]
    %v861 = vld [vmem:[%s17 + $0x10] sm:$0xff]
    %v862 = vld [vmem:[%s17 + $0x18] sm:$0xff]
    %v863 = vld [vmem:[%s17 + $0x20] sm:$0xff]
    %v864 = vld [vmem:[%s17 + $0x28] sm:$0xff]
    %v865 = vld [vmem:[%s17 + $0x30] sm:$0xff]
    %v866 = vld [vmem:[%s17 + $0x38] sm:$0xff]
    %v867 = vpack.c.bf16 %v858, %v858
    %v868 = vld [vmem:[%s18] sm:$0x3]
    %v870 = vperm.slane %v868, 0
    %v871 = vperm.slane %v868, 1
    %v882 = vunpack.c.l.b16 %v859
    %v883 = vunpack.c.h.b16 %v859
    %v884 = vunpack.c.l.b16 %v860
    %v885 = vunpack.c.h.b16 %v860
    %v886 = vunpack.c.l.b16 %v861
    %v887 = vunpack.c.h.b16 %v861
    %v888 = vunpack.c.l.b16 %v862
    %v889 = vunpack.c.h.b16 %v862
    %v890 = vunpack.c.l.b16 %v863
    %v891 = vunpack.c.h.b16 %v863
    %v892 = vunpack.c.l.b16 %v864
    %v893 = vunpack.c.h.b16 %v864
    %v894 = vunpack.c.l.b16 %v865
    %v895 = vunpack.c.h.b16 %v865
    %v896 = vunpack.c.l.b16 %v866
    %v897 = vunpack.c.h.b16 %v866
    %v898 = vpack.c.b16 %v884, %v882
    %v899 = vpack.c.b16 %v885, %v883
    %v900 = vpack.c.b16 %v888, %v886
    %v901 = vpack.c.b16 %v889, %v887
    %v902 = vpack.c.b16 %v892, %v890
    %v903 = vpack.c.b16 %v893, %v891
    %v904 = vpack.c.b16 %v896, %v894
    %v905 = vpack.c.b16 %v897, %v895
    %v915 = vsel %vm82, %v867, 0
    %917 = vmatpush.bf16.msra.mxu0 0
    %918 = vmatpush.bf16.msra.mxu0 0
    %919 = vmatpush.bf16.msra.mxu0 0
    %920 = vmatpush.bf16.msra.mxu0 0
    %921 = vmatpush.bf16.msra.mxu0 %v904
    %922 = vmatpush.bf16.msra.mxu0 %v902
    %923 = vmatpush.bf16.msra.mxu0 %v900
    %924 = vmatpush.bf16.msra.mxu0 %v898
    %925 = vmatmul.bf16.gmra.mxu0 %v915
    %v926 = vpop.f32.mrf.mxu0
    %v927 = vadd.f32 %v870, %v926
    %v928 = vpop.f32.mrf.mxu0
    %929 = vdwg.mxu0
    %930 = vmatpush.bf16.msra.mxu0 0
    %931 = vmatpush.bf16.msra.mxu0 0
    %932 = vmatpush.bf16.msra.mxu0 0
    %933 = vmatpush.bf16.msra.mxu0 0
    %934 = vmatpush.bf16.msra.mxu0 %v905
    %935 = vmatpush.bf16.msra.mxu0 %v903
    %936 = vmatpush.bf16.msra.mxu0 %v901
    %937 = vmatpush.bf16.msra.mxu0 %v899
    %938 = vmatmul.bf16.gmra.mxu0 %v915
    %v939 = vpop.f32.mrf.mxu0
    %v940 = vadd.f32 %v871, %v939
    %v941 = vpop.f32.mrf.mxu0
    %942 = vdwg.mxu0
    %v943 = vld [vmem:[%s19] sm:$0x3]
    %v944 = vld [vmem:[%s20] sm:$0x3]
    %v945 = vrot.slane %v927, 4
    %v946 = vadd.f32 %v927, %v945
    %v947 = vrot.slane %v946, 2
    %v948 = vadd.f32 %v946, %v947
    %v949 = vrot.slane %v948, 1
    %v950 = vadd.f32 %v948, %v949
    %v951 = vrot.slane %v940, 4
    %v952 = vadd.f32 %v940, %v951
    %v953 = vrot.slane %v952, 2
    %v954 = vadd.f32 %v952, %v953
    %v955 = vrot.slane %v954, 1
    %v956 = vadd.f32 %v954, %v955
    %v957 = vmul.f32 %v950, %v278
    %v958 = vmul.f32 %v956, %v278
    %v959 = vsub.f32 %v927, %v957
    %v960 = vsub.f32 %v940, %v958
    %v961 = vmul.f32 %v959, %v959
    %v962 = vmul.f32 %v960, %v960
    %v963 = vrot.slane %v961, 4
    %v964 = vadd.f32 %v961, %v963
    %v965 = vrot.slane %v964, 2
    %v966 = vadd.f32 %v964, %v965
    %v967 = vrot.slane %v966, 1
    %v968 = vadd.f32 %v966, %v967
    %v969 = vrot.slane %v962, 4
    %v970 = vadd.f32 %v962, %v969
    %v971 = vrot.slane %v970, 2
    %v972 = vadd.f32 %v970, %v971
    %v973 = vrot.slane %v972, 1
    %v974 = vadd.f32 %v972, %v973
    %v975 = vmul.f32 %v968, %v278
    %v976 = vmul.f32 %v974, %v278
    %v977 = vadd.f32 %v975, 1e-05
    %v978 = vadd.f32 %v976, 1e-05
    %v979 = vrsqrt.pop %v977
    %v980 = vmul.f32 %v979, %v977
    %v981 = vmul.f32 %v980, %v979
    %v982 = vmul.f32 0.5, %v981
    %v983 = vsub.f32 1.5, %v982
    %v984 = vmul.f32 %v979, %v983
    %vm985 = vweird.f32 %v977
    %vm986 = vweird.f32 %v979
    %vm987 = vmor %vm985, %vm986
    %v988 = vsel %vm987, %v979, %v984
    %v989 = vrsqrt.pop %v978
    %v990 = vmul.f32 %v989, %v978
    %v991 = vmul.f32 %v990, %v989
    %v992 = vmul.f32 0.5, %v991
    %v993 = vsub.f32 1.5, %v992
    %v994 = vmul.f32 %v989, %v993
    %vm995 = vweird.f32 %v978
    %vm996 = vweird.f32 %v989
    %vm997 = vmor %vm995, %vm996
    %v998 = vsel %vm997, %v989, %v994
    %v999 = vmul.f32 %v959, %v988
    %v1000 = vmul.f32 %v960, %v998
    %v1002 = vperm.slane %v943, 0
    %v1003 = vperm.slane %v943, 1
    %v1006 = vmul.f32 %v999, %v1002
    %v1007 = vmul.f32 %v1000, %v1003
    %v1009 = vperm.slane %v944, 0
    %v1010 = vperm.slane %v944, 1
    %v1013 = vadd.f32 %v1006, %v1009
    %v1014 = vadd.f32 %v1007, %v1010
    %v1015 = vmul.f32 %v1013, 0.5
    %v1016 = vmul.f32 %v1014, 0.5
    %v1017 = vmul.f32 %v1013, 0.70710677
    %v1018 = vmul.f32 %v1014, 0.70710677
    %v1019 = vmul.f32 %v1017, %v1017
    %v1020 = vmin.f32 16.0, %v1019
    %v1021 = vmul.f32 %v1020, 2.1237322e-06
    %v1022 = vadd.f32 %v1021, 0.00028619796
    %v1023 = vmul.f32 %v1020, %v1022
    %v1024 = vadd.f32 %v1023, 0.0036580483
    %v1025 = vmul.f32 %v1020, %v1024
    %v1026 = vadd.f32 %v1025, 0.05243302
    %v1027 = vmul.f32 %v1020, %v1026
    %v1028 = vadd.f32 %v1027, 0.18741608
    %v1029 = vmul.f32 %v1020, %v1028
    %v1030 = vadd.f32 %v1029, 1.1283791
    %v1031 = vmul.f32 %v1017, %v1030
    %v1032 = vmul.f32 %v1020, 3.8918573e-05
    %v1033 = vadd.f32 %v1032, 0.001143296
    %v1034 = vmul.f32 %v1020, %v1033
    %v1035 = vadd.f32 %v1034, 0.014752088
    %v1036 = vmul.f32 %v1020, %v1035
    %v1037 = vadd.f32 %v1036, 0.112945676
    %v1038 = vmul.f32 %v1020, %v1037
    %v1039 = vadd.f32 %v1038, 0.4994258
    %v1040 = vmul.f32 %v1020, %v1039
    %v1041 = vadd.f32 %v1040, 1.0
    %v1042 = vrcp.pop %v1041
    %v1043 = vmul.f32 %v1041, %v1042
    %v1044 = vsub.f32 1.0, %v1043
    %v1045 = vmul.f32 %v1042, %v1044
    %v1046 = vadd.f32 %v1042, %v1045
    %vm1047 = vweird.f32 %v1041
    %vm1048 = vweird.f32 %v1042
    %vm1049 = vmor %vm1047, %vm1048
    %v1050 = vsel %vm1049, %v1042, %v1046
    %v1051 = vand.u32 2147483647, %v1041
    %vm1052 = vcmp.eq.f32.partialorder %v1051, 8.507059e+37
    %v1053 = vand.u32 %v1041, 2147483648
    %v1054 = vor.u32 1.1754944e-38, %v1053
    %v1055 = vsel %vm1052, %v1054, %v1050
    %v1056 = vmul.f32 %v1031, %v1055
    %v1057 = vmin.f32 %v1056, 1.0
    %v1058 = vmax.f32 %v1057, -1.0
    %v1059 = vmul.f32 %v1018, %v1018
    %v1060 = vmin.f32 16.0, %v1059
    %v1061 = vmul.f32 %v1060, 2.1237322e-06
    %v1062 = vadd.f32 %v1061, 0.00028619796
    %v1063 = vmul.f32 %v1060, %v1062
    %v1064 = vadd.f32 %v1063, 0.0036580483
    %v1065 = vmul.f32 %v1060, %v1064
    %v1066 = vadd.f32 %v1065, 0.05243302
    %v1067 = vmul.f32 %v1060, %v1066
    %v1068 = vadd.f32 %v1067, 0.18741608
    %v1069 = vmul.f32 %v1060, %v1068
    %v1070 = vadd.f32 %v1069, 1.1283791
    %v1071 = vmul.f32 %v1018, %v1070
    %v1072 = vmul.f32 %v1060, 3.8918573e-05
    %v1073 = vadd.f32 %v1072, 0.001143296
    %v1074 = vmul.f32 %v1060, %v1073
    %v1075 = vadd.f32 %v1074, 0.014752088
    %v1076 = vmul.f32 %v1060, %v1075
    %v1077 = vadd.f32 %v1076, 0.112945676
    %v1078 = vmul.f32 %v1060, %v1077
    %v1079 = vadd.f32 %v1078, 0.4994258
    %v1080 = vmul.f32 %v1060, %v1079
    %v1081 = vadd.f32 %v1080, 1.0
    %v1082 = vrcp.pop %v1081
    %v1083 = vmul.f32 %v1081, %v1082
    %v1084 = vsub.f32 1.0, %v1083
    %v1085 = vmul.f32 %v1082, %v1084
    %v1086 = vadd.f32 %v1082, %v1085
    %vm1087 = vweird.f32 %v1081
    %vm1088 = vweird.f32 %v1082
    %vm1089 = vmor %vm1087, %vm1088
    %v1090 = vsel %vm1089, %v1082, %v1086
    %v1091 = vand.u32 2147483647, %v1081
    %vm1092 = vcmp.eq.f32.partialorder %v1091, 8.507059e+37
    %v1093 = vand.u32 %v1081, 2147483648
    %v1094 = vor.u32 1.1754944e-38, %v1093
    %v1095 = vsel %vm1092, %v1094, %v1090
    %v1096 = vmul.f32 %v1071, %v1095
    %v1097 = vmin.f32 %v1096, 1.0
    %v1098 = vmax.f32 %v1097, -1.0
    %v1099 = vadd.f32 %v1058, 1.0
    %v1100 = vadd.f32 %v1098, 1.0
    %v1101 = vmul.f32 %v1015, %v1099
    %v1102 = vmul.f32 %v1016, %v1100
    %v1103 = vld [vmem:[%s21] sm:$0xf]
    %v1104 = vld [vmem:[%s21 + $0x4] sm:$0xf]
    %v1105 = vld [vmem:[%s21 + $0x8] sm:$0xf]
    %v1106 = vld [vmem:[%s21 + $0xc] sm:$0xf]
    %v1107 = vld [vmem:[%s21 + $0x10] sm:$0xf]
    %v1108 = vld [vmem:[%s21 + $0x14] sm:$0xf]
    %v1109 = vld [vmem:[%s21 + $0x18] sm:$0xf]
    %v1110 = vld [vmem:[%s21 + $0x1c] sm:$0xf]
    %v1111 = vld [vmem:[%s21 + $0x20] sm:$0xf]
    %v1112 = vld [vmem:[%s21 + $0x24] sm:$0xf]
    %v1113 = vld [vmem:[%s21 + $0x28] sm:$0xf]
    %v1114 = vld [vmem:[%s21 + $0x2c] sm:$0xf]
    %v1115 = vld [vmem:[%s21 + $0x30] sm:$0xf]
    %v1116 = vld [vmem:[%s21 + $0x34] sm:$0xf]
    %v1117 = vld [vmem:[%s21 + $0x38] sm:$0xf]
    %v1118 = vld [vmem:[%s21 + $0x3c] sm:$0xf]
    %v1119 = vld [vmem:[%s21 + $0x40] sm:$0xf]
    %v1120 = vld [vmem:[%s21 + $0x44] sm:$0xf]
    %v1121 = vld [vmem:[%s21 + $0x48] sm:$0xf]
    %v1122 = vld [vmem:[%s21 + $0x4c] sm:$0xf]
    %v1123 = vld [vmem:[%s21 + $0x50] sm:$0xf]
    %v1124 = vld [vmem:[%s21 + $0x54] sm:$0xf]
    %v1125 = vld [vmem:[%s21 + $0x58] sm:$0xf]
    %v1126 = vld [vmem:[%s21 + $0x5c] sm:$0xf]
    %v1127 = vld [vmem:[%s21 + $0x60] sm:$0xf]
    %v1128 = vld [vmem:[%s21 + $0x64] sm:$0xf]
    %v1129 = vld [vmem:[%s21 + $0x68] sm:$0xf]
    %v1130 = vld [vmem:[%s21 + $0x6c] sm:$0xf]
    %v1131 = vld [vmem:[%s21 + $0x70] sm:$0xf]
    %v1132 = vld [vmem:[%s21 + $0x74] sm:$0xf]
    %v1133 = vld [vmem:[%s21 + $0x78] sm:$0xf]
    %v1134 = vld [vmem:[%s21 + $0x7c] sm:$0xf]
    %v1135 = vpack.c.bf16 %v1101, %v1101
    %v1136 = vpack.c.bf16 %v1102, %v1102
    %v1137 = vld [vmem:[%s22] sm:$0x1]
    %v1139 = vperm.slane %v1137, 0
    %v1173 = vunpack.c.l.b16 %v1103
    %v1174 = vunpack.c.l.b16 %v1104
    %v1175 = vunpack.c.l.b16 %v1105
    %v1176 = vunpack.c.l.b16 %v1106
    %v1177 = vunpack.c.l.b16 %v1107
    %v1178 = vunpack.c.l.b16 %v1108
    %v1179 = vunpack.c.l.b16 %v1109
    %v1180 = vunpack.c.l.b16 %v1110
    %v1181 = vunpack.c.l.b16 %v1111
    %v1182 = vunpack.c.l.b16 %v1112
    %v1183 = vunpack.c.l.b16 %v1113
    %v1184 = vunpack.c.l.b16 %v1114
    %v1185 = vunpack.c.l.b16 %v1115
    %v1186 = vunpack.c.l.b16 %v1116
    %v1187 = vunpack.c.l.b16 %v1117
    %v1188 = vunpack.c.l.b16 %v1118
    %v1189 = vunpack.c.l.b16 %v1119
    %v1190 = vunpack.c.l.b16 %v1120
    %v1191 = vunpack.c.l.b16 %v1121
    %v1192 = vunpack.c.l.b16 %v1122
    %v1193 = vunpack.c.l.b16 %v1123
    %v1194 = vunpack.c.l.b16 %v1124
    %v1195 = vunpack.c.l.b16 %v1125
    %v1196 = vunpack.c.l.b16 %v1126
    %v1197 = vunpack.c.l.b16 %v1127
    %v1198 = vunpack.c.l.b16 %v1128
    %v1199 = vunpack.c.l.b16 %v1129
    %v1200 = vunpack.c.l.b16 %v1130
    %v1201 = vunpack.c.l.b16 %v1131
    %v1202 = vunpack.c.l.b16 %v1132
    %v1203 = vunpack.c.l.b16 %v1133
    %v1204 = vunpack.c.l.b16 %v1134
    %v1205 = vpack.c.b16 %v1174, %v1173
    %v1206 = vpack.c.b16 %v1176, %v1175
    %v1207 = vpack.c.b16 %v1178, %v1177
    %v1208 = vpack.c.b16 %v1180, %v1179
    %v1209 = vpack.c.b16 %v1182, %v1181
    %v1210 = vpack.c.b16 %v1184, %v1183
    %v1211 = vpack.c.b16 %v1186, %v1185
    %v1212 = vpack.c.b16 %v1188, %v1187
    %v1213 = vpack.c.b16 %v1190, %v1189
    %v1214 = vpack.c.b16 %v1192, %v1191
    %v1215 = vpack.c.b16 %v1194, %v1193
    %v1216 = vpack.c.b16 %v1196, %v1195
    %v1217 = vpack.c.b16 %v1198, %v1197
    %v1218 = vpack.c.b16 %v1200, %v1199
    %v1219 = vpack.c.b16 %v1202, %v1201
    %v1220 = vpack.c.b16 %v1204, %v1203
    %1237 = vmatpush.bf16.msra.mxu0 %v1212
    %1238 = vmatpush.bf16.msra.mxu0 %v1211
    %1239 = vmatpush.bf16.msra.mxu0 %v1210
    %1240 = vmatpush.bf16.msra.mxu0 %v1209
    %1241 = vmatpush.bf16.msra.mxu0 %v1208
    %1242 = vmatpush.bf16.msra.mxu0 %v1207
    %1243 = vmatpush.bf16.msra.mxu0 %v1206
    %1244 = vmatpush.bf16.msra.mxu0 %v1205
    %1245 = vmatmul.bf16.gmra.mxu0 %v1135
    %v1246 = vpop.f32.mrf.mxu0
    %v1247 = vadd.f32 %v1139, %v1246
    %v1248 = vpop.f32.mrf.mxu0
    %1249 = vdwg.mxu0
    %1250 = vmatpush.bf16.msra.mxu0 %v1220
    %1251 = vmatpush.bf16.msra.mxu0 %v1219
    %1252 = vmatpush.bf16.msra.mxu0 %v1218
    %1253 = vmatpush.bf16.msra.mxu0 %v1217
    %1254 = vmatpush.bf16.msra.mxu0 %v1216
    %1255 = vmatpush.bf16.msra.mxu0 %v1215
    %1256 = vmatpush.bf16.msra.mxu0 %v1214
    %1257 = vmatpush.bf16.msra.mxu0 %v1213
    %1258 = vmatmul.bf16.gmra.mxu0 %v1136
    %v1259 = vpop.f32.mrf.mxu0
    %v1260 = vadd.f32 %v1247, %v1259
    %v1261 = vpop.f32.mrf.mxu0
    %1262 = vdwg.mxu0
    %v1263 = vadd.f32 %v1260, %v858
    %v1264 = vadd.f32 %v1263, %v409
    %1265 = vst.msk [vmem:[#allocation2] sm:$0xff] %vm82, %v1264
    // Predicated region
    $region94: #{_lambda_.17} parent=1 // pred_check
      _
    $region95: #{_lambda_.17} parent=1 // pred_check_branch
      %1267 = sbr.rel (0) target = $region97
    $region96: #{_lambda_.17} parent=1 // pred_region
      %1269 = vsyncadd [#allocation3], 0
      %s1271 = sshll.u32 [#allocation2], 4
      %s1272 = int_to_ptr.vmem [resolvable:$true] %s1271
      %s1273 = sshll.u32 %s23, 4
      %s1274 = int_to_ptr.hbm [resolvable:$true] %s1273
      %1276 = dma.vmem_to_hbm [thread:$0]  %s1272, 128, %s1274, [#allocation3]
    $region97: #{_lambda_.17} parent=1 // pred_fallthru
      _
    // Predicated region
    $region98: #{_lambda_.17} parent=1 // pred_check
      _
    $region99: #{_lambda_.17} parent=1 // pred_check_branch
      %1278 = sbr.rel (0) target = $region101
    $region100: #{_lambda_.17} parent=1 // pred_region
      %1280 = dma.done [#allocation3], 128
    $region101: #{_lambda_.17} parent=1 // pred_fallthru
      _
    %1281 = vsyncpa [#allocation3], 1

</llo_original>
